<compile_context>
chip_gen: v5e
topology: v5e:2x2
jax: 0.10.0
libtpu: 0.0.40
codegen_flags: <defaults>
</compile_context>

<pallas_src>
import functools

import jax
import jax.numpy as jnp
from jax.experimental import pallas as pl
from jax.experimental.pallas import tpu as pltpu


# ----------------------------- fused kernel -------------------------------- #
def residual_path_kernel(x_ref, w1_ref, b1_ref, w2_ref, b2_ref,
                         fc1w_ref, fc1b_ref, fc2w_ref, fc2b_ref,
                         out_ref,
                         xpad_ref, ypad_ref,
                         *, stride):
    """One batch element: relu -> conv3x3+bn1 -> relu -> conv3x3+bn2 -> SE.

    x_ref    : (1, H, W, Cin)      input tile (NHWC, one batch element)
    w1_ref   : (9*Cin, Cout)       conv1 weight, BN1 scale folded, MXU dtype
    b1_ref   : (1, Cout)           folded BN1 bias (f32)
    w2_ref   : (9*Cout, Cout)      conv2 weight, BN2 scale folded, MXU dtype
    b2_ref   : (1, Cout)           folded BN2 bias (f32)
    fc1*/fc2*: SE squeeze / excite linears (f32, tiny)
    out_ref  : (1, Ho*Wo, Cout)
    scratch  : xpad (1,H+2,W+2,Cin) f32, ypad (1,Ho+2,Wo+2,Cout) f32
    """
    _, H, W, Cin = x_ref.shape
    Cout = w1_ref.shape[1]
    Ho = (H - 1) // stride + 1
    Wo = (W - 1) // stride + 1
    M = Ho * Wo
    cdt = w1_ref.dtype          # MXU feed dtype (bf16 on v6e/v7x), f32 accumulate

    # ---- relu(x), zero-pad in VMEM: memset only the 1-px halo ---------------
    # (interior is fully overwritten; halo re-zeroed per step since scratch
    #  persists across grid steps and is per-core under megacore splitting)
    x = jnp.maximum(x_ref[...].astype(jnp.float32), 0.0)
    xpad_ref[:, 0:1, :, :] = jnp.zeros((1, 1, W + 2, Cin), jnp.float32)
    xpad_ref[:, H + 1:H + 2, :, :] = jnp.zeros((1, 1, W + 2, Cin), jnp.float32)
    xpad_ref[:, :, 0:1, :] = jnp.zeros((1, H + 2, 1, Cin), jnp.float32)
    xpad_ref[:, :, W + 1:W + 2, :] = jnp.zeros((1, H + 2, 1, Cin), jnp.float32)
    xpad_ref[:, 1:H + 1, 1:W + 1, :] = x
    xp = xpad_ref[...]

    # ---- conv1 + bn1 + relu: 9 shifted dots, f32 accumulation ---------------
    # No materialized im2col patch; stride>1 gathers only strided positions.
    w1 = w1_ref[...]
    acc1 = jnp.zeros((M, Cout), jnp.float32)
    for k in range(9):                                    # static unroll
        ky, kx = k // 3, k % 3
        if stride == 1:
            patch = xp[0, ky:ky + Ho, kx:kx + Wo, :]
        else:
            patch = xp[0, ky:ky + (Ho - 1) * stride + 1:stride,
                       kx:kx + (Wo - 1) * stride + 1:stride, :]
        acc1 = acc1 + jnp.dot(patch.reshape(M, Cin).astype(cdt),
                              w1[k * Cin:(k + 1) * Cin, :],
                              preferred_element_type=jnp.float32)
    y = jnp.maximum(acc1 + b1_ref[...], 0.0).reshape(Ho, Wo, Cout)

    # ---- conv2 + bn2: pad y (halo-only memset), 9 shifted dots --------------
    ypad_ref[:, 0:1, :, :] = jnp.zeros((1, 1, Wo + 2, Cout), jnp.float32)
    ypad_ref[:, Ho + 1:Ho + 2, :, :] = jnp.zeros((1, 1, Wo + 2, Cout), jnp.float32)
    ypad_ref[:, :, 0:1, :] = jnp.zeros((1, Ho + 2, 1, Cout), jnp.float32)
    ypad_ref[:, :, Wo + 1:Wo + 2, :] = jnp.zeros((1, Ho + 2, 1, Cout), jnp.float32)
    ypad_ref[:, 1:Ho + 1, 1:Wo + 1, :] = y[None]
    yp = ypad_ref[...]

    w2 = w2_ref[...]
    acc2 = jnp.zeros((M, Cout), jnp.float32)
    for k in range(9):
        ky, kx = k // 3, k % 3
        patch = yp[0, ky:ky + Ho, kx:kx + Wo, :]
        acc2 = acc2 + jnp.dot(patch.reshape(M, Cout).astype(cdt),
                              w2[k * Cout:(k + 1) * Cout, :],
                              preferred_element_type=jnp.float32)
    z = acc2 + b2_ref[...]                                # (M, Cout), f32

    # ---- squeeze-excite epilogue (tile-local: grid is over the batch) -------
    pooled = jnp.sum(z, axis=0, keepdims=True) * (1.0 / M)          # (1, Cout)
    h = jnp.maximum(
        jnp.dot(pooled, fc1w_ref[...], preferred_element_type=jnp.float32)
        + fc1b_ref[...], 0.0)
    s = jax.nn.sigmoid(
        jnp.dot(h, fc2w_ref[...], preferred_element_type=jnp.float32)
        + fc2b_ref[...])                                             # (1, Cout)
    out_ref[...] = (z * s)[None].astype(out_ref.dtype)


# ----------------------------- wrappers -------------------------------------- #
def residual_path_forward_nhwc(x_nhwc, params, stride=1,
                               compute_dtype=jnp.bfloat16):
    """Native NHWC entry point (keep NHWC end-to-end across a block chain)."""
    N, H, W, Cin = x_nhwc.shape
    Cout = params["w1"].shape[1]
    Cmid = params["fc1_w"].shape[1]
    Ho = (H - 1) // stride + 1
    Wo = (W - 1) // stride + 1

    # bf16 MXU feed on v6e/v7x (f32 accumulation stays inside the kernel).
    w1 = params["w1"].astype(compute_dtype)
    w2 = params["w2"].astype(compute_dtype)

    kern = functools.partial(residual_path_kernel, stride=stride)
    z = pl.pallas_call(
        kern,
        out_shape=jax.ShapeDtypeStruct((N, Ho * Wo, Cout), jnp.float32),
        grid=(N,),
        in_specs=[
            pl.BlockSpec((1, H, W, Cin), lambda n: (n, 0, 0, 0)),
            # small weight/bias/SE operands: constant index maps (resident).
            pl.BlockSpec((9 * Cin, Cout), lambda n: (0, 0)),
            pl.BlockSpec((1, Cout), lambda n: (0, 0)),
            pl.BlockSpec((9 * Cout, Cout), lambda n: (0, 0)),
            pl.BlockSpec((1, Cout), lambda n: (0, 0)),
            pl.BlockSpec((Cout, Cmid), lambda n: (0, 0)),
            pl.BlockSpec((1, Cmid), lambda n: (0, 0)),
            pl.BlockSpec((Cmid, Cout), lambda n: (0, 0)),
            pl.BlockSpec((1, Cout), lambda n: (0, 0)),
        ],
        out_specs=pl.BlockSpec((1, Ho * Wo, Cout), lambda n: (n, 0, 0)),
        scratch_shapes=[
            pltpu.VMEM((1, H + 2, W + 2, Cin), jnp.float32),     # padded x
            pltpu.VMEM((1, Ho + 2, Wo + 2, Cout), jnp.float32),  # padded y
        ],
        compiler_params=pltpu.CompilerParams(
            dimension_semantics=("parallel",),        # v7x: split N over 2 TCs
            vmem_limit_bytes=64 * 1024 * 1024),
    )(x_nhwc.astype(jnp.float32), w1, params["b1"], w2, params["b2"],
      params["fc1_w"], params["fc1_b"], params["fc2_w"], params["fc2_b"])

    return z.reshape(N, Ho, Wo, Cout)


def residual_path_forward(x_nchw, params, stride=1,
                          compute_dtype=jnp.bfloat16):
    """PyTorch-layout boundary adapter (NCHW in / NCHW out) for the test only."""
    x_nhwc = jnp.transpose(x_nchw, (0, 2, 3, 1))
    z = residual_path_forward_nhwc(x_nhwc, params, stride=stride,
                                   compute_dtype=compute_dtype)
    return jnp.transpose(z, (0, 3, 1, 2))


# ----------------------------- params --------------------------------------- #
def fold_bn_into_conv(w_rows, gamma, beta, mean, var, eps=1e-5):
    """Fold eval-mode BatchNorm into the conv weight columns + a bias row."""
    scale = gamma / jnp.sqrt(var + eps)
    return w_rows * scale[None, :], (beta - mean * scale)[None, :]


def init_params(key, in_channels, out_channels, se_reduction=4):
    mid = max(out_channels // se_reduction, 1)
    ks = jax.random.split(key, 14)

    def conv_w(k, cin, cout):
        # PyTorch layout (Cout, Cin, 3, 3) -> (3, 3, Cin, Cout) -> (9*Cin, Cout)
        w = jax.random.normal(k, (cout, cin, 3, 3), jnp.float32) * 0.1
        return jnp.transpose(w, (2, 3, 1, 0)).reshape(9 * cin, cout)

    w1 = conv_w(ks[0], in_channels, out_channels)
    w2 = conv_w(ks[1], out_channels, out_channels)
    # BatchNorm (eval mode) statistics, folded into the conv weights/biases.
    g1 = 1.0 + 0.1 * jax.random.normal(ks[2], (out_channels,), jnp.float32)
    be1 = 0.1 * jax.random.normal(ks[3], (out_channels,), jnp.float32)
    m1 = 0.1 * jax.random.normal(ks[4], (out_channels,), jnp.float32)
    v1 = jnp.abs(1.0 + 0.1 * jax.random.normal(ks[5], (out_channels,), jnp.float32))
    g2 = 1.0 + 0.1 * jax.random.normal(ks[6], (out_channels,), jnp.float32)
    be2 = 0.1 * jax.random.normal(ks[7], (out_channels,), jnp.float32)
    m2 = 0.1 * jax.random.normal(ks[8], (out_channels,), jnp.float32)
    v2 = jnp.abs(1.0 + 0.1 * jax.random.normal(ks[9], (out_channels,), jnp.float32))

    p = {}
    p["w1"], p["b1"] = fold_bn_into_conv(w1, g1, be1, m1, v1)
    p["w2"], p["b2"] = fold_bn_into_conv(w2, g2, be2, m2, v2)
    # SE linears: nn.Linear weight is (out, in); stored transposed as (in, out).
    p["fc1_w"] = 0.2 * jax.random.normal(ks[10], (out_channels, mid), jnp.float32)
    p["fc1_b"] = 0.1 * jax.random.normal(ks[12], (1, mid), jnp.float32)
    p["fc2_w"] = 0.2 * jax.random.normal(ks[11], (mid, out_channels), jnp.float32)
    p["fc2_b"] = 0.1 * jax.random.normal(ks[13], (1, out_channels), jnp.float32)
    return p


# ----------------------------- pure-JAX reference ---------------------------- #
def residual_path_reference(x_nchw, params, stride=1):
    hi = jax.lax.Precision.HIGHEST

    def conv3x3(x, w_rows, s):
        cin = w_rows.shape[0] // 9
        cout = w_rows.shape[1]
        w = w_rows.reshape(3, 3, cin, cout)              # HWIO
        return jax.lax.conv_general_dilated(
            x, w, window_strides=(s, s), padding=((1, 1), (1, 1)),
            dimension_numbers=("NCHW", "HWIO", "NCHW"), precision=hi)

    x = jnp.maximum(x_nchw.astype(jnp.float32), 0.0)
    y = conv3x3(x, params["w1"], stride) + params["b1"].reshape(1, -1, 1, 1)
    y = jnp.maximum(y, 0.0)
    z = conv3x3(y, params["w2"], 1) + params["b2"].reshape(1, -1, 1, 1)
    pooled = jnp.mean(z, axis=(2, 3))                    # (N, C)
    h = jnp.maximum(
        jnp.dot(pooled, params["fc1_w"], precision=hi) + params["fc1_b"], 0.0)
    s = jax.nn.sigmoid(jnp.dot(h, params["fc2_w"], precision=hi) + params["fc2_b"])
    return z * s[:, :, None, None]


if __name__ == "__main__":
    key = jax.random.PRNGKey(0)
    k_x, k_p = jax.random.split(key)

    N, Cin, Hin, Win = 2, 4, 16, 16
    Cout, stride = 8, 1

    x = jax.random.normal(k_x, (N, Cin, Hin, Win), jnp.float32)
    params = init_params(k_p, Cin, Cout)

    out = residual_path_forward(x, params, stride=stride)   # bf16 MXU feed
    jax.block_until_ready(out)
    assert out.shape == (N, Cout, (Hin - 1) // stride + 1, (Win - 1) // stride + 1)

    ref = residual_path_reference(x, params, stride=stride)
    # Tolerance reflects bf16 weights/activations at the MXU with f32 accumulation.
    err = float(jnp.max(jnp.abs(out - ref)))
    assert jnp.allclose(out, ref, rtol=3e-2, atol=3e-2), err
    print("KERNEL_OK")
</pallas_src>

<mosaic_0001>
module attributes {stable_mosaic.version = 11 : i64} {
  func.func @residual_path_kernel(%arg0: i32, %arg1: memref<1x16x16x4xf32, #tpu.memory_space<vmem>>, %arg2: memref<36x8xbf16, #tpu.memory_space<vmem>>, %arg3: memref<1x8xf32, #tpu.memory_space<vmem>>, %arg4: memref<72x8xbf16, #tpu.memory_space<vmem>>, %arg5: memref<1x8xf32, #tpu.memory_space<vmem>>, %arg6: memref<8x2xf32, #tpu.memory_space<vmem>>, %arg7: memref<1x2xf32, #tpu.memory_space<vmem>>, %arg8: memref<2x8xf32, #tpu.memory_space<vmem>>, %arg9: memref<1x8xf32, #tpu.memory_space<vmem>>, %arg10: memref<1x256x8xf32, #tpu.memory_space<vmem>>, %arg11: memref<1x18x18x4xf32, #tpu.memory_space<vmem>>, %arg12: memref<1x18x18x8xf32, #tpu.memory_space<vmem>>) attributes {dimension_semantics = [#tpu.dimension_semantics<parallel>], iteration_bounds = array<i64: 2>, scalar_prefetch = 0 : i64, scratch_operands = 2 : i64, tpu.core_type = #tpu.core_type<tc>, window_params = [{transform_indices = @transform_0, window_bounds = array<i64: 1, 16, 16, 4>}, {pipeline_mode = #tpu.pipeline_mode<synchronous>, transform_indices = @transform_1, window_bounds = array<i64: 36, 8>}, {pipeline_mode = #tpu.pipeline_mode<synchronous>, transform_indices = @transform_2, window_bounds = array<i64: 1, 8>}, {pipeline_mode = #tpu.pipeline_mode<synchronous>, transform_indices = @transform_3, window_bounds = array<i64: 72, 8>}, {pipeline_mode = #tpu.pipeline_mode<synchronous>, transform_indices = @transform_4, window_bounds = array<i64: 1, 8>}, {pipeline_mode = #tpu.pipeline_mode<synchronous>, transform_indices = @transform_5, window_bounds = array<i64: 8, 2>}, {pipeline_mode = #tpu.pipeline_mode<synchronous>, transform_indices = @transform_6, window_bounds = array<i64: 1, 2>}, {pipeline_mode = #tpu.pipeline_mode<synchronous>, transform_indices = @transform_7, window_bounds = array<i64: 2, 8>}, {pipeline_mode = #tpu.pipeline_mode<synchronous>, transform_indices = @transform_8, window_bounds = array<i64: 1, 8>}, {transform_indices = @transform_9, window_bounds = array<i64: 1, 256, 8>}]} {
    %c0 = arith.constant 0 : index
    %c0_0 = arith.constant 0 : index
    %c0_1 = arith.constant 0 : index
    %c0_2 = arith.constant 0 : index
    %0 = vector.load %arg1[%c0, %c0_0, %c0_1, %c0_2] : memref<1x16x16x4xf32, #tpu.memory_space<vmem>>, vector<1x16x16x4xf32>
    %cst = arith.constant 0.000000e+00 : f32
    %1 = vector.broadcast %cst : f32 to vector<1x16x16x4xf32>
    %2 = arith.maximumf %0, %1 : vector<1x16x16x4xf32>
    %cst_3 = arith.constant 0.000000e+00 : f32
    %3 = vector.broadcast %cst_3 : f32 to vector<1x1x18x4xf32>
    %c0_4 = arith.constant 0 : index
    %c0_5 = arith.constant 0 : index
    %c0_6 = arith.constant 0 : index
    %c0_7 = arith.constant 0 : index
    %4 = vector.load %arg11[%c0_4, %c0_5, %c0_6, %c0_7] : memref<1x18x18x4xf32, #tpu.memory_space<vmem>>, vector<1x1x18x4xf32>
    tpu.vector_store %arg11[%c0_4, %c0_5, %c0_6, %c0_7], %3 {strides = array<i32>} : memref<1x18x18x4xf32, #tpu.memory_space<vmem>>, vector<1x1x18x4xf32>,
    %cst_8 = arith.constant 0.000000e+00 : f32
    %5 = vector.broadcast %cst_8 : f32 to vector<1x1x18x4xf32>
    %c0_9 = arith.constant 0 : index
    %c17 = arith.constant 17 : index
    %c0_10 = arith.constant 0 : index
    %c0_11 = arith.constant 0 : index
    %6 = vector.load %arg11[%c0_9, %c17, %c0_10, %c0_11] : memref<1x18x18x4xf32, #tpu.memory_space<vmem>>, vector<1x1x18x4xf32>
    tpu.vector_store %arg11[%c0_9, %c17, %c0_10, %c0_11], %5 {strides = array<i32>} : memref<1x18x18x4xf32, #tpu.memory_space<vmem>>, vector<1x1x18x4xf32>,
    %cst_12 = arith.constant 0.000000e+00 : f32
    %7 = vector.broadcast %cst_12 : f32 to vector<1x18x1x4xf32>
    %c0_13 = arith.constant 0 : index
    %c0_14 = arith.constant 0 : index
    %c0_15 = arith.constant 0 : index
    %c0_16 = arith.constant 0 : index
    %8 = vector.load %arg11[%c0_13, %c0_14, %c0_15, %c0_16] : memref<1x18x18x4xf32, #tpu.memory_space<vmem>>, vector<1x18x1x4xf32>
    tpu.vector_store %arg11[%c0_13, %c0_14, %c0_15, %c0_16], %7 {strides = array<i32>} : memref<1x18x18x4xf32, #tpu.memory_space<vmem>>, vector<1x18x1x4xf32>,
    %cst_17 = arith.constant 0.000000e+00 : f32
    %9 = vector.broadcast %cst_17 : f32 to vector<1x18x1x4xf32>
    %c0_18 = arith.constant 0 : index
    %c0_19 = arith.constant 0 : index
    %c17_20 = arith.constant 17 : index
    %c0_21 = arith.constant 0 : index
    %10 = vector.load %arg11[%c0_18, %c0_19, %c17_20, %c0_21] : memref<1x18x18x4xf32, #tpu.memory_space<vmem>>, vector<1x18x1x4xf32>
    tpu.vector_store %arg11[%c0_18, %c0_19, %c17_20, %c0_21], %9 {strides = array<i32>} : memref<1x18x18x4xf32, #tpu.memory_space<vmem>>, vector<1x18x1x4xf32>,
    %c0_22 = arith.constant 0 : index
    %c1 = arith.constant 1 : index
    %c1_23 = arith.constant 1 : index
    %c0_24 = arith.constant 0 : index
    %11 = vector.load %arg11[%c0_22, %c1, %c1_23, %c0_24] : memref<1x18x18x4xf32, #tpu.memory_space<vmem>>, vector<1x16x16x4xf32>
    tpu.vector_store %arg11[%c0_22, %c1, %c1_23, %c0_24], %2 {strides = array<i32>} : memref<1x18x18x4xf32, #tpu.memory_space<vmem>>, vector<1x16x16x4xf32>,
    %c0_25 = arith.constant 0 : index
    %c0_26 = arith.constant 0 : index
    %c0_27 = arith.constant 0 : index
    %c0_28 = arith.constant 0 : index
    %12 = vector.load %arg11[%c0_25, %c0_26, %c0_27, %c0_28] : memref<1x18x18x4xf32, #tpu.memory_space<vmem>>, vector<1x18x18x4xf32>
    %c0_29 = arith.constant 0 : index
    %c0_30 = arith.constant 0 : index
    %13 = vector.load %arg2[%c0_29, %c0_30] : memref<36x8xbf16, #tpu.memory_space<vmem>>, vector<36x8xbf16>
    %cst_31 = arith.constant 0.000000e+00 : f32
    %14 = vector.broadcast %cst_31 : f32 to vector<256x8xf32>
    %15 = vector.extract_strided_slice %12 {offsets = [0, 0, 0, 0], sizes = [1, 16, 16, 4], strides = [1, 1, 1, 1]} : vector<1x18x18x4xf32> to vector<1x16x16x4xf32>
    %16 = vector.shape_cast %15 : vector<1x16x16x4xf32> to vector<16x16x4xf32>
    %17 = vector.shape_cast %16 : vector<16x16x4xf32> to vector<256x4xf32>
    %18 = arith.truncf %17 : vector<256x4xf32> to vector<256x4xbf16>
    %19 = vector.extract_strided_slice %13 {offsets = [0, 0], sizes = [4, 8], strides = [1, 1]} : vector<36x8xbf16> to vector<4x8xbf16>
    %cst_32 = arith.constant dense<0.000000e+00> : vector<256x8xf32>
    %20 = tpu.matmul %18, %19, %cst_32 {dimension_numbers = #tpu.dot_dimension_numbers<[1], [0], [0], [1], [0, 0, 1, 1], [], []>} : vector<256x4xbf16>, vector<4x8xbf16>, vector<256x8xf32> -> vector<256x8xf32>
    %21 = arith.addf %14, %20 : vector<256x8xf32>
    %22 = vector.extract_strided_slice %12 {offsets = [0, 0, 1, 0], sizes = [1, 16, 16, 4], strides = [1, 1, 1, 1]} : vector<1x18x18x4xf32> to vector<1x16x16x4xf32>
    %23 = vector.shape_cast %22 : vector<1x16x16x4xf32> to vector<16x16x4xf32>
    %24 = vector.shape_cast %23 : vector<16x16x4xf32> to vector<256x4xf32>
    %25 = arith.truncf %24 : vector<256x4xf32> to vector<256x4xbf16>
    %26 = vector.extract_strided_slice %13 {offsets = [4, 0], sizes = [4, 8], strides = [1, 1]} : vector<36x8xbf16> to vector<4x8xbf16>
    %cst_33 = arith.constant dense<0.000000e+00> : vector<256x8xf32>
    %27 = tpu.matmul %25, %26, %cst_33 {dimension_numbers = #tpu.dot_dimension_numbers<[1], [0], [0], [1], [0, 0, 1, 1], [], []>} : vector<256x4xbf16>, vector<4x8xbf16>, vector<256x8xf32> -> vector<256x8xf32>
    %28 = arith.addf %21, %27 : vector<256x8xf32>
    %29 = vector.extract_strided_slice %12 {offsets = [0, 0, 2, 0], sizes = [1, 16, 16, 4], strides = [1, 1, 1, 1]} : vector<1x18x18x4xf32> to vector<1x16x16x4xf32>
    %30 = vector.shape_cast %29 : vector<1x16x16x4xf32> to vector<16x16x4xf32>
    %31 = vector.shape_cast %30 : vector<16x16x4xf32> to vector<256x4xf32>
    %32 = arith.truncf %31 : vector<256x4xf32> to vector<256x4xbf16>
    %33 = vector.extract_strided_slice %13 {offsets = [8, 0], sizes = [4, 8], strides = [1, 1]} : vector<36x8xbf16> to vector<4x8xbf16>
    %cst_34 = arith.constant dense<0.000000e+00> : vector<256x8xf32>
    %34 = tpu.matmul %32, %33, %cst_34 {dimension_numbers = #tpu.dot_dimension_numbers<[1], [0], [0], [1], [0, 0, 1, 1], [], []>} : vector<256x4xbf16>, vector<4x8xbf16>, vector<256x8xf32> -> vector<256x8xf32>
    %35 = arith.addf %28, %34 : vector<256x8xf32>
    %36 = vector.extract_strided_slice %12 {offsets = [0, 1, 0, 0], sizes = [1, 16, 16, 4], strides = [1, 1, 1, 1]} : vector<1x18x18x4xf32> to vector<1x16x16x4xf32>
    %37 = vector.shape_cast %36 : vector<1x16x16x4xf32> to vector<16x16x4xf32>
    %38 = vector.shape_cast %37 : vector<16x16x4xf32> to vector<256x4xf32>
    %39 = arith.truncf %38 : vector<256x4xf32> to vector<256x4xbf16>
    %40 = vector.extract_strided_slice %13 {offsets = [12, 0], sizes = [4, 8], strides = [1, 1]} : vector<36x8xbf16> to vector<4x8xbf16>
    %cst_35 = arith.constant dense<0.000000e+00> : vector<256x8xf32>
    %41 = tpu.matmul %39, %40, %cst_35 {dimension_numbers = #tpu.dot_dimension_numbers<[1], [0], [0], [1], [0, 0, 1, 1], [], []>} : vector<256x4xbf16>, vector<4x8xbf16>, vector<256x8xf32> -> vector<256x8xf32>
    %42 = arith.addf %35, %41 : vector<256x8xf32>
    %43 = vector.extract_strided_slice %12 {offsets = [0, 1, 1, 0], sizes = [1, 16, 16, 4], strides = [1, 1, 1, 1]} : vector<1x18x18x4xf32> to vector<1x16x16x4xf32>
    %44 = vector.shape_cast %43 : vector<1x16x16x4xf32> to vector<16x16x4xf32>
    %45 = vector.shape_cast %44 : vector<16x16x4xf32> to vector<256x4xf32>
    %46 = arith.truncf %45 : vector<256x4xf32> to vector<256x4xbf16>
    %47 = vector.extract_strided_slice %13 {offsets = [16, 0], sizes = [4, 8], strides = [1, 1]} : vector<36x8xbf16> to vector<4x8xbf16>
    %cst_36 = arith.constant dense<0.000000e+00> : vector<256x8xf32>
    %48 = tpu.matmul %46, %47, %cst_36 {dimension_numbers = #tpu.dot_dimension_numbers<[1], [0], [0], [1], [0, 0, 1, 1], [], []>} : vector<256x4xbf16>, vector<4x8xbf16>, vector<256x8xf32> -> vector<256x8xf32>
    %49 = arith.addf %42, %48 : vector<256x8xf32>
    %50 = vector.extract_strided_slice %12 {offsets = [0, 1, 2, 0], sizes = [1, 16, 16, 4], strides = [1, 1, 1, 1]} : vector<1x18x18x4xf32> to vector<1x16x16x4xf32>
    %51 = vector.shape_cast %50 : vector<1x16x16x4xf32> to vector<16x16x4xf32>
    %52 = vector.shape_cast %51 : vector<16x16x4xf32> to vector<256x4xf32>
    %53 = arith.truncf %52 : vector<256x4xf32> to vector<256x4xbf16>
    %54 = vector.extract_strided_slice %13 {offsets = [20, 0], sizes = [4, 8], strides = [1, 1]} : vector<36x8xbf16> to vector<4x8xbf16>
    %cst_37 = arith.constant dense<0.000000e+00> : vector<256x8xf32>
    %55 = tpu.matmul %53, %54, %cst_37 {dimension_numbers = #tpu.dot_dimension_numbers<[1], [0], [0], [1], [0, 0, 1, 1], [], []>} : vector<256x4xbf16>, vector<4x8xbf16>, vector<256x8xf32> -> vector<256x8xf32>
    %56 = arith.addf %49, %55 : vector<256x8xf32>
    %57 = vector.extract_strided_slice %12 {offsets = [0, 2, 0, 0], sizes = [1, 16, 16, 4], strides = [1, 1, 1, 1]} : vector<1x18x18x4xf32> to vector<1x16x16x4xf32>
    %58 = vector.shape_cast %57 : vector<1x16x16x4xf32> to vector<16x16x4xf32>
    %59 = vector.shape_cast %58 : vector<16x16x4xf32> to vector<256x4xf32>
    %60 = arith.truncf %59 : vector<256x4xf32> to vector<256x4xbf16>
    %61 = vector.extract_strided_slice %13 {offsets = [24, 0], sizes = [4, 8], strides = [1, 1]} : vector<36x8xbf16> to vector<4x8xbf16>
    %cst_38 = arith.constant dense<0.000000e+00> : vector<256x8xf32>
    %62 = tpu.matmul %60, %61, %cst_38 {dimension_numbers = #tpu.dot_dimension_numbers<[1], [0], [0], [1], [0, 0, 1, 1], [], []>} : vector<256x4xbf16>, vector<4x8xbf16>, vector<256x8xf32> -> vector<256x8xf32>
    %63 = arith.addf %56, %62 : vector<256x8xf32>
    %64 = vector.extract_strided_slice %12 {offsets = [0, 2, 1, 0], sizes = [1, 16, 16, 4], strides = [1, 1, 1, 1]} : vector<1x18x18x4xf32> to vector<1x16x16x4xf32>
    %65 = vector.shape_cast %64 : vector<1x16x16x4xf32> to vector<16x16x4xf32>
    %66 = vector.shape_cast %65 : vector<16x16x4xf32> to vector<256x4xf32>
    %67 = arith.truncf %66 : vector<256x4xf32> to vector<256x4xbf16>
    %68 = vector.extract_strided_slice %13 {offsets = [28, 0], sizes = [4, 8], strides = [1, 1]} : vector<36x8xbf16> to vector<4x8xbf16>
    %cst_39 = arith.constant dense<0.000000e+00> : vector<256x8xf32>
    %69 = tpu.matmul %67, %68, %cst_39 {dimension_numbers = #tpu.dot_dimension_numbers<[1], [0], [0], [1], [0, 0, 1, 1], [], []>} : vector<256x4xbf16>, vector<4x8xbf16>, vector<256x8xf32> -> vector<256x8xf32>
    %70 = arith.addf %63, %69 : vector<256x8xf32>
    %71 = vector.extract_strided_slice %12 {offsets = [0, 2, 2, 0], sizes = [1, 16, 16, 4], strides = [1, 1, 1, 1]} : vector<1x18x18x4xf32> to vector<1x16x16x4xf32>
    %72 = vector.shape_cast %71 : vector<1x16x16x4xf32> to vector<16x16x4xf32>
    %73 = vector.shape_cast %72 : vector<16x16x4xf32> to vector<256x4xf32>
    %74 = arith.truncf %73 : vector<256x4xf32> to vector<256x4xbf16>
    %75 = vector.extract_strided_slice %13 {offsets = [32, 0], sizes = [4, 8], strides = [1, 1]} : vector<36x8xbf16> to vector<4x8xbf16>
    %cst_40 = arith.constant dense<0.000000e+00> : vector<256x8xf32>
    %76 = tpu.matmul %74, %75, %cst_40 {dimension_numbers = #tpu.dot_dimension_numbers<[1], [0], [0], [1], [0, 0, 1, 1], [], []>} : vector<256x4xbf16>, vector<4x8xbf16>, vector<256x8xf32> -> vector<256x8xf32>
    %77 = arith.addf %70, %76 : vector<256x8xf32>
    %c0_41 = arith.constant 0 : index
    %c0_42 = arith.constant 0 : index
    %78 = vector.load %arg3[%c0_41, %c0_42] : memref<1x8xf32, #tpu.memory_space<vmem>>, vector<1x8xf32>
    %79 = vector.broadcast %78 : vector<1x8xf32> to vector<256x8xf32>
    %80 = arith.addf %77, %79 : vector<256x8xf32>
    %cst_43 = arith.constant 0.000000e+00 : f32
    %81 = vector.broadcast %cst_43 : f32 to vector<256x8xf32>
    %82 = arith.maximumf %80, %81 : vector<256x8xf32>
    %83 = vector.shape_cast %82 : vector<256x8xf32> to vector<16x16x8xf32>
    %cst_44 = arith.constant 0.000000e+00 : f32
    %84 = vector.broadcast %cst_44 : f32 to vector<1x1x18x8xf32>
    %c0_45 = arith.constant 0 : index
    %c0_46 = arith.constant 0 : index
    %c0_47 = arith.constant 0 : index
    %c0_48 = arith.constant 0 : index
    %85 = vector.load %arg12[%c0_45, %c0_46, %c0_47, %c0_48] : memref<1x18x18x8xf32, #tpu.memory_space<vmem>>, vector<1x1x18x8xf32>
    tpu.vector_store %arg12[%c0_45, %c0_46, %c0_47, %c0_48], %84 {strides = array<i32>} : memref<1x18x18x8xf32, #tpu.memory_space<vmem>>, vector<1x1x18x8xf32>,
    %cst_49 = arith.constant 0.000000e+00 : f32
    %86 = vector.broadcast %cst_49 : f32 to vector<1x1x18x8xf32>
    %c0_50 = arith.constant 0 : index
    %c17_51 = arith.constant 17 : index
    %c0_52 = arith.constant 0 : index
    %c0_53 = arith.constant 0 : index
    %87 = vector.load %arg12[%c0_50, %c17_51, %c0_52, %c0_53] : memref<1x18x18x8xf32, #tpu.memory_space<vmem>>, vector<1x1x18x8xf32>
    tpu.vector_store %arg12[%c0_50, %c17_51, %c0_52, %c0_53], %86 {strides = array<i32>} : memref<1x18x18x8xf32, #tpu.memory_space<vmem>>, vector<1x1x18x8xf32>,
    %cst_54 = arith.constant 0.000000e+00 : f32
    %88 = vector.broadcast %cst_54 : f32 to vector<1x18x1x8xf32>
    %c0_55 = arith.constant 0 : index
    %c0_56 = arith.constant 0 : index
    %c0_57 = arith.constant 0 : index
    %c0_58 = arith.constant 0 : index
    %89 = vector.load %arg12[%c0_55, %c0_56, %c0_57, %c0_58] : memref<1x18x18x8xf32, #tpu.memory_space<vmem>>, vector<1x18x1x8xf32>
    tpu.vector_store %arg12[%c0_55, %c0_56, %c0_57, %c0_58], %88 {strides = array<i32>} : memref<1x18x18x8xf32, #tpu.memory_space<vmem>>, vector<1x18x1x8xf32>,
    %cst_59 = arith.constant 0.000000e+00 : f32
    %90 = vector.broadcast %cst_59 : f32 to vector<1x18x1x8xf32>
    %c0_60 = arith.constant 0 : index
    %c0_61 = arith.constant 0 : index
    %c17_62 = arith.constant 17 : index
    %c0_63 = arith.constant 0 : index
    %91 = vector.load %arg12[%c0_60, %c0_61, %c17_62, %c0_63] : memref<1x18x18x8xf32, #tpu.memory_space<vmem>>, vector<1x18x1x8xf32>
    tpu.vector_store %arg12[%c0_60, %c0_61, %c17_62, %c0_63], %90 {strides = array<i32>} : memref<1x18x18x8xf32, #tpu.memory_space<vmem>>, vector<1x18x1x8xf32>,
    %92 = vector.shape_cast %83 : vector<16x16x8xf32> to vector<1x16x16x8xf32>
    %c0_64 = arith.constant 0 : index
    %c1_65 = arith.constant 1 : index
    %c1_66 = arith.constant 1 : index
    %c0_67 = arith.constant 0 : index
    %93 = vector.load %arg12[%c0_64, %c1_65, %c1_66, %c0_67] : memref<1x18x18x8xf32, #tpu.memory_space<vmem>>, vector<1x16x16x8xf32>
    tpu.vector_store %arg12[%c0_64, %c1_65, %c1_66, %c0_67], %92 {strides = array<i32>} : memref<1x18x18x8xf32, #tpu.memory_space<vmem>>, vector<1x16x16x8xf32>,
    %c0_68 = arith.constant 0 : index
    %c0_69 = arith.constant 0 : index
    %c0_70 = arith.constant 0 : index
    %c0_71 = arith.constant 0 : index
    %94 = vector.load %arg12[%c0_68, %c0_69, %c0_70, %c0_71] : memref<1x18x18x8xf32, #tpu.memory_space<vmem>>, vector<1x18x18x8xf32>
    %c0_72 = arith.constant 0 : index
    %c0_73 = arith.constant 0 : index
    %95 = vector.load %arg4[%c0_72, %c0_73] : memref<72x8xbf16, #tpu.memory_space<vmem>>, vector<72x8xbf16>
    %cst_74 = arith.constant 0.000000e+00 : f32
    %96 = vector.broadcast %cst_74 : f32 to vector<256x8xf32>
    %97 = vector.extract_strided_slice %94 {offsets = [0, 0, 0, 0], sizes = [1, 16, 16, 8], strides = [1, 1, 1, 1]} : vector<1x18x18x8xf32> to vector<1x16x16x8xf32>
    %98 = vector.shape_cast %97 : vector<1x16x16x8xf32> to vector<16x16x8xf32>
    %99 = vector.shape_cast %98 : vector<16x16x8xf32> to vector<256x8xf32>
    %100 = arith.truncf %99 : vector<256x8xf32> to vector<256x8xbf16>
    %101 = vector.extract_strided_slice %95 {offsets = [0, 0], sizes = [8, 8], strides = [1, 1]} : vector<72x8xbf16> to vector<8x8xbf16>
    %cst_75 = arith.constant dense<0.000000e+00> : vector<256x8xf32>
    %102 = tpu.matmul %100, %101, %cst_75 {dimension_numbers = #tpu.dot_dimension_numbers<[1], [0], [0], [1], [0, 0, 1, 1], [], []>} : vector<256x8xbf16>, vector<8x8xbf16>, vector<256x8xf32> -> vector<256x8xf32>
    %103 = arith.addf %96, %102 : vector<256x8xf32>
    %104 = vector.extract_strided_slice %94 {offsets = [0, 0, 1, 0], sizes = [1, 16, 16, 8], strides = [1, 1, 1, 1]} : vector<1x18x18x8xf32> to vector<1x16x16x8xf32>
    %105 = vector.shape_cast %104 : vector<1x16x16x8xf32> to vector<16x16x8xf32>
    %106 = vector.shape_cast %105 : vector<16x16x8xf32> to vector<256x8xf32>
    %107 = arith.truncf %106 : vector<256x8xf32> to vector<256x8xbf16>
    %108 = vector.extract_strided_slice %95 {offsets = [8, 0], sizes = [8, 8], strides = [1, 1]} : vector<72x8xbf16> to vector<8x8xbf16>
    %cst_76 = arith.constant dense<0.000000e+00> : vector<256x8xf32>
    %109 = tpu.matmul %107, %108, %cst_76 {dimension_numbers = #tpu.dot_dimension_numbers<[1], [0], [0], [1], [0, 0, 1, 1], [], []>} : vector<256x8xbf16>, vector<8x8xbf16>, vector<256x8xf32> -> vector<256x8xf32>
    %110 = arith.addf %103, %109 : vector<256x8xf32>
    %111 = vector.extract_strided_slice %94 {offsets = [0, 0, 2, 0], sizes = [1, 16, 16, 8], strides = [1, 1, 1, 1]} : vector<1x18x18x8xf32> to vector<1x16x16x8xf32>
    %112 = vector.shape_cast %111 : vector<1x16x16x8xf32> to vector<16x16x8xf32>
    %113 = vector.shape_cast %112 : vector<16x16x8xf32> to vector<256x8xf32>
    %114 = arith.truncf %113 : vector<256x8xf32> to vector<256x8xbf16>
    %115 = vector.extract_strided_slice %95 {offsets = [16, 0], sizes = [8, 8], strides = [1, 1]} : vector<72x8xbf16> to vector<8x8xbf16>
    %cst_77 = arith.constant dense<0.000000e+00> : vector<256x8xf32>
    %116 = tpu.matmul %114, %115, %cst_77 {dimension_numbers = #tpu.dot_dimension_numbers<[1], [0], [0], [1], [0, 0, 1, 1], [], []>} : vector<256x8xbf16>, vector<8x8xbf16>, vector<256x8xf32> -> vector<256x8xf32>
    %117 = arith.addf %110, %116 : vector<256x8xf32>
    %118 = vector.extract_strided_slice %94 {offsets = [0, 1, 0, 0], sizes = [1, 16, 16, 8], strides = [1, 1, 1, 1]} : vector<1x18x18x8xf32> to vector<1x16x16x8xf32>
    %119 = vector.shape_cast %118 : vector<1x16x16x8xf32> to vector<16x16x8xf32>
    %120 = vector.shape_cast %119 : vector<16x16x8xf32> to vector<256x8xf32>
    %121 = arith.truncf %120 : vector<256x8xf32> to vector<256x8xbf16>
    %122 = vector.extract_strided_slice %95 {offsets = [24, 0], sizes = [8, 8], strides = [1, 1]} : vector<72x8xbf16> to vector<8x8xbf16>
    %cst_78 = arith.constant dense<0.000000e+00> : vector<256x8xf32>
    %123 = tpu.matmul %121, %122, %cst_78 {dimension_numbers = #tpu.dot_dimension_numbers<[1], [0], [0], [1], [0, 0, 1, 1], [], []>} : vector<256x8xbf16>, vector<8x8xbf16>, vector<256x8xf32> -> vector<256x8xf32>
    %124 = arith.addf %117, %123 : vector<256x8xf32>
    %125 = vector.extract_strided_slice %94 {offsets = [0, 1, 1, 0], sizes = [1, 16, 16, 8], strides = [1, 1, 1, 1]} : vector<1x18x18x8xf32> to vector<1x16x16x8xf32>
    %126 = vector.shape_cast %125 : vector<1x16x16x8xf32> to vector<16x16x8xf32>
    %127 = vector.shape_cast %126 : vector<16x16x8xf32> to vector<256x8xf32>
    %128 = arith.truncf %127 : vector<256x8xf32> to vector<256x8xbf16>
    %129 = vector.extract_strided_slice %95 {offsets = [32, 0], sizes = [8, 8], strides = [1, 1]} : vector<72x8xbf16> to vector<8x8xbf16>
    %cst_79 = arith.constant dense<0.000000e+00> : vector<256x8xf32>
    %130 = tpu.matmul %128, %129, %cst_79 {dimension_numbers = #tpu.dot_dimension_numbers<[1], [0], [0], [1], [0, 0, 1, 1], [], []>} : vector<256x8xbf16>, vector<8x8xbf16>, vector<256x8xf32> -> vector<256x8xf32>
    %131 = arith.addf %124, %130 : vector<256x8xf32>
    %132 = vector.extract_strided_slice %94 {offsets = [0, 1, 2, 0], sizes = [1, 16, 16, 8], strides = [1, 1, 1, 1]} : vector<1x18x18x8xf32> to vector<1x16x16x8xf32>
    %133 = vector.shape_cast %132 : vector<1x16x16x8xf32> to vector<16x16x8xf32>
    %134 = vector.shape_cast %133 : vector<16x16x8xf32> to vector<256x8xf32>
    %135 = arith.truncf %134 : vector<256x8xf32> to vector<256x8xbf16>
    %136 = vector.extract_strided_slice %95 {offsets = [40, 0], sizes = [8, 8], strides = [1, 1]} : vector<72x8xbf16> to vector<8x8xbf16>
    %cst_80 = arith.constant dense<0.000000e+00> : vector<256x8xf32>
    %137 = tpu.matmul %135, %136, %cst_80 {dimension_numbers = #tpu.dot_dimension_numbers<[1], [0], [0], [1], [0, 0, 1, 1], [], []>} : vector<256x8xbf16>, vector<8x8xbf16>, vector<256x8xf32> -> vector<256x8xf32>
    %138 = arith.addf %131, %137 : vector<256x8xf32>
    %139 = vector.extract_strided_slice %94 {offsets = [0, 2, 0, 0], sizes = [1, 16, 16, 8], strides = [1, 1, 1, 1]} : vector<1x18x18x8xf32> to vector<1x16x16x8xf32>
    %140 = vector.shape_cast %139 : vector<1x16x16x8xf32> to vector<16x16x8xf32>
    %141 = vector.shape_cast %140 : vector<16x16x8xf32> to vector<256x8xf32>
    %142 = arith.truncf %141 : vector<256x8xf32> to vector<256x8xbf16>
    %143 = vector.extract_strided_slice %95 {offsets = [48, 0], sizes = [8, 8], strides = [1, 1]} : vector<72x8xbf16> to vector<8x8xbf16>
    %cst_81 = arith.constant dense<0.000000e+00> : vector<256x8xf32>
    %144 = tpu.matmul %142, %143, %cst_81 {dimension_numbers = #tpu.dot_dimension_numbers<[1], [0], [0], [1], [0, 0, 1, 1], [], []>} : vector<256x8xbf16>, vector<8x8xbf16>, vector<256x8xf32> -> vector<256x8xf32>
    %145 = arith.addf %138, %144 : vector<256x8xf32>
    %146 = vector.extract_strided_slice %94 {offsets = [0, 2, 1, 0], sizes = [1, 16, 16, 8], strides = [1, 1, 1, 1]} : vector<1x18x18x8xf32> to vector<1x16x16x8xf32>
    %147 = vector.shape_cast %146 : vector<1x16x16x8xf32> to vector<16x16x8xf32>
    %148 = vector.shape_cast %147 : vector<16x16x8xf32> to vector<256x8xf32>
    %149 = arith.truncf %148 : vector<256x8xf32> to vector<256x8xbf16>
    %150 = vector.extract_strided_slice %95 {offsets = [56, 0], sizes = [8, 8], strides = [1, 1]} : vector<72x8xbf16> to vector<8x8xbf16>
    %cst_82 = arith.constant dense<0.000000e+00> : vector<256x8xf32>
    %151 = tpu.matmul %149, %150, %cst_82 {dimension_numbers = #tpu.dot_dimension_numbers<[1], [0], [0], [1], [0, 0, 1, 1], [], []>} : vector<256x8xbf16>, vector<8x8xbf16>, vector<256x8xf32> -> vector<256x8xf32>
    %152 = arith.addf %145, %151 : vector<256x8xf32>
    %153 = vector.extract_strided_slice %94 {offsets = [0, 2, 2, 0], sizes = [1, 16, 16, 8], strides = [1, 1, 1, 1]} : vector<1x18x18x8xf32> to vector<1x16x16x8xf32>
    %154 = vector.shape_cast %153 : vector<1x16x16x8xf32> to vector<16x16x8xf32>
    %155 = vector.shape_cast %154 : vector<16x16x8xf32> to vector<256x8xf32>
    %156 = arith.truncf %155 : vector<256x8xf32> to vector<256x8xbf16>
    %157 = vector.extract_strided_slice %95 {offsets = [64, 0], sizes = [8, 8], strides = [1, 1]} : vector<72x8xbf16> to vector<8x8xbf16>
    %cst_83 = arith.constant dense<0.000000e+00> : vector<256x8xf32>
    %158 = tpu.matmul %156, %157, %cst_83 {dimension_numbers = #tpu.dot_dimension_numbers<[1], [0], [0], [1], [0, 0, 1, 1], [], []>} : vector<256x8xbf16>, vector<8x8xbf16>, vector<256x8xf32> -> vector<256x8xf32>
    %159 = arith.addf %152, %158 : vector<256x8xf32>
    %c0_84 = arith.constant 0 : index
    %c0_85 = arith.constant 0 : index
    %160 = vector.load %arg5[%c0_84, %c0_85] : memref<1x8xf32, #tpu.memory_space<vmem>>, vector<1x8xf32>
    %161 = vector.broadcast %160 : vector<1x8xf32> to vector<256x8xf32>
    %162 = arith.addf %159, %161 : vector<256x8xf32>
    %cst_86 = arith.constant dense<0.000000e+00> : vector<8xf32>
    %163 = vector.multi_reduction <add>, %162, %cst_86 [0] : vector<256x8xf32> to vector<8xf32>
    %164 = vector.shape_cast %163 : vector<8xf32> to vector<1x8xf32>
    %cst_87 = arith.constant 3.906250e-03 : f32
    %165 = vector.broadcast %cst_87 : f32 to vector<1x8xf32>
    %166 = arith.mulf %164, %165 : vector<1x8xf32>
    %c0_88 = arith.constant 0 : index
    %c0_89 = arith.constant 0 : index
    %167 = vector.load %arg6[%c0_88, %c0_89] : memref<8x2xf32, #tpu.memory_space<vmem>>, vector<8x2xf32>
    %cst_90 = arith.constant dense<0.000000e+00> : vector<1x2xf32>
    %168 = tpu.matmul %166, %167, %cst_90 {dimension_numbers = #tpu.dot_dimension_numbers<[1], [0], [0], [1], [0, 0, 1, 1], [], []>} : vector<1x8xf32>, vector<8x2xf32>, vector<1x2xf32> -> vector<1x2xf32>
    %c0_91 = arith.constant 0 : index
    %c0_92 = arith.constant 0 : index
    %169 = vector.load %arg7[%c0_91, %c0_92] : memref<1x2xf32, #tpu.memory_space<vmem>>, vector<1x2xf32>
    %170 = arith.addf %168, %169 : vector<1x2xf32>
    %cst_93 = arith.constant 0.000000e+00 : f32
    %171 = vector.broadcast %cst_93 : f32 to vector<1x2xf32>
    %172 = arith.maximumf %170, %171 : vector<1x2xf32>
    %c0_94 = arith.constant 0 : index
    %c0_95 = arith.constant 0 : index
    %173 = vector.load %arg8[%c0_94, %c0_95] : memref<2x8xf32, #tpu.memory_space<vmem>>, vector<2x8xf32>
    %cst_96 = arith.constant dense<0.000000e+00> : vector<1x8xf32>
    %174 = tpu.matmul %172, %173, %cst_96 {dimension_numbers = #tpu.dot_dimension_numbers<[1], [0], [0], [1], [0, 0, 1, 1], [], []>} : vector<1x2xf32>, vector<2x8xf32>, vector<1x8xf32> -> vector<1x8xf32>
    %c0_97 = arith.constant 0 : index
    %c0_98 = arith.constant 0 : index
    %175 = vector.load %arg9[%c0_97, %c0_98] : memref<1x8xf32, #tpu.memory_space<vmem>>, vector<1x8xf32>
    %176 = arith.addf %174, %175 : vector<1x8xf32>
    %177 = arith.negf %176 : vector<1x8xf32>
    %178 = math.exp %177 : vector<1x8xf32>
    %cst_99 = arith.constant 1.000000e+00 : f32
    %179 = vector.broadcast %cst_99 : f32 to vector<1x8xf32>
    %180 = arith.addf %179, %178 : vector<1x8xf32>
    %181 = arith.divf %179, %180 : vector<1x8xf32>
    %182 = vector.broadcast %181 : vector<1x8xf32> to vector<256x8xf32>
    %183 = arith.mulf %162, %182 : vector<256x8xf32>
    %184 = vector.shape_cast %183 : vector<256x8xf32> to vector<1x256x8xf32>
    %c0_100 = arith.constant 0 : index
    %c0_101 = arith.constant 0 : index
    %c0_102 = arith.constant 0 : index
    %185 = vector.load %arg10[%c0_100, %c0_101, %c0_102] : memref<1x256x8xf32, #tpu.memory_space<vmem>>, vector<1x256x8xf32>
    tpu.vector_store %arg10[%c0_100, %c0_101, %c0_102], %184 {strides = array<i32>} : memref<1x256x8xf32, #tpu.memory_space<vmem>>, vector<1x256x8xf32>,
    return
  }
  func.func @transform_0(%arg0: i32) -> (i32, i32, i32, i32) {
    %c0_i32 = arith.constant 0 : i32
    %c0_i32_0 = arith.constant 0 : i32
    %c0_i32_1 = arith.constant 0 : i32
    %c0_i32_2 = arith.constant 0 : i32
    return %arg0, %c0_i32, %c0_i32_0, %c0_i32_1 : i32, i32, i32, i32
  }
  func.func @transform_1(%arg0: i32) -> (i32, i32) {
    %c0_i32 = arith.constant 0 : i32
    %c0_i32_0 = arith.constant 0 : i32
    %c0_i32_1 = arith.constant 0 : i32
    return %c0_i32, %c0_i32_0 : i32, i32
  }
  func.func @transform_2(%arg0: i32) -> (i32, i32) {
    %c0_i32 = arith.constant 0 : i32
    %c0_i32_0 = arith.constant 0 : i32
    %c0_i32_1 = arith.constant 0 : i32
    return %c0_i32, %c0_i32_0 : i32, i32
  }
  func.func @transform_3(%arg0: i32) -> (i32, i32) {
    %c0_i32 = arith.constant 0 : i32
    %c0_i32_0 = arith.constant 0 : i32
    %c0_i32_1 = arith.constant 0 : i32
    return %c0_i32, %c0_i32_0 : i32, i32
  }
  func.func @transform_4(%arg0: i32) -> (i32, i32) {
    %c0_i32 = arith.constant 0 : i32
    %c0_i32_0 = arith.constant 0 : i32
    %c0_i32_1 = arith.constant 0 : i32
    return %c0_i32, %c0_i32_0 : i32, i32
  }
  func.func @transform_5(%arg0: i32) -> (i32, i32) {
    %c0_i32 = arith.constant 0 : i32
    %c0_i32_0 = arith.constant 0 : i32
    %c0_i32_1 = arith.constant 0 : i32
    return %c0_i32, %c0_i32_0 : i32, i32
  }
  func.func @transform_6(%arg0: i32) -> (i32, i32) {
    %c0_i32 = arith.constant 0 : i32
    %c0_i32_0 = arith.constant 0 : i32
    %c0_i32_1 = arith.constant 0 : i32
    return %c0_i32, %c0_i32_0 : i32, i32
  }
  func.func @transform_7(%arg0: i32) -> (i32, i32) {
    %c0_i32 = arith.constant 0 : i32
    %c0_i32_0 = arith.constant 0 : i32
    %c0_i32_1 = arith.constant 0 : i32
    return %c0_i32, %c0_i32_0 : i32, i32
  }
  func.func @transform_8(%arg0: i32) -> (i32, i32) {
    %c0_i32 = arith.constant 0 : i32
    %c0_i32_0 = arith.constant 0 : i32
    %c0_i32_1 = arith.constant 0 : i32
    return %c0_i32, %c0_i32_0 : i32, i32
  }
  func.func @transform_9(%arg0: i32) -> (i32, i32, i32) {
    %c0_i32 = arith.constant 0 : i32
    %c0_i32_0 = arith.constant 0 : i32
    %c0_i32_1 = arith.constant 0 : i32
    return %arg0, %c0_i32, %c0_i32_0 : i32, i32, i32
  }
}

</mosaic_0001>

<llo_original>
// kernel: tpu_custom_call.1
$region0: #{tpu_custom_call.1}
  #allocation0 [shape = 'u32[]', space=smem, size = 0x4, offset = 0x4, fixed_abs, tag = 'smem constant byte address 0x4 - core index']
  #allocation1 [shape = 'u32[72,128]{1,0:T(1,128)}', space=vmem, size = 0x9000, scoped, tag = 'internal scratch']
  #allocation2 [shape = 'f32[1,18,18,4]{3,2,1,0:T(8,128)}', space=vmem, size = 0x36000, scoped, tag = 'scratch operand']
  #allocation3 [shape = 'f32[1,18,18,8]{3,2,1,0:T(8,128)}', space=vmem, size = 0x36000, scoped, tag = 'scratch operand']
  %s0 = inlined_call_operand.vmem [shape: f32[2,16,16,4], index: 0, kind: input, shape index: {}]
  %s1 = inlined_call_operand.vmem [shape: bf16[36,8], index: 1, kind: input, shape index: {}]
  %s2 = inlined_call_operand.vmem [shape: f32[1,8], index: 2, kind: input, shape index: {}]
  %s3 = inlined_call_operand.vmem [shape: bf16[72,8], index: 3, kind: input, shape index: {}]
  %s4 = inlined_call_operand.vmem [shape: f32[1,8], index: 4, kind: input, shape index: {}]
  %s5 = inlined_call_operand.vmem [shape: f32[8,2], index: 5, kind: input, shape index: {}]
  %s6 = inlined_call_operand.vmem [shape: f32[1,2], index: 6, kind: input, shape index: {}]
  %s7 = inlined_call_operand.vmem [shape: f32[2,8], index: 7, kind: input, shape index: {}]
  %s8 = inlined_call_operand.vmem [shape: f32[1,8], index: 8, kind: input, shape index: {}]
  %s9 = inlined_call_operand.vmem [shape: f32[2,256,8], index: 9, kind: output, shape index: {}]
  %s10 = sld [smem:[#allocation0]]
  $region69: #{tpu_custom_call.1} parent=0
    _
  %s12 = ssub.s32 1, %s10
  %s13 = scalar_select 0, %s12, %s10
  loop: start=0, step=1, limit=4
  $region2: #{tpu_custom_call.1} parent=0 // loop_pre_header
    _
  $region3: #{tpu_custom_call.1} parent=0 // loop_header
    %s15 = sphi 0, %s19
    %p16 = scmp.ge.s32.totalorder %s15, 4
    %s25 = sphi 0, %s27
    %s28 = sphi 0, %s25
    %s29 = sphi 0, %s28
    %s45 = sphi 0, %s29
    %s49 = sphi 0, %s49
    %s51 = sphi 0, %s49
    %s52 = sphi 0, %s51
    %s66 = sphi 0, %s52
    %s70 = sphi 0, %s70
    %s72 = sphi 0, %s70
    %s73 = sphi 0, %s72
    %s87 = sphi 0, %s73
    %s91 = sphi 0, %s91
    %s93 = sphi 0, %s91
    %s94 = sphi 0, %s93
    %s108 = sphi 0, %s94
    %s112 = sphi 0, %s112
    %s114 = sphi 0, %s112
    %s115 = sphi 0, %s114
    %s129 = sphi 0, %s115
    %s133 = sphi 0, %s133
    %s135 = sphi 0, %s133
    %s136 = sphi 0, %s135
    %s150 = sphi 0, %s136
    %s154 = sphi 0, %s154
    %s156 = sphi 0, %s154
    %s157 = sphi 0, %s156
    %s171 = sphi 0, %s157
    %s175 = sphi 0, %s175
    %s177 = sphi 0, %s175
    %s178 = sphi 0, %s177
    %s192 = sphi 0, %s178
    %s196 = sphi 0, %s196
    %s198 = sphi 0, %s196
    %s199 = sphi 0, %s198
    %s213 = sphi 0, %s199
    %s219 = sphi 0, %s221
    %s222 = sphi 0, %s219
    %s223 = sphi 0, %s222
    %s239 = sphi 0, %s223
  $region4: #{tpu_custom_call.1} parent=0 // loop_header_branch
    %18 = sbr.rel (%p16) target = $region8
  $region5: #{tpu_custom_call.1} parent=0 // loop_body
    %s20 = ssub.s32 %s15, 1
    %s21 = ssub.s32 %s15, 2
    %s22 = sadd.s32 %s15, 1
    %s23 = ssub.s32 %s15, %s22
    %p24 = scmp.eq.s32.totalorder %s23, 0
    %s26 = sadd.s32 %s25, 1
    %s27 = scalar_select %p24, %s25, %s26
    %p30 = pneg %p24
    %p31 = scmp.eq.s32.totalorder %s15, 1
    %p32 = por %p30, %p31
    %p33 = scmp.ne.s32.totalorder %s25, %s28
    %p34 = scmp.eq.s32.totalorder %s15, 0
    %p35 = por %p33, %p34
    %p36 = scmp.ne.s32.totalorder %s25, %s28
    %p37 = scmp.eq.s32.totalorder %s20, 1
    %p38 = por %p36, %p37
    %p39 = scmp.ne.s32.totalorder %s28, %s29
    %p40 = scmp.eq.s32.totalorder %s20, 0
    %p41 = por %p39, %p40
    %p42 = scmp.ne.s32.totalorder %s28, %s29
    %p43 = scmp.eq.s32.totalorder %s21, 1
    %p44 = por %p42, %p43
    %p46 = scmp.ne.s32.totalorder %s29, %s45
    %p47 = scmp.eq.s32.totalorder %s21, 0
    %p48 = por %p46, %p47
    %s50 = sadd.s32 %s49, 1
    %p53 = scmp.eq.s32.totalorder %s15, 1
    %p54 = scmp.ne.s32.totalorder %s49, %s51
    %p55 = scmp.eq.s32.totalorder %s15, 0
    %p56 = por %p54, %p55
    %p57 = scmp.ne.s32.totalorder %s49, %s51
    %p58 = scmp.eq.s32.totalorder %s20, 1
    %p59 = por %p57, %p58
    %p60 = scmp.ne.s32.totalorder %s51, %s52
    %p61 = scmp.eq.s32.totalorder %s20, 0
    %p62 = por %p60, %p61
    %p63 = scmp.ne.s32.totalorder %s51, %s52
    %p64 = scmp.eq.s32.totalorder %s21, 1
    %p65 = por %p63, %p64
    %p67 = scmp.ne.s32.totalorder %s52, %s66
    %p68 = scmp.eq.s32.totalorder %s21, 0
    %p69 = por %p67, %p68
    %s71 = sadd.s32 %s70, 1
    %p74 = scmp.eq.s32.totalorder %s15, 1
    %p75 = scmp.ne.s32.totalorder %s70, %s72
    %p76 = scmp.eq.s32.totalorder %s15, 0
    %p77 = por %p75, %p76
    %p78 = scmp.ne.s32.totalorder %s70, %s72
    %p79 = scmp.eq.s32.totalorder %s20, 1
    %p80 = por %p78, %p79
    %p81 = scmp.ne.s32.totalorder %s72, %s73
    %p82 = scmp.eq.s32.totalorder %s20, 0
    %p83 = por %p81, %p82
    %p84 = scmp.ne.s32.totalorder %s72, %s73
    %p85 = scmp.eq.s32.totalorder %s21, 1
    %p86 = por %p84, %p85
    %p88 = scmp.ne.s32.totalorder %s73, %s87
    %p89 = scmp.eq.s32.totalorder %s21, 0
    %p90 = por %p88, %p89
    %s92 = sadd.s32 %s91, 1
    %p95 = scmp.eq.s32.totalorder %s15, 1
    %p96 = scmp.ne.s32.totalorder %s91, %s93
    %p97 = scmp.eq.s32.totalorder %s15, 0
    %p98 = por %p96, %p97
    %p99 = scmp.ne.s32.totalorder %s91, %s93
    %p100 = scmp.eq.s32.totalorder %s20, 1
    %p101 = por %p99, %p100
    %p102 = scmp.ne.s32.totalorder %s93, %s94
    %p103 = scmp.eq.s32.totalorder %s20, 0
    %p104 = por %p102, %p103
    %p105 = scmp.ne.s32.totalorder %s93, %s94
    %p106 = scmp.eq.s32.totalorder %s21, 1
    %p107 = por %p105, %p106
    %p109 = scmp.ne.s32.totalorder %s94, %s108
    %p110 = scmp.eq.s32.totalorder %s21, 0
    %p111 = por %p109, %p110
    %s113 = sadd.s32 %s112, 1
    %p116 = scmp.eq.s32.totalorder %s15, 1
    %p117 = scmp.ne.s32.totalorder %s112, %s114
    %p118 = scmp.eq.s32.totalorder %s15, 0
    %p119 = por %p117, %p118
    %p120 = scmp.ne.s32.totalorder %s112, %s114
    %p121 = scmp.eq.s32.totalorder %s20, 1
    %p122 = por %p120, %p121
    %p123 = scmp.ne.s32.totalorder %s114, %s115
    %p124 = scmp.eq.s32.totalorder %s20, 0
    %p125 = por %p123, %p124
    %p126 = scmp.ne.s32.totalorder %s114, %s115
    %p127 = scmp.eq.s32.totalorder %s21, 1
    %p128 = por %p126, %p127
    %p130 = scmp.ne.s32.totalorder %s115, %s129
    %p131 = scmp.eq.s32.totalorder %s21, 0
    %p132 = por %p130, %p131
    %s134 = sadd.s32 %s133, 1
    %p137 = scmp.eq.s32.totalorder %s15, 1
    %p138 = scmp.ne.s32.totalorder %s133, %s135
    %p139 = scmp.eq.s32.totalorder %s15, 0
    %p140 = por %p138, %p139
    %p141 = scmp.ne.s32.totalorder %s133, %s135
    %p142 = scmp.eq.s32.totalorder %s20, 1
    %p143 = por %p141, %p142
    %p144 = scmp.ne.s32.totalorder %s135, %s136
    %p145 = scmp.eq.s32.totalorder %s20, 0
    %p146 = por %p144, %p145
    %p147 = scmp.ne.s32.totalorder %s135, %s136
    %p148 = scmp.eq.s32.totalorder %s21, 1
    %p149 = por %p147, %p148
    %p151 = scmp.ne.s32.totalorder %s136, %s150
    %p152 = scmp.eq.s32.totalorder %s21, 0
    %p153 = por %p151, %p152
    %s155 = sadd.s32 %s154, 1
    %p158 = scmp.eq.s32.totalorder %s15, 1
    %p159 = scmp.ne.s32.totalorder %s154, %s156
    %p160 = scmp.eq.s32.totalorder %s15, 0
    %p161 = por %p159, %p160
    %p162 = scmp.ne.s32.totalorder %s154, %s156
    %p163 = scmp.eq.s32.totalorder %s20, 1
    %p164 = por %p162, %p163
    %p165 = scmp.ne.s32.totalorder %s156, %s157
    %p166 = scmp.eq.s32.totalorder %s20, 0
    %p167 = por %p165, %p166
    %p168 = scmp.ne.s32.totalorder %s156, %s157
    %p169 = scmp.eq.s32.totalorder %s21, 1
    %p170 = por %p168, %p169
    %p172 = scmp.ne.s32.totalorder %s157, %s171
    %p173 = scmp.eq.s32.totalorder %s21, 0
    %p174 = por %p172, %p173
    %s176 = sadd.s32 %s175, 1
    %p179 = scmp.eq.s32.totalorder %s15, 1
    %p180 = scmp.ne.s32.totalorder %s175, %s177
    %p181 = scmp.eq.s32.totalorder %s15, 0
    %p182 = por %p180, %p181
    %p183 = scmp.ne.s32.totalorder %s175, %s177
    %p184 = scmp.eq.s32.totalorder %s20, 1
    %p185 = por %p183, %p184
    %p186 = scmp.ne.s32.totalorder %s177, %s178
    %p187 = scmp.eq.s32.totalorder %s20, 0
    %p188 = por %p186, %p187
    %p189 = scmp.ne.s32.totalorder %s177, %s178
    %p190 = scmp.eq.s32.totalorder %s21, 1
    %p191 = por %p189, %p190
    %p193 = scmp.ne.s32.totalorder %s178, %s192
    %p194 = scmp.eq.s32.totalorder %s21, 0
    %p195 = por %p193, %p194
    %s197 = sadd.s32 %s196, 1
    %p200 = scmp.eq.s32.totalorder %s15, 1
    %p201 = scmp.ne.s32.totalorder %s196, %s198
    %p202 = scmp.eq.s32.totalorder %s15, 0
    %p203 = por %p201, %p202
    %p204 = scmp.ne.s32.totalorder %s196, %s198
    %p205 = scmp.eq.s32.totalorder %s20, 1
    %p206 = por %p204, %p205
    %p207 = scmp.ne.s32.totalorder %s198, %s199
    %p208 = scmp.eq.s32.totalorder %s20, 0
    %p209 = por %p207, %p208
    %p210 = scmp.ne.s32.totalorder %s198, %s199
    %p211 = scmp.eq.s32.totalorder %s21, 1
    %p212 = por %p210, %p211
    %p214 = scmp.ne.s32.totalorder %s199, %s213
    %p215 = scmp.eq.s32.totalorder %s21, 0
    %p216 = por %p214, %p215
    %s217 = ssub.s32 %s15, %s22
    %p218 = scmp.eq.s32.totalorder %s217, 0
    %s220 = sadd.s32 %s219, 1
    %s221 = scalar_select %p218, %s219, %s220
    %p224 = pneg %p218
    %p225 = scmp.eq.s32.totalorder %s15, 1
    %p226 = por %p224, %p225
    %p227 = scmp.ne.s32.totalorder %s219, %s222
    %p228 = scmp.eq.s32.totalorder %s15, 0
    %p229 = por %p227, %p228
    %p230 = scmp.ne.s32.totalorder %s219, %s222
    %p231 = scmp.eq.s32.totalorder %s20, 1
    %p232 = por %p230, %p231
    %p233 = scmp.ne.s32.totalorder %s222, %s223
    %p234 = scmp.eq.s32.totalorder %s20, 0
    %p235 = por %p233, %p234
    %p236 = scmp.ne.s32.totalorder %s222, %s223
    %p237 = scmp.eq.s32.totalorder %s21, 1
    %p238 = por %p236, %p237
    %p240 = scmp.ne.s32.totalorder %s223, %s239
    %p241 = scmp.eq.s32.totalorder %s21, 0
    %p242 = por %p240, %p241
    %p243 = scmp.le.s32.totalorder 1, %s15
    %p244 = scmp.lt.s32.totalorder %s15, 3
    %p245 = pnand %p243, %p244
    %p246 = pneg %p245
    // Predicated region
    $region9: #{tpu_custom_call.1} parent=5 // pred_check
      _
    $region10: #{tpu_custom_call.1} parent=5 // pred_check_branch
      %248 = sbr.rel (%p245) target = $region12
    $region11: #{tpu_custom_call.1} parent=5 // pred_region
      %s249 = ssub.s32 %s15, 1
      // Predicated region
      $region13: #{tpu_custom_call.1} parent=11 // pred_check
        %p250 = pneg %p62
      $region14: #{tpu_custom_call.1} parent=11 // pred_check_branch
        %252 = sbr.rel (%p250) target = $region16
      $region15: #{tpu_custom_call.1} parent=11 // pred_region
        _
      $region16: #{tpu_custom_call.1} parent=11 // pred_fallthru
        _
      // Predicated region
      $region17: #{tpu_custom_call.1} parent=11 // pred_check
        %p253 = pneg %p83
      $region18: #{tpu_custom_call.1} parent=11 // pred_check_branch
        %255 = sbr.rel (%p253) target = $region20
      $region19: #{tpu_custom_call.1} parent=11 // pred_region
        _
      $region20: #{tpu_custom_call.1} parent=11 // pred_fallthru
        _
      // Predicated region
      $region21: #{tpu_custom_call.1} parent=11 // pred_check
        %p256 = pneg %p104
      $region22: #{tpu_custom_call.1} parent=11 // pred_check_branch
        %258 = sbr.rel (%p256) target = $region24
      $region23: #{tpu_custom_call.1} parent=11 // pred_region
        _
      $region24: #{tpu_custom_call.1} parent=11 // pred_fallthru
        _
      // Predicated region
      $region25: #{tpu_custom_call.1} parent=11 // pred_check
        %p259 = pneg %p125
      $region26: #{tpu_custom_call.1} parent=11 // pred_check_branch
        %261 = sbr.rel (%p259) target = $region28
      $region27: #{tpu_custom_call.1} parent=11 // pred_region
        _
      $region28: #{tpu_custom_call.1} parent=11 // pred_fallthru
        _
      // Predicated region
      $region29: #{tpu_custom_call.1} parent=11 // pred_check
        %p262 = pneg %p146
      $region30: #{tpu_custom_call.1} parent=11 // pred_check_branch
        %264 = sbr.rel (%p262) target = $region32
      $region31: #{tpu_custom_call.1} parent=11 // pred_region
        _
      $region32: #{tpu_custom_call.1} parent=11 // pred_fallthru
        _
      // Predicated region
      $region33: #{tpu_custom_call.1} parent=11 // pred_check
        %p265 = pneg %p167
      $region34: #{tpu_custom_call.1} parent=11 // pred_check_branch
        %267 = sbr.rel (%p265) target = $region36
      $region35: #{tpu_custom_call.1} parent=11 // pred_region
        _
      $region36: #{tpu_custom_call.1} parent=11 // pred_fallthru
        _
      // Predicated region
      $region37: #{tpu_custom_call.1} parent=11 // pred_check
        %p268 = pneg %p188
      $region38: #{tpu_custom_call.1} parent=11 // pred_check_branch
        %270 = sbr.rel (%p268) target = $region40
      $region39: #{tpu_custom_call.1} parent=11 // pred_region
        _
      $region40: #{tpu_custom_call.1} parent=11 // pred_fallthru
        _
      // Predicated region
      $region41: #{tpu_custom_call.1} parent=11 // pred_check
        %p271 = pneg %p209
      $region42: #{tpu_custom_call.1} parent=11 // pred_check_branch
        %273 = sbr.rel (%p271) target = $region44
      $region43: #{tpu_custom_call.1} parent=11 // pred_region
        _
      $region44: #{tpu_custom_call.1} parent=11 // pred_fallthru
        _
    $region12: #{tpu_custom_call.1} parent=5 // pred_fallthru
      _
    %p274 = scmp.lt.s32.totalorder %s15, 2
    // Predicated region
    $region45: #{tpu_custom_call.1} parent=5 // pred_check
      %p275 = pneg %p274
    $region46: #{tpu_custom_call.1} parent=5 // pred_check_branch
      %277 = sbr.rel (%p275) target = $region48
    $region47: #{tpu_custom_call.1} parent=5 // pred_region
      // Predicated region
      $region49: #{tpu_custom_call.1} parent=47 // pred_check
        %p278 = pneg %p35
      $region50: #{tpu_custom_call.1} parent=47 // pred_check_branch
        %280 = sbr.rel (%p278) target = $region52
      $region51: #{tpu_custom_call.1} parent=47 // pred_region
        %p281 = scmp.lt.s32.totalorder %s15, 1
        %s282 = scalar_select %p281, %s15, 1
        %s283 = smul.addr %s282, 32
        %s284 = smul.addr %s283, 8
        %s285 = scalar_lea.vmem %s0, %s284
      $region52: #{tpu_custom_call.1} parent=47 // pred_fallthru
        _
    $region48: #{tpu_custom_call.1} parent=5 // pred_fallthru
      _
    %p286 = scmp.le.s32.totalorder 1, %s15
    %p287 = scmp.lt.s32.totalorder %s15, 3
    %p288 = pnand %p286, %p287
    %p289 = pneg %p288
    // Predicated region
    $region53: #{tpu_custom_call.1} parent=5 // pred_check
      _
    $region54: #{tpu_custom_call.1} parent=5 // pred_check_branch
      %291 = sbr.rel (%p288) target = $region56
    $region55: #{tpu_custom_call.1} parent=5 // pred_region
      %s292 = ssub.s32 %s15, 1
      %p293 = scmp.lt.s32.totalorder %s20, 1
      %s294 = scalar_select %p293, %s20, 1
      %s295 = smul.addr %s294, 32
      %s296 = smul.addr %s295, 8
      %s297 = scalar_lea.vmem %s0, %s296
      %p298 = pneg %p41
      %p299 = pneg %p38
      %p300 = pneg %p62
      %p301 = pneg %p59
      %p302 = pneg %p83
      %p303 = pneg %p80
      %p304 = pneg %p104
      %p305 = pneg %p101
      %p306 = pneg %p125
      %p307 = pneg %p122
      %p308 = pneg %p146
      %p309 = pneg %p143
      %p310 = pneg %p167
      %p311 = pneg %p164
      %p312 = pneg %p188
      %p313 = pneg %p185
      %p314 = pneg %p209
      %p315 = pneg %p206
      %p316 = pneg %p235
      %p317 = pneg %p232
      %p318 = scmp.lt.s32.totalorder %s20, 1
      %s319 = scalar_select %p318, %s20, 1
      %s320 = smul.addr %s319, 32
      %s321 = smul.addr %s320, 8
      %s322 = scalar_lea.vmem %s9, %s321
      %p323 = scmp.lt.s32.totalorder %s20, 1
      %s324 = scalar_select %p323, %s20, 1
      %s325 = smul.addr %s324, 32
      %s326 = smul.addr %s325, 8
      %s327 = scalar_lea.vmem %s0, %s326
      %p328 = scmp.lt.s32.totalorder %s20, 1
      %s329 = scalar_select %p328, %s20, 1
      %s330 = smul.addr %s329, 32
      %s331 = smul.addr %s330, 8
      %s332 = scalar_lea.vmem %s9, %s331
      %v334 = vld [vmem:[%s327] sm:$0xff]
      %v335 = vld [vmem:[%s327 + $0x8] sm:$0xff]
      %v336 = vld [vmem:[%s327 + $0x10] sm:$0xff]
      %v337 = vld [vmem:[%s327 + $0x18] sm:$0xff]
      %v338 = vld [vmem:[%s327 + $0x20] sm:$0xff]
      %v339 = vld [vmem:[%s327 + $0x28] sm:$0xff]
      %v340 = vld [vmem:[%s327 + $0x30] sm:$0xff]
      %v341 = vld [vmem:[%s327 + $0x38] sm:$0xff]
      %v342 = vld [vmem:[%s327 + $0x40] sm:$0xff]
      %v343 = vld [vmem:[%s327 + $0x48] sm:$0xff]
      %v344 = vld [vmem:[%s327 + $0x50] sm:$0xff]
      %v345 = vld [vmem:[%s327 + $0x58] sm:$0xff]
      %v346 = vld [vmem:[%s327 + $0x60] sm:$0xff]
      %v347 = vld [vmem:[%s327 + $0x68] sm:$0xff]
      %v348 = vld [vmem:[%s327 + $0x70] sm:$0xff]
      %v349 = vld [vmem:[%s327 + $0x78] sm:$0xff]
      %v350 = vld [vmem:[%s327 + $0x80] sm:$0xff]
      %v351 = vld [vmem:[%s327 + $0x88] sm:$0xff]
      %v352 = vld [vmem:[%s327 + $0x90] sm:$0xff]
      %v353 = vld [vmem:[%s327 + $0x98] sm:$0xff]
      %v354 = vld [vmem:[%s327 + $0xa0] sm:$0xff]
      %v355 = vld [vmem:[%s327 + $0xa8] sm:$0xff]
      %v356 = vld [vmem:[%s327 + $0xb0] sm:$0xff]
      %v357 = vld [vmem:[%s327 + $0xb8] sm:$0xff]
      %v358 = vld [vmem:[%s327 + $0xc0] sm:$0xff]
      %v359 = vld [vmem:[%s327 + $0xc8] sm:$0xff]
      %v360 = vld [vmem:[%s327 + $0xd0] sm:$0xff]
      %v361 = vld [vmem:[%s327 + $0xd8] sm:$0xff]
      %v362 = vld [vmem:[%s327 + $0xe0] sm:$0xff]
      %v363 = vld [vmem:[%s327 + $0xe8] sm:$0xff]
      %v364 = vld [vmem:[%s327 + $0xf0] sm:$0xff]
      %v365 = vld [vmem:[%s327 + $0xf8] sm:$0xff]
      %v366 = vmax.f32 %v334, 0.0
      %v367 = vmax.f32 %v335, 0.0
      %v368 = vmax.f32 %v336, 0.0
      %v369 = vmax.f32 %v337, 0.0
      %v370 = vmax.f32 %v338, 0.0
      %v371 = vmax.f32 %v339, 0.0
      %v372 = vmax.f32 %v340, 0.0
      %v373 = vmax.f32 %v341, 0.0
      %v374 = vmax.f32 %v342, 0.0
      %v375 = vmax.f32 %v343, 0.0
      %v376 = vmax.f32 %v344, 0.0
      %v377 = vmax.f32 %v345, 0.0
      %v378 = vmax.f32 %v346, 0.0
      %v379 = vmax.f32 %v347, 0.0
      %v380 = vmax.f32 %v348, 0.0
      %v381 = vmax.f32 %v349, 0.0
      %v382 = vmax.f32 %v350, 0.0
      %v383 = vmax.f32 %v351, 0.0
      %v384 = vmax.f32 %v352, 0.0
      %v385 = vmax.f32 %v353, 0.0
      %v386 = vmax.f32 %v354, 0.0
      %v387 = vmax.f32 %v355, 0.0
      %v388 = vmax.f32 %v356, 0.0
      %v389 = vmax.f32 %v357, 0.0
      %v390 = vmax.f32 %v358, 0.0
      %v391 = vmax.f32 %v359, 0.0
      %v392 = vmax.f32 %v360, 0.0
      %v393 = vmax.f32 %v361, 0.0
      %v394 = vmax.f32 %v362, 0.0
      %v395 = vmax.f32 %v363, 0.0
      %v396 = vmax.f32 %v364, 0.0
      %v397 = vmax.f32 %v365, 0.0
      %vm398 = vcmask 31744
      %399 = vst.msk [vmem:[#allocation2] sm:$0xff] %vm398, 0.0
      %400 = vst.msk [vmem:[#allocation2 + $0x8] sm:$0xff] %vm398, 0.0
      %vm401 = vcmask 25600
      %402 = vst.msk [vmem:[#allocation2 + $0x10] sm:$0x3] %vm401, 0.0
      %s403 = scalar_lea.vmem [#allocation2], 408
      %404 = vst.msk [vmem:[%s403] sm:$0xff] %vm398, 0.0
      %405 = vst.msk [vmem:[%s403 + $0x8] sm:$0xff] %vm398, 0.0
      %406 = vst.msk [vmem:[%s403 + $0x10] sm:$0x3] %vm401, 0.0
      %vm407 = vcmask 24576
      %408 = vst.msk [vmem:[#allocation2] sm:$0x1] %vm407, 0.0
      %409 = vst.msk [vmem:[#allocation2 + $0x18] sm:$0x1] %vm407, 0.0
      %410 = vst.msk [vmem:[#allocation2 + $0x30] sm:$0x1] %vm407, 0.0
      %411 = vst.msk [vmem:[#allocation2 + $0x48] sm:$0x1] %vm407, 0.0
      %412 = vst.msk [vmem:[#allocation2 + $0x60] sm:$0x1] %vm407, 0.0
      %413 = vst.msk [vmem:[#allocation2 + $0x78] sm:$0x1] %vm407, 0.0
      %414 = vst.msk [vmem:[#allocation2 + $0x90] sm:$0x1] %vm407, 0.0
      %415 = vst.msk [vmem:[#allocation2 + $0xa8] sm:$0x1] %vm407, 0.0
      %416 = vst.msk [vmem:[#allocation2 + $0xc0] sm:$0x1] %vm407, 0.0
      %417 = vst.msk [vmem:[#allocation2 + $0xd8] sm:$0x1] %vm407, 0.0
      %418 = vst.msk [vmem:[#allocation2 + $0xf0] sm:$0x1] %vm407, 0.0
      %419 = vst.msk [vmem:[#allocation2 + $0x108] sm:$0x1] %vm407, 0.0
      %420 = vst.msk [vmem:[#allocation2 + $0x120] sm:$0x1] %vm407, 0.0
      %421 = vst.msk [vmem:[#allocation2 + $0x138] sm:$0x1] %vm407, 0.0
      %422 = vst.msk [vmem:[#allocation2 + $0x150] sm:$0x1] %vm407, 0.0
      %423 = vst.msk [vmem:[#allocation2 + $0x168] sm:$0x1] %vm407, 0.0
      %424 = vst.msk [vmem:[#allocation2 + $0x180] sm:$0x1] %vm407, 0.0
      %425 = vst.msk [vmem:[#allocation2 + $0x198] sm:$0x1] %vm407, 0.0
      %426 = vst.msk [vmem:[#allocation2 + $0x11] sm:$0x1] %vm407, 0.0
      %427 = vst.msk [vmem:[#allocation2 + $0x29] sm:$0x1] %vm407, 0.0
      %428 = vst.msk [vmem:[#allocation2 + $0x41] sm:$0x1] %vm407, 0.0
      %429 = vst.msk [vmem:[#allocation2 + $0x59] sm:$0x1] %vm407, 0.0
      %430 = vst.msk [vmem:[#allocation2 + $0x71] sm:$0x1] %vm407, 0.0
      %431 = vst.msk [vmem:[#allocation2 + $0x89] sm:$0x1] %vm407, 0.0
      %432 = vst.msk [vmem:[#allocation2 + $0xa1] sm:$0x1] %vm407, 0.0
      %433 = vst.msk [vmem:[#allocation2 + $0xb9] sm:$0x1] %vm407, 0.0
      %434 = vst.msk [vmem:[#allocation2 + $0xd1] sm:$0x1] %vm407, 0.0
      %435 = vst.msk [vmem:[#allocation2 + $0xe9] sm:$0x1] %vm407, 0.0
      %436 = vst.msk [vmem:[#allocation2 + $0x101] sm:$0x1] %vm407, 0.0
      %437 = vst.msk [vmem:[#allocation2 + $0x119] sm:$0x1] %vm407, 0.0
      %438 = vst.msk [vmem:[#allocation2 + $0x131] sm:$0x1] %vm407, 0.0
      %439 = vst.msk [vmem:[#allocation2 + $0x149] sm:$0x1] %vm407, 0.0
      %440 = vst.msk [vmem:[#allocation2 + $0x161] sm:$0x1] %vm407, 0.0
      %441 = vst.msk [vmem:[#allocation2 + $0x179] sm:$0x1] %vm407, 0.0
      %442 = vst.msk [vmem:[#allocation2 + $0x191] sm:$0x1] %vm407, 0.0
      %443 = vst.msk [vmem:[#allocation2 + $0x1a9] sm:$0x1] %vm407, 0.0
      %s444 = scalar_lea.vmem [#allocation2], 24
      %445 = vst.msk [vmem:[%s444 + $0x1] sm:$0xff] %vm398, %v366
      %446 = vst.msk [vmem:[%s444 + $0x9] sm:$0xff] %vm398, %v367
      %447 = vst.msk [vmem:[%s444 + $0x19] sm:$0xff] %vm398, %v368
      %448 = vst.msk [vmem:[%s444 + $0x21] sm:$0xff] %vm398, %v369
      %449 = vst.msk [vmem:[%s444 + $0x31] sm:$0xff] %vm398, %v370
      %450 = vst.msk [vmem:[%s444 + $0x39] sm:$0xff] %vm398, %v371
      %451 = vst.msk [vmem:[%s444 + $0x49] sm:$0xff] %vm398, %v372
      %452 = vst.msk [vmem:[%s444 + $0x51] sm:$0xff] %vm398, %v373
      %453 = vst.msk [vmem:[%s444 + $0x61] sm:$0xff] %vm398, %v374
      %454 = vst.msk [vmem:[%s444 + $0x69] sm:$0xff] %vm398, %v375
      %455 = vst.msk [vmem:[%s444 + $0x79] sm:$0xff] %vm398, %v376
      %456 = vst.msk [vmem:[%s444 + $0x81] sm:$0xff] %vm398, %v377
      %457 = vst.msk [vmem:[%s444 + $0x91] sm:$0xff] %vm398, %v378
      %458 = vst.msk [vmem:[%s444 + $0x99] sm:$0xff] %vm398, %v379
      %459 = vst.msk [vmem:[%s444 + $0xa9] sm:$0xff] %vm398, %v380
      %460 = vst.msk [vmem:[%s444 + $0xb1] sm:$0xff] %vm398, %v381
      %461 = vst.msk [vmem:[%s444 + $0xc1] sm:$0xff] %vm398, %v382
      %462 = vst.msk [vmem:[%s444 + $0xc9] sm:$0xff] %vm398, %v383
      %463 = vst.msk [vmem:[%s444 + $0xd9] sm:$0xff] %vm398, %v384
      %464 = vst.msk [vmem:[%s444 + $0xe1] sm:$0xff] %vm398, %v385
      %465 = vst.msk [vmem:[%s444 + $0xf1] sm:$0xff] %vm398, %v386
      %466 = vst.msk [vmem:[%s444 + $0xf9] sm:$0xff] %vm398, %v387
      %467 = vst.msk [vmem:[%s444 + $0x109] sm:$0xff] %vm398, %v388
      %468 = vst.msk [vmem:[%s444 + $0x111] sm:$0xff] %vm398, %v389
      %469 = vst.msk [vmem:[%s444 + $0x121] sm:$0xff] %vm398, %v390
      %470 = vst.msk [vmem:[%s444 + $0x129] sm:$0xff] %vm398, %v391
      %471 = vst.msk [vmem:[%s444 + $0x139] sm:$0xff] %vm398, %v392
      %472 = vst.msk [vmem:[%s444 + $0x141] sm:$0xff] %vm398, %v393
      %473 = vst.msk [vmem:[%s444 + $0x151] sm:$0xff] %vm398, %v394
      %474 = vst.msk [vmem:[%s444 + $0x159] sm:$0xff] %vm398, %v395
      %475 = vst.msk [vmem:[%s444 + $0x169] sm:$0xff] %vm398, %v396
      %476 = vst.msk [vmem:[%s444 + $0x171] sm:$0xff] %vm398, %v397
      %v477 = vld [vmem:[#allocation2] sm:$0xff]
      %v478 = vld [vmem:[#allocation2 + $0x8] sm:$0xff]
      %v479 = vld [vmem:[#allocation2 + $0x10] sm:$0x3]
      %v480 = vld [vmem:[#allocation2 + $0x18] sm:$0xff]
      %v481 = vld [vmem:[#allocation2 + $0x20] sm:$0xff]
      %v482 = vld [vmem:[#allocation2 + $0x28] sm:$0x3]
      %v483 = vld [vmem:[#allocation2 + $0x30] sm:$0xff]
      %v484 = vld [vmem:[#allocation2 + $0x38] sm:$0xff]
      %v485 = vld [vmem:[#allocation2 + $0x40] sm:$0x3]
      %v486 = vld [vmem:[#allocation2 + $0x48] sm:$0xff]
      %v487 = vld [vmem:[#allocation2 + $0x50] sm:$0xff]
      %v488 = vld [vmem:[#allocation2 + $0x58] sm:$0x3]
      %v489 = vld [vmem:[#allocation2 + $0x60] sm:$0xff]
      %v490 = vld [vmem:[#allocation2 + $0x68] sm:$0xff]
      %v491 = vld [vmem:[#allocation2 + $0x70] sm:$0x3]
      %v492 = vld [vmem:[#allocation2 + $0x78] sm:$0xff]
      %v493 = vld [vmem:[#allocation2 + $0x80] sm:$0xff]
      %v494 = vld [vmem:[#allocation2 + $0x88] sm:$0x3]
      %v495 = vld [vmem:[#allocation2 + $0x90] sm:$0xff]
      %v496 = vld [vmem:[#allocation2 + $0x98] sm:$0xff]
      %v497 = vld [vmem:[#allocation2 + $0xa0] sm:$0x3]
      %v498 = vld [vmem:[#allocation2 + $0xa8] sm:$0xff]
      %v499 = vld [vmem:[#allocation2 + $0xb0] sm:$0xff]
      %v500 = vld [vmem:[#allocation2 + $0xb8] sm:$0x3]
      %v501 = vld [vmem:[#allocation2 + $0xc0] sm:$0xff]
      %v502 = vld [vmem:[#allocation2 + $0xc8] sm:$0xff]
      %v503 = vld [vmem:[#allocation2 + $0xd0] sm:$0x3]
      %v504 = vld [vmem:[#allocation2 + $0xd8] sm:$0xff]
      %v505 = vld [vmem:[#allocation2 + $0xe0] sm:$0xff]
      %v506 = vld [vmem:[#allocation2 + $0xe8] sm:$0x3]
      %v507 = vld [vmem:[#allocation2 + $0xf0] sm:$0xff]
      %v508 = vld [vmem:[#allocation2 + $0xf8] sm:$0xff]
      %v509 = vld [vmem:[#allocation2 + $0x100] sm:$0x3]
      %v510 = vld [vmem:[#allocation2 + $0x108] sm:$0xff]
      %v511 = vld [vmem:[#allocation2 + $0x110] sm:$0xff]
      %v512 = vld [vmem:[#allocation2 + $0x118] sm:$0x3]
      %v513 = vld [vmem:[#allocation2 + $0x120] sm:$0xff]
      %v514 = vld [vmem:[#allocation2 + $0x128] sm:$0xff]
      %v515 = vld [vmem:[#allocation2 + $0x130] sm:$0x3]
      %v516 = vld [vmem:[#allocation2 + $0x138] sm:$0xff]
      %v517 = vld [vmem:[#allocation2 + $0x140] sm:$0xff]
      %v518 = vld [vmem:[#allocation2 + $0x148] sm:$0x3]
      %v519 = vld [vmem:[#allocation2 + $0x150] sm:$0xff]
      %v520 = vld [vmem:[#allocation2 + $0x158] sm:$0xff]
      %v521 = vld [vmem:[#allocation2 + $0x160] sm:$0x3]
      %v522 = vld [vmem:[#allocation2 + $0x168] sm:$0xff]
      %v523 = vld [vmem:[#allocation2 + $0x170] sm:$0xff]
      %v524 = vld [vmem:[#allocation2 + $0x178] sm:$0x3]
      %v525 = vld [vmem:[#allocation2 + $0x180] sm:$0xff]
      %v526 = vld [vmem:[#allocation2 + $0x188] sm:$0xff]
      %v527 = vld [vmem:[#allocation2 + $0x190] sm:$0x3]
      %v528 = vld [vmem:[#allocation2 + $0x198] sm:$0xff]
      %v529 = vld [vmem:[#allocation2 + $0x1a0] sm:$0xff]
      %v530 = vld [vmem:[#allocation2 + $0x1a8] sm:$0x3]
      %v531 = vld [vmem:[%s1] sm:$0xf]
      %v532 = vld [vmem:[%s1 + $0x4] sm:$0xf]
      %v533 = vld [vmem:[%s1 + $0x8] sm:$0xf]
      %v534 = vld [vmem:[%s1 + $0xc] sm:$0xf]
      %v535 = vld [vmem:[%s1 + $0x10] sm:$0x3]
      %v536 = vpack.c.bf16 %v478, %v477
      %v537 = vpack.c.bf16 %v481, %v480
      %v538 = vpack.c.bf16 %v484, %v483
      %v539 = vpack.c.bf16 %v487, %v486
      %v540 = vpack.c.bf16 %v490, %v489
      %v541 = vpack.c.bf16 %v493, %v492
      %v542 = vpack.c.bf16 %v496, %v495
      %v543 = vpack.c.bf16 %v499, %v498
      %v544 = vpack.c.bf16 %v502, %v501
      %v545 = vpack.c.bf16 %v505, %v504
      %v546 = vpack.c.bf16 %v508, %v507
      %v547 = vpack.c.bf16 %v511, %v510
      %v548 = vpack.c.bf16 %v514, %v513
      %v549 = vpack.c.bf16 %v517, %v516
      %v550 = vpack.c.bf16 %v520, %v519
      %v551 = vpack.c.bf16 %v523, %v522
      %vm600 = vcmask 1046528
      %v601 = vrot.slane %v477, 1
      %v602 = vrot.slane %v478, 1
      %v603 = vsel %vm600, %v601, %v602
      %v604 = vrot.slane %v479, 1
      %v605 = vsel %vm600, %v602, %v604
      %v606 = vrot.slane %v480, 1
      %v607 = vrot.slane %v481, 1
      %v608 = vsel %vm600, %v606, %v607
      %v609 = vrot.slane %v482, 1
      %v610 = vsel %vm600, %v607, %v609
      %v611 = vrot.slane %v483, 1
      %v612 = vrot.slane %v484, 1
      %v613 = vsel %vm600, %v611, %v612
      %v614 = vrot.slane %v485, 1
      %v615 = vsel %vm600, %v612, %v614
      %v616 = vrot.slane %v486, 1
      %v617 = vrot.slane %v487, 1
      %v618 = vsel %vm600, %v616, %v617
      %v619 = vrot.slane %v488, 1
      %v620 = vsel %vm600, %v617, %v619
      %v621 = vrot.slane %v489, 1
      %v622 = vrot.slane %v490, 1
      %v623 = vsel %vm600, %v621, %v622
      %v624 = vrot.slane %v491, 1
      %v625 = vsel %vm600, %v622, %v624
      %v626 = vrot.slane %v492, 1
      %v627 = vrot.slane %v493, 1
      %v628 = vsel %vm600, %v626, %v627
      %v629 = vrot.slane %v494, 1
      %v630 = vsel %vm600, %v627, %v629
      %v631 = vrot.slane %v495, 1
      %v632 = vrot.slane %v496, 1
      %v633 = vsel %vm600, %v631, %v632
      %v634 = vrot.slane %v497, 1
      %v635 = vsel %vm600, %v632, %v634
      %v636 = vrot.slane %v498, 1
      %v637 = vrot.slane %v499, 1
      %v638 = vsel %vm600, %v636, %v637
      %v639 = vrot.slane %v500, 1
      %v640 = vsel %vm600, %v637, %v639
      %v641 = vrot.slane %v501, 1
      %v642 = vrot.slane %v502, 1
      %v643 = vsel %vm600, %v641, %v642
      %v644 = vrot.slane %v503, 1
      %v645 = vsel %vm600, %v642, %v644
      %v646 = vrot.slane %v504, 1
      %v647 = vrot.slane %v505, 1
      %v648 = vsel %vm600, %v646, %v647
      %v649 = vrot.slane %v506, 1
      %v650 = vsel %vm600, %v647, %v649
      %v651 = vrot.slane %v507, 1
      %v652 = vrot.slane %v508, 1
      %v653 = vsel %vm600, %v651, %v652
      %v654 = vrot.slane %v509, 1
      %v655 = vsel %vm600, %v652, %v654
      %v656 = vrot.slane %v510, 1
      %v657 = vrot.slane %v511, 1
      %v658 = vsel %vm600, %v656, %v657
      %v659 = vrot.slane %v512, 1
      %v660 = vsel %vm600, %v657, %v659
      %v661 = vrot.slane %v513, 1
      %v662 = vrot.slane %v514, 1
      %v663 = vsel %vm600, %v661, %v662
      %v664 = vrot.slane %v515, 1
      %v665 = vsel %vm600, %v662, %v664
      %v666 = vrot.slane %v516, 1
      %v667 = vrot.slane %v517, 1
      %v668 = vsel %vm600, %v666, %v667
      %v669 = vrot.slane %v518, 1
      %v670 = vsel %vm600, %v667, %v669
      %v671 = vrot.slane %v519, 1
      %v672 = vrot.slane %v520, 1
      %v673 = vsel %vm600, %v671, %v672
      %v674 = vrot.slane %v521, 1
      %v675 = vsel %vm600, %v672, %v674
      %v676 = vrot.slane %v522, 1
      %v677 = vrot.slane %v523, 1
      %v678 = vsel %vm600, %v676, %v677
      %v679 = vrot.slane %v524, 1
      %v680 = vsel %vm600, %v677, %v679
      %v713 = vpack.c.bf16 %v605, %v603
      %v714 = vpack.c.bf16 %v610, %v608
      %v715 = vpack.c.bf16 %v615, %v613
      %v716 = vpack.c.bf16 %v620, %v618
      %v717 = vpack.c.bf16 %v625, %v623
      %v718 = vpack.c.bf16 %v630, %v628
      %v719 = vpack.c.bf16 %v635, %v633
      %v720 = vpack.c.bf16 %v640, %v638
      %v721 = vpack.c.bf16 %v645, %v643
      %v722 = vpack.c.bf16 %v650, %v648
      %v723 = vpack.c.bf16 %v655, %v653
      %v724 = vpack.c.bf16 %v660, %v658
      %v725 = vpack.c.bf16 %v665, %v663
      %v726 = vpack.c.bf16 %v670, %v668
      %v727 = vpack.c.bf16 %v675, %v673
      %v728 = vpack.c.bf16 %v680, %v678
      %v730 = vunpack.c.l.b16 %v531
      %v731 = vpack.c.b16 %v730, %v730
      %v732 = vrot.slane %v731, 2
      %v734 = vsel %vm398, %v713, 0
      %v737 = vsel %vm398, %v714, 0
      %v740 = vsel %vm398, %v715, 0
      %v743 = vsel %vm398, %v716, 0
      %v746 = vsel %vm398, %v717, 0
      %v749 = vsel %vm398, %v718, 0
      %v752 = vsel %vm398, %v719, 0
      %v755 = vsel %vm398, %v720, 0
      %v758 = vsel %vm398, %v721, 0
      %v761 = vsel %vm398, %v722, 0
      %v764 = vsel %vm398, %v723, 0
      %v767 = vsel %vm398, %v724, 0
      %v770 = vsel %vm398, %v725, 0
      %v773 = vsel %vm398, %v726, 0
      %v776 = vsel %vm398, %v727, 0
      %v779 = vsel %vm398, %v728, 0
      %vm781 = vcmask 1041408
      %v783 = vsel %vm781, %v732, 0
      %785 = vmatpush.bf16.msra.mxu0 0
      %786 = vmatpush.bf16.msra.mxu0 0
      %787 = vmatpush.bf16.msra.mxu0 0
      %788 = vmatpush.bf16.msra.mxu0 0
      %789 = vmatpush.bf16.msra.mxu0 0
      %790 = vmatpush.bf16.msra.mxu0 0
      %791 = vmatpush.bf16.msra.mxu0 0
      %792 = vmatpush.bf16.msra.mxu0 %v783
      %793 = vmatmul.bf16.gmra.mxu0 %v734
      %v794 = vpop.f32.mrf.mxu0
      %v795 = vadd.f32 0.0, %v794
      %v796 = vpop.f32.mrf.mxu0
      %v797 = vadd.f32 0.0, %v796
      %798 = vmatmul.bf16.gmra.mxu0 %v737
      %v799 = vpop.f32.mrf.mxu0
      %v800 = vadd.f32 0.0, %v799
      %v801 = vpop.f32.mrf.mxu0
      %v802 = vadd.f32 0.0, %v801
      %803 = vmatmul.bf16.gmra.mxu0 %v740
      %v804 = vpop.f32.mrf.mxu0
      %v805 = vadd.f32 0.0, %v804
      %v806 = vpop.f32.mrf.mxu0
      %v807 = vadd.f32 0.0, %v806
      %808 = vmatmul.bf16.gmra.mxu0 %v743
      %v809 = vpop.f32.mrf.mxu0
      %v810 = vadd.f32 0.0, %v809
      %v811 = vpop.f32.mrf.mxu0
      %v812 = vadd.f32 0.0, %v811
      %813 = vmatmul.bf16.gmra.mxu0 %v746
      %v814 = vpop.f32.mrf.mxu0
      %v815 = vadd.f32 0.0, %v814
      %v816 = vpop.f32.mrf.mxu0
      %v817 = vadd.f32 0.0, %v816
      %818 = vmatmul.bf16.gmra.mxu0 %v749
      %v819 = vpop.f32.mrf.mxu0
      %v820 = vadd.f32 0.0, %v819
      %v821 = vpop.f32.mrf.mxu0
      %v822 = vadd.f32 0.0, %v821
      %823 = vmatmul.bf16.gmra.mxu0 %v752
      %v824 = vpop.f32.mrf.mxu0
      %v825 = vadd.f32 0.0, %v824
      %v826 = vpop.f32.mrf.mxu0
      %v827 = vadd.f32 0.0, %v826
      %828 = vmatmul.bf16.gmra.mxu0 %v755
      %v829 = vpop.f32.mrf.mxu0
      %v830 = vadd.f32 0.0, %v829
      %v831 = vpop.f32.mrf.mxu0
      %v832 = vadd.f32 0.0, %v831
      %833 = vmatmul.bf16.gmra.mxu0 %v758
      %v834 = vpop.f32.mrf.mxu0
      %v835 = vadd.f32 0.0, %v834
      %v836 = vpop.f32.mrf.mxu0
      %v837 = vadd.f32 0.0, %v836
      %838 = vmatmul.bf16.gmra.mxu0 %v761
      %v839 = vpop.f32.mrf.mxu0
      %v840 = vadd.f32 0.0, %v839
      %v841 = vpop.f32.mrf.mxu0
      %v842 = vadd.f32 0.0, %v841
      %843 = vmatmul.bf16.gmra.mxu0 %v764
      %v844 = vpop.f32.mrf.mxu0
      %v845 = vadd.f32 0.0, %v844
      %v846 = vpop.f32.mrf.mxu0
      %v847 = vadd.f32 0.0, %v846
      %848 = vmatmul.bf16.gmra.mxu0 %v767
      %v849 = vpop.f32.mrf.mxu0
      %v850 = vadd.f32 0.0, %v849
      %v851 = vpop.f32.mrf.mxu0
      %v852 = vadd.f32 0.0, %v851
      %853 = vmatmul.bf16.gmra.mxu0 %v770
      %v854 = vpop.f32.mrf.mxu0
      %v855 = vadd.f32 0.0, %v854
      %v856 = vpop.f32.mrf.mxu0
      %v857 = vadd.f32 0.0, %v856
      %858 = vmatmul.bf16.gmra.mxu0 %v773
      %v859 = vpop.f32.mrf.mxu0
      %v860 = vadd.f32 0.0, %v859
      %v861 = vpop.f32.mrf.mxu0
      %v862 = vadd.f32 0.0, %v861
      %863 = vmatmul.bf16.gmra.mxu0 %v776
      %v864 = vpop.f32.mrf.mxu0
      %v865 = vadd.f32 0.0, %v864
      %v866 = vpop.f32.mrf.mxu0
      %v867 = vadd.f32 0.0, %v866
      %868 = vmatmul.bf16.gmra.mxu0 %v779
      %v869 = vpop.f32.mrf.mxu0
      %v870 = vadd.f32 0.0, %v869
      %v871 = vpop.f32.mrf.mxu0
      %v872 = vadd.f32 0.0, %v871
      %873 = vdwg.mxu0
      %v875 = vsel %vm398, %v536, 0
      %v878 = vsel %vm398, %v537, 0
      %v881 = vsel %vm398, %v538, 0
      %v884 = vsel %vm398, %v539, 0
      %v887 = vsel %vm398, %v540, 0
      %v890 = vsel %vm398, %v541, 0
      %v893 = vsel %vm398, %v542, 0
      %v896 = vsel %vm398, %v543, 0
      %v899 = vsel %vm398, %v544, 0
      %v902 = vsel %vm398, %v545, 0
      %v905 = vsel %vm398, %v546, 0
      %v908 = vsel %vm398, %v547, 0
      %v911 = vsel %vm398, %v548, 0
      %v914 = vsel %vm398, %v549, 0
      %v917 = vsel %vm398, %v550, 0
      %v920 = vsel %vm398, %v551, 0
      %v923 = vsel %vm781, %v531, 0
      %925 = vmatpush.bf16.msra.mxu0 0
      %926 = vmatpush.bf16.msra.mxu0 0
      %927 = vmatpush.bf16.msra.mxu0 0
      %928 = vmatpush.bf16.msra.mxu0 0
      %929 = vmatpush.bf16.msra.mxu0 0
      %930 = vmatpush.bf16.msra.mxu0 0
      %931 = vmatpush.bf16.msra.mxu0 0
      %932 = vmatpush.bf16.msra.mxu0 %v923
      %933 = vmatmul.bf16.gmra.mxu0 %v875
      %v934 = vpop.f32.mrf.mxu0
      %v935 = vadd.f32 %v795, %v934
      %v936 = vpop.f32.mrf.mxu0
      %v937 = vadd.f32 %v797, %v936
      %938 = vmatmul.bf16.gmra.mxu0 %v878
      %v939 = vpop.f32.mrf.mxu0
      %v940 = vadd.f32 %v800, %v939
      %v941 = vpop.f32.mrf.mxu0
      %v942 = vadd.f32 %v802, %v941
      %943 = vmatmul.bf16.gmra.mxu0 %v881
      %v944 = vpop.f32.mrf.mxu0
      %v945 = vadd.f32 %v805, %v944
      %v946 = vpop.f32.mrf.mxu0
      %v947 = vadd.f32 %v807, %v946
      %948 = vmatmul.bf16.gmra.mxu0 %v884
      %v949 = vpop.f32.mrf.mxu0
      %v950 = vadd.f32 %v810, %v949
      %v951 = vpop.f32.mrf.mxu0
      %v952 = vadd.f32 %v812, %v951
      %953 = vmatmul.bf16.gmra.mxu0 %v887
      %v954 = vpop.f32.mrf.mxu0
      %v955 = vadd.f32 %v815, %v954
      %v956 = vpop.f32.mrf.mxu0
      %v957 = vadd.f32 %v817, %v956
      %958 = vmatmul.bf16.gmra.mxu0 %v890
      %v959 = vpop.f32.mrf.mxu0
      %v960 = vadd.f32 %v820, %v959
      %v961 = vpop.f32.mrf.mxu0
      %v962 = vadd.f32 %v822, %v961
      %963 = vmatmul.bf16.gmra.mxu0 %v893
      %v964 = vpop.f32.mrf.mxu0
      %v965 = vadd.f32 %v825, %v964
      %v966 = vpop.f32.mrf.mxu0
      %v967 = vadd.f32 %v827, %v966
      %968 = vmatmul.bf16.gmra.mxu0 %v896
      %v969 = vpop.f32.mrf.mxu0
      %v970 = vadd.f32 %v830, %v969
      %v971 = vpop.f32.mrf.mxu0
      %v972 = vadd.f32 %v832, %v971
      %973 = vmatmul.bf16.gmra.mxu0 %v899
      %v974 = vpop.f32.mrf.mxu0
      %v975 = vadd.f32 %v835, %v974
      %v976 = vpop.f32.mrf.mxu0
      %v977 = vadd.f32 %v837, %v976
      %978 = vmatmul.bf16.gmra.mxu0 %v902
      %v979 = vpop.f32.mrf.mxu0
      %v980 = vadd.f32 %v840, %v979
      %v981 = vpop.f32.mrf.mxu0
      %v982 = vadd.f32 %v842, %v981
      %983 = vmatmul.bf16.gmra.mxu0 %v905
      %v984 = vpop.f32.mrf.mxu0
      %v985 = vadd.f32 %v845, %v984
      %v986 = vpop.f32.mrf.mxu0
      %v987 = vadd.f32 %v847, %v986
      %988 = vmatmul.bf16.gmra.mxu0 %v908
      %v989 = vpop.f32.mrf.mxu0
      %v990 = vadd.f32 %v850, %v989
      %v991 = vpop.f32.mrf.mxu0
      %v992 = vadd.f32 %v852, %v991
      %993 = vmatmul.bf16.gmra.mxu0 %v911
      %v994 = vpop.f32.mrf.mxu0
      %v995 = vadd.f32 %v855, %v994
      %v996 = vpop.f32.mrf.mxu0
      %v997 = vadd.f32 %v857, %v996
      %998 = vmatmul.bf16.gmra.mxu0 %v914
      %v999 = vpop.f32.mrf.mxu0
      %v1000 = vadd.f32 %v860, %v999
      %v1001 = vpop.f32.mrf.mxu0
      %v1002 = vadd.f32 %v862, %v1001
      %1003 = vmatmul.bf16.gmra.mxu0 %v917
      %v1004 = vpop.f32.mrf.mxu0
      %v1005 = vadd.f32 %v865, %v1004
      %v1006 = vpop.f32.mrf.mxu0
      %v1007 = vadd.f32 %v867, %v1006
      %1008 = vmatmul.bf16.gmra.mxu0 %v920
      %v1009 = vpop.f32.mrf.mxu0
      %v1010 = vadd.f32 %v870, %v1009
      %v1011 = vpop.f32.mrf.mxu0
      %v1012 = vadd.f32 %v872, %v1011
      %1013 = vdwg.mxu0
      %vm1014 = vcmask 1045504
      %v1015 = vrot.slane %v477, 2
      %v1016 = vrot.slane %v478, 2
      %v1017 = vsel %vm1014, %v1015, %v1016
      %v1018 = vrot.slane %v479, 2
      %v1019 = vsel %vm1014, %v1016, %v1018
      %v1020 = vrot.slane %v480, 2
      %v1021 = vrot.slane %v481, 2
      %v1022 = vsel %vm1014, %v1020, %v1021
      %v1023 = vrot.slane %v482, 2
      %v1024 = vsel %vm1014, %v1021, %v1023
      %v1025 = vrot.slane %v483, 2
      %v1026 = vrot.slane %v484, 2
      %v1027 = vsel %vm1014, %v1025, %v1026
      %v1028 = vrot.slane %v485, 2
      %v1029 = vsel %vm1014, %v1026, %v1028
      %v1030 = vrot.slane %v486, 2
      %v1031 = vrot.slane %v487, 2
      %v1032 = vsel %vm1014, %v1030, %v1031
      %v1033 = vrot.slane %v488, 2
      %v1034 = vsel %vm1014, %v1031, %v1033
      %v1035 = vrot.slane %v489, 2
      %v1036 = vrot.slane %v490, 2
      %v1037 = vsel %vm1014, %v1035, %v1036
      %v1038 = vrot.slane %v491, 2
      %v1039 = vsel %vm1014, %v1036, %v1038
      %v1040 = vrot.slane %v492, 2
      %v1041 = vrot.slane %v493, 2
      %v1042 = vsel %vm1014, %v1040, %v1041
      %v1043 = vrot.slane %v494, 2
      %v1044 = vsel %vm1014, %v1041, %v1043
      %v1045 = vrot.slane %v495, 2
      %v1046 = vrot.slane %v496, 2
      %v1047 = vsel %vm1014, %v1045, %v1046
      %v1048 = vrot.slane %v497, 2
      %v1049 = vsel %vm1014, %v1046, %v1048
      %v1050 = vrot.slane %v498, 2
      %v1051 = vrot.slane %v499, 2
      %v1052 = vsel %vm1014, %v1050, %v1051
      %v1053 = vrot.slane %v500, 2
      %v1054 = vsel %vm1014, %v1051, %v1053
      %v1055 = vrot.slane %v501, 2
      %v1056 = vrot.slane %v502, 2
      %v1057 = vsel %vm1014, %v1055, %v1056
      %v1058 = vrot.slane %v503, 2
      %v1059 = vsel %vm1014, %v1056, %v1058
      %v1060 = vrot.slane %v504, 2
      %v1061 = vrot.slane %v505, 2
      %v1062 = vsel %vm1014, %v1060, %v1061
      %v1063 = vrot.slane %v506, 2
      %v1064 = vsel %vm1014, %v1061, %v1063
      %v1065 = vrot.slane %v507, 2
      %v1066 = vrot.slane %v508, 2
      %v1067 = vsel %vm1014, %v1065, %v1066
      %v1068 = vrot.slane %v509, 2
      %v1069 = vsel %vm1014, %v1066, %v1068
      %v1070 = vrot.slane %v510, 2
      %v1071 = vrot.slane %v511, 2
      %v1072 = vsel %vm1014, %v1070, %v1071
      %v1073 = vrot.slane %v512, 2
      %v1074 = vsel %vm1014, %v1071, %v1073
      %v1075 = vrot.slane %v513, 2
      %v1076 = vrot.slane %v514, 2
      %v1077 = vsel %vm1014, %v1075, %v1076
      %v1078 = vrot.slane %v515, 2
      %v1079 = vsel %vm1014, %v1076, %v1078
      %v1080 = vrot.slane %v516, 2
      %v1081 = vrot.slane %v517, 2
      %v1082 = vsel %vm1014, %v1080, %v1081
      %v1083 = vrot.slane %v518, 2
      %v1084 = vsel %vm1014, %v1081, %v1083
      %v1085 = vrot.slane %v519, 2
      %v1086 = vrot.slane %v520, 2
      %v1087 = vsel %vm1014, %v1085, %v1086
      %v1088 = vrot.slane %v521, 2
      %v1089 = vsel %vm1014, %v1086, %v1088
      %v1090 = vrot.slane %v522, 2
      %v1091 = vrot.slane %v523, 2
      %v1092 = vsel %vm1014, %v1090, %v1091
      %v1093 = vrot.slane %v524, 2
      %v1094 = vsel %vm1014, %v1091, %v1093
      %v1127 = vpack.c.bf16 %v1019, %v1017
      %v1128 = vpack.c.bf16 %v1024, %v1022
      %v1129 = vpack.c.bf16 %v1029, %v1027
      %v1130 = vpack.c.bf16 %v1034, %v1032
      %v1131 = vpack.c.bf16 %v1039, %v1037
      %v1132 = vpack.c.bf16 %v1044, %v1042
      %v1133 = vpack.c.bf16 %v1049, %v1047
      %v1134 = vpack.c.bf16 %v1054, %v1052
      %v1135 = vpack.c.bf16 %v1059, %v1057
      %v1136 = vpack.c.bf16 %v1064, %v1062
      %v1137 = vpack.c.bf16 %v1069, %v1067
      %v1138 = vpack.c.bf16 %v1074, %v1072
      %v1139 = vpack.c.bf16 %v1079, %v1077
      %v1140 = vpack.c.bf16 %v1084, %v1082
      %v1141 = vpack.c.bf16 %v1089, %v1087
      %v1142 = vpack.c.bf16 %v1094, %v1092
      %v1144 = vsel %vm398, %v1127, 0
      %v1147 = vsel %vm398, %v1128, 0
      %v1150 = vsel %vm398, %v1129, 0
      %v1153 = vsel %vm398, %v1130, 0
      %v1156 = vsel %vm398, %v1131, 0
      %v1159 = vsel %vm398, %v1132, 0
      %v1162 = vsel %vm398, %v1133, 0
      %v1165 = vsel %vm398, %v1134, 0
      %v1168 = vsel %vm398, %v1135, 0
      %v1171 = vsel %vm398, %v1136, 0
      %v1174 = vsel %vm398, %v1137, 0
      %v1177 = vsel %vm398, %v1138, 0
      %v1180 = vsel %vm398, %v1139, 0
      %v1183 = vsel %vm398, %v1140, 0
      %v1186 = vsel %vm398, %v1141, 0
      %v1189 = vsel %vm398, %v1142, 0
      %v1192 = vsel %vm781, %v532, 0
      %1194 = vmatpush.bf16.msra.mxu0 0
      %1195 = vmatpush.bf16.msra.mxu0 0
      %1196 = vmatpush.bf16.msra.mxu0 0
      %1197 = vmatpush.bf16.msra.mxu0 0
      %1198 = vmatpush.bf16.msra.mxu0 0
      %1199 = vmatpush.bf16.msra.mxu0 0
      %1200 = vmatpush.bf16.msra.mxu0 0
      %1201 = vmatpush.bf16.msra.mxu0 %v1192
      %1202 = vmatmul.bf16.gmra.mxu0 %v1144
      %v1203 = vpop.f32.mrf.mxu0
      %v1204 = vadd.f32 0.0, %v1203
      %v1205 = vpop.f32.mrf.mxu0
      %v1206 = vadd.f32 0.0, %v1205
      %1207 = vmatmul.bf16.gmra.mxu0 %v1147
      %v1208 = vpop.f32.mrf.mxu0
      %v1209 = vadd.f32 0.0, %v1208
      %v1210 = vpop.f32.mrf.mxu0
      %v1211 = vadd.f32 0.0, %v1210
      %1212 = vmatmul.bf16.gmra.mxu0 %v1150
      %v1213 = vpop.f32.mrf.mxu0
      %v1214 = vadd.f32 0.0, %v1213
      %v1215 = vpop.f32.mrf.mxu0
      %v1216 = vadd.f32 0.0, %v1215
      %1217 = vmatmul.bf16.gmra.mxu0 %v1153
      %v1218 = vpop.f32.mrf.mxu0
      %v1219 = vadd.f32 0.0, %v1218
      %v1220 = vpop.f32.mrf.mxu0
      %v1221 = vadd.f32 0.0, %v1220
      %1222 = vmatmul.bf16.gmra.mxu0 %v1156
      %v1223 = vpop.f32.mrf.mxu0
      %v1224 = vadd.f32 0.0, %v1223
      %v1225 = vpop.f32.mrf.mxu0
      %v1226 = vadd.f32 0.0, %v1225
      %1227 = vmatmul.bf16.gmra.mxu0 %v1159
      %v1228 = vpop.f32.mrf.mxu0
      %v1229 = vadd.f32 0.0, %v1228
      %v1230 = vpop.f32.mrf.mxu0
      %v1231 = vadd.f32 0.0, %v1230
      %1232 = vmatmul.bf16.gmra.mxu0 %v1162
      %v1233 = vpop.f32.mrf.mxu0
      %v1234 = vadd.f32 0.0, %v1233
      %v1235 = vpop.f32.mrf.mxu0
      %v1236 = vadd.f32 0.0, %v1235
      %1237 = vmatmul.bf16.gmra.mxu0 %v1165
      %v1238 = vpop.f32.mrf.mxu0
      %v1239 = vadd.f32 0.0, %v1238
      %v1240 = vpop.f32.mrf.mxu0
      %v1241 = vadd.f32 0.0, %v1240
      %1242 = vmatmul.bf16.gmra.mxu0 %v1168
      %v1243 = vpop.f32.mrf.mxu0
      %v1244 = vadd.f32 0.0, %v1243
      %v1245 = vpop.f32.mrf.mxu0
      %v1246 = vadd.f32 0.0, %v1245
      %1247 = vmatmul.bf16.gmra.mxu0 %v1171
      %v1248 = vpop.f32.mrf.mxu0
      %v1249 = vadd.f32 0.0, %v1248
      %v1250 = vpop.f32.mrf.mxu0
      %v1251 = vadd.f32 0.0, %v1250
      %1252 = vmatmul.bf16.gmra.mxu0 %v1174
      %v1253 = vpop.f32.mrf.mxu0
      %v1254 = vadd.f32 0.0, %v1253
      %v1255 = vpop.f32.mrf.mxu0
      %v1256 = vadd.f32 0.0, %v1255
      %1257 = vmatmul.bf16.gmra.mxu0 %v1177
      %v1258 = vpop.f32.mrf.mxu0
      %v1259 = vadd.f32 0.0, %v1258
      %v1260 = vpop.f32.mrf.mxu0
      %v1261 = vadd.f32 0.0, %v1260
      %1262 = vmatmul.bf16.gmra.mxu0 %v1180
      %v1263 = vpop.f32.mrf.mxu0
      %v1264 = vadd.f32 0.0, %v1263
      %v1265 = vpop.f32.mrf.mxu0
      %v1266 = vadd.f32 0.0, %v1265
      %1267 = vmatmul.bf16.gmra.mxu0 %v1183
      %v1268 = vpop.f32.mrf.mxu0
      %v1269 = vadd.f32 0.0, %v1268
      %v1270 = vpop.f32.mrf.mxu0
      %v1271 = vadd.f32 0.0, %v1270
      %1272 = vmatmul.bf16.gmra.mxu0 %v1186
      %v1273 = vpop.f32.mrf.mxu0
      %v1274 = vadd.f32 0.0, %v1273
      %v1275 = vpop.f32.mrf.mxu0
      %v1276 = vadd.f32 0.0, %v1275
      %1277 = vmatmul.bf16.gmra.mxu0 %v1189
      %v1278 = vpop.f32.mrf.mxu0
      %v1279 = vadd.f32 0.0, %v1278
      %v1280 = vpop.f32.mrf.mxu0
      %v1281 = vadd.f32 0.0, %v1280
      %1282 = vdwg.mxu0
      %v1283 = vadd.f32 %v935, %v1204
      %v1284 = vadd.f32 %v937, %v1206
      %v1285 = vadd.f32 %v940, %v1209
      %v1286 = vadd.f32 %v942, %v1211
      %v1287 = vadd.f32 %v945, %v1214
      %v1288 = vadd.f32 %v947, %v1216
      %v1289 = vadd.f32 %v950, %v1219
      %v1290 = vadd.f32 %v952, %v1221
      %v1291 = vadd.f32 %v955, %v1224
      %v1292 = vadd.f32 %v957, %v1226
      %v1293 = vadd.f32 %v960, %v1229
      %v1294 = vadd.f32 %v962, %v1231
      %v1295 = vadd.f32 %v965, %v1234
      %v1296 = vadd.f32 %v967, %v1236
      %v1297 = vadd.f32 %v970, %v1239
      %v1298 = vadd.f32 %v972, %v1241
      %v1299 = vadd.f32 %v975, %v1244
      %v1300 = vadd.f32 %v977, %v1246
      %v1301 = vadd.f32 %v980, %v1249
      %v1302 = vadd.f32 %v982, %v1251
      %v1303 = vadd.f32 %v985, %v1254
      %v1304 = vadd.f32 %v987, %v1256
      %v1305 = vadd.f32 %v990, %v1259
      %v1306 = vadd.f32 %v992, %v1261
      %v1307 = vadd.f32 %v995, %v1264
      %v1308 = vadd.f32 %v997, %v1266
      %v1309 = vadd.f32 %v1000, %v1269
      %v1310 = vadd.f32 %v1002, %v1271
      %v1311 = vadd.f32 %v1005, %v1274
      %v1312 = vadd.f32 %v1007, %v1276
      %v1313 = vadd.f32 %v1010, %v1279
      %v1314 = vadd.f32 %v1012, %v1281
      %v1315 = vpack.c.bf16 %v526, %v525
      %v1317 = vunpack.c.l.b16 %v532
      %v1318 = vpack.c.b16 %v1317, %v1317
      %v1319 = vrot.slane %v1318, 2
      %v1321 = vsel %vm398, %v1315, 0
      %v1324 = vsel %vm781, %v1319, 0
      %1326 = vmatpush.bf16.msra.mxu0 0
      %1327 = vmatpush.bf16.msra.mxu0 0
      %1328 = vmatpush.bf16.msra.mxu0 0
      %1329 = vmatpush.bf16.msra.mxu0 0
      %1330 = vmatpush.bf16.msra.mxu0 0
      %1331 = vmatpush.bf16.msra.mxu0 0
      %1332 = vmatpush.bf16.msra.mxu0 0
      %1333 = vmatpush.bf16.msra.mxu0 %v1324
      %1334 = vmatmul.bf16.gmra.mxu0 %v878
      %v1335 = vpop.f32.mrf.mxu0
      %v1336 = vadd.f32 0.0, %v1335
      %v1337 = vpop.f32.mrf.mxu0
      %v1338 = vadd.f32 0.0, %v1337
      %1339 = vmatmul.bf16.gmra.mxu0 %v881
      %v1340 = vpop.f32.mrf.mxu0
      %v1341 = vadd.f32 0.0, %v1340
      %v1342 = vpop.f32.mrf.mxu0
      %v1343 = vadd.f32 0.0, %v1342
      %1344 = vmatmul.bf16.gmra.mxu0 %v884
      %v1345 = vpop.f32.mrf.mxu0
      %v1346 = vadd.f32 0.0, %v1345
      %v1347 = vpop.f32.mrf.mxu0
      %v1348 = vadd.f32 0.0, %v1347
      %1349 = vmatmul.bf16.gmra.mxu0 %v887
      %v1350 = vpop.f32.mrf.mxu0
      %v1351 = vadd.f32 0.0, %v1350
      %v1352 = vpop.f32.mrf.mxu0
      %v1353 = vadd.f32 0.0, %v1352
      %1354 = vmatmul.bf16.gmra.mxu0 %v890
      %v1355 = vpop.f32.mrf.mxu0
      %v1356 = vadd.f32 0.0, %v1355
      %v1357 = vpop.f32.mrf.mxu0
      %v1358 = vadd.f32 0.0, %v1357
      %1359 = vmatmul.bf16.gmra.mxu0 %v893
      %v1360 = vpop.f32.mrf.mxu0
      %v1361 = vadd.f32 0.0, %v1360
      %v1362 = vpop.f32.mrf.mxu0
      %v1363 = vadd.f32 0.0, %v1362
      %1364 = vmatmul.bf16.gmra.mxu0 %v896
      %v1365 = vpop.f32.mrf.mxu0
      %v1366 = vadd.f32 0.0, %v1365
      %v1367 = vpop.f32.mrf.mxu0
      %v1368 = vadd.f32 0.0, %v1367
      %1369 = vmatmul.bf16.gmra.mxu0 %v899
      %v1370 = vpop.f32.mrf.mxu0
      %v1371 = vadd.f32 0.0, %v1370
      %v1372 = vpop.f32.mrf.mxu0
      %v1373 = vadd.f32 0.0, %v1372
      %1374 = vmatmul.bf16.gmra.mxu0 %v902
      %v1375 = vpop.f32.mrf.mxu0
      %v1376 = vadd.f32 0.0, %v1375
      %v1377 = vpop.f32.mrf.mxu0
      %v1378 = vadd.f32 0.0, %v1377
      %1379 = vmatmul.bf16.gmra.mxu0 %v905
      %v1380 = vpop.f32.mrf.mxu0
      %v1381 = vadd.f32 0.0, %v1380
      %v1382 = vpop.f32.mrf.mxu0
      %v1383 = vadd.f32 0.0, %v1382
      %1384 = vmatmul.bf16.gmra.mxu0 %v908
      %v1385 = vpop.f32.mrf.mxu0
      %v1386 = vadd.f32 0.0, %v1385
      %v1387 = vpop.f32.mrf.mxu0
      %v1388 = vadd.f32 0.0, %v1387
      %1389 = vmatmul.bf16.gmra.mxu0 %v911
      %v1390 = vpop.f32.mrf.mxu0
      %v1391 = vadd.f32 0.0, %v1390
      %v1392 = vpop.f32.mrf.mxu0
      %v1393 = vadd.f32 0.0, %v1392
      %1394 = vmatmul.bf16.gmra.mxu0 %v914
      %v1395 = vpop.f32.mrf.mxu0
      %v1396 = vadd.f32 0.0, %v1395
      %v1397 = vpop.f32.mrf.mxu0
      %v1398 = vadd.f32 0.0, %v1397
      %1399 = vmatmul.bf16.gmra.mxu0 %v917
      %v1400 = vpop.f32.mrf.mxu0
      %v1401 = vadd.f32 0.0, %v1400
      %v1402 = vpop.f32.mrf.mxu0
      %v1403 = vadd.f32 0.0, %v1402
      %1404 = vmatmul.bf16.gmra.mxu0 %v920
      %v1405 = vpop.f32.mrf.mxu0
      %v1406 = vadd.f32 0.0, %v1405
      %v1407 = vpop.f32.mrf.mxu0
      %v1408 = vadd.f32 0.0, %v1407
      %1409 = vmatmul.bf16.gmra.mxu0 %v1321
      %v1410 = vpop.f32.mrf.mxu0
      %v1411 = vadd.f32 0.0, %v1410
      %v1412 = vpop.f32.mrf.mxu0
      %v1413 = vadd.f32 0.0, %v1412
      %1414 = vdwg.mxu0
      %v1415 = vadd.f32 %v1283, %v1336
      %v1416 = vadd.f32 %v1284, %v1338
      %v1417 = vadd.f32 %v1285, %v1341
      %v1418 = vadd.f32 %v1286, %v1343
      %v1419 = vadd.f32 %v1287, %v1346
      %v1420 = vadd.f32 %v1288, %v1348
      %v1421 = vadd.f32 %v1289, %v1351
      %v1422 = vadd.f32 %v1290, %v1353
      %v1423 = vadd.f32 %v1291, %v1356
      %v1424 = vadd.f32 %v1292, %v1358
      %v1425 = vadd.f32 %v1293, %v1361
      %v1426 = vadd.f32 %v1294, %v1363
      %v1427 = vadd.f32 %v1295, %v1366
      %v1428 = vadd.f32 %v1296, %v1368
      %v1429 = vadd.f32 %v1297, %v1371
      %v1430 = vadd.f32 %v1298, %v1373
      %v1431 = vadd.f32 %v1299, %v1376
      %v1432 = vadd.f32 %v1300, %v1378
      %v1433 = vadd.f32 %v1301, %v1381
      %v1434 = vadd.f32 %v1302, %v1383
      %v1435 = vadd.f32 %v1303, %v1386
      %v1436 = vadd.f32 %v1304, %v1388
      %v1437 = vadd.f32 %v1305, %v1391
      %v1438 = vadd.f32 %v1306, %v1393
      %v1439 = vadd.f32 %v1307, %v1396
      %v1440 = vadd.f32 %v1308, %v1398
      %v1441 = vadd.f32 %v1309, %v1401
      %v1442 = vadd.f32 %v1310, %v1403
      %v1443 = vadd.f32 %v1311, %v1406
      %v1444 = vadd.f32 %v1312, %v1408
      %v1445 = vadd.f32 %v1313, %v1411
      %v1446 = vadd.f32 %v1314, %v1413
      %v1450 = vrot.slane %v525, 1
      %v1451 = vrot.slane %v526, 1
      %v1452 = vsel %vm600, %v1450, %v1451
      %v1453 = vrot.slane %v527, 1
      %v1454 = vsel %vm600, %v1451, %v1453
      %v1457 = vpack.c.bf16 %v1454, %v1452
      %v1459 = vsel %vm398, %v1457, 0
      %v1462 = vsel %vm781, %v533, 0
      %1464 = vmatpush.bf16.msra.mxu0 0
      %1465 = vmatpush.bf16.msra.mxu0 0
      %1466 = vmatpush.bf16.msra.mxu0 0
      %1467 = vmatpush.bf16.msra.mxu0 0
      %1468 = vmatpush.bf16.msra.mxu0 0
      %1469 = vmatpush.bf16.msra.mxu0 0
      %1470 = vmatpush.bf16.msra.mxu0 0
      %1471 = vmatpush.bf16.msra.mxu0 %v1462
      %1472 = vmatmul.bf16.gmra.mxu0 %v737
      %v1473 = vpop.f32.mrf.mxu0
      %v1474 = vadd.f32 0.0, %v1473
      %v1475 = vpop.f32.mrf.mxu0
      %v1476 = vadd.f32 0.0, %v1475
      %1477 = vmatmul.bf16.gmra.mxu0 %v740
      %v1478 = vpop.f32.mrf.mxu0
      %v1479 = vadd.f32 0.0, %v1478
      %v1480 = vpop.f32.mrf.mxu0
      %v1481 = vadd.f32 0.0, %v1480
      %1482 = vmatmul.bf16.gmra.mxu0 %v743
      %v1483 = vpop.f32.mrf.mxu0
      %v1484 = vadd.f32 0.0, %v1483
      %v1485 = vpop.f32.mrf.mxu0
      %v1486 = vadd.f32 0.0, %v1485
      %1487 = vmatmul.bf16.gmra.mxu0 %v746
      %v1488 = vpop.f32.mrf.mxu0
      %v1489 = vadd.f32 0.0, %v1488
      %v1490 = vpop.f32.mrf.mxu0
      %v1491 = vadd.f32 0.0, %v1490
      %1492 = vmatmul.bf16.gmra.mxu0 %v749
      %v1493 = vpop.f32.mrf.mxu0
      %v1494 = vadd.f32 0.0, %v1493
      %v1495 = vpop.f32.mrf.mxu0
      %v1496 = vadd.f32 0.0, %v1495
      %1497 = vmatmul.bf16.gmra.mxu0 %v752
      %v1498 = vpop.f32.mrf.mxu0
      %v1499 = vadd.f32 0.0, %v1498
      %v1500 = vpop.f32.mrf.mxu0
      %v1501 = vadd.f32 0.0, %v1500
      %1502 = vmatmul.bf16.gmra.mxu0 %v755
      %v1503 = vpop.f32.mrf.mxu0
      %v1504 = vadd.f32 0.0, %v1503
      %v1505 = vpop.f32.mrf.mxu0
      %v1506 = vadd.f32 0.0, %v1505
      %1507 = vmatmul.bf16.gmra.mxu0 %v758
      %v1508 = vpop.f32.mrf.mxu0
      %v1509 = vadd.f32 0.0, %v1508
      %v1510 = vpop.f32.mrf.mxu0
      %v1511 = vadd.f32 0.0, %v1510
      %1512 = vmatmul.bf16.gmra.mxu0 %v761
      %v1513 = vpop.f32.mrf.mxu0
      %v1514 = vadd.f32 0.0, %v1513
      %v1515 = vpop.f32.mrf.mxu0
      %v1516 = vadd.f32 0.0, %v1515
      %1517 = vmatmul.bf16.gmra.mxu0 %v764
      %v1518 = vpop.f32.mrf.mxu0
      %v1519 = vadd.f32 0.0, %v1518
      %v1520 = vpop.f32.mrf.mxu0
      %v1521 = vadd.f32 0.0, %v1520
      %1522 = vmatmul.bf16.gmra.mxu0 %v767
      %v1523 = vpop.f32.mrf.mxu0
      %v1524 = vadd.f32 0.0, %v1523
      %v1525 = vpop.f32.mrf.mxu0
      %v1526 = vadd.f32 0.0, %v1525
      %1527 = vmatmul.bf16.gmra.mxu0 %v770
      %v1528 = vpop.f32.mrf.mxu0
      %v1529 = vadd.f32 0.0, %v1528
      %v1530 = vpop.f32.mrf.mxu0
      %v1531 = vadd.f32 0.0, %v1530
      %1532 = vmatmul.bf16.gmra.mxu0 %v773
      %v1533 = vpop.f32.mrf.mxu0
      %v1534 = vadd.f32 0.0, %v1533
      %v1535 = vpop.f32.mrf.mxu0
      %v1536 = vadd.f32 0.0, %v1535
      %1537 = vmatmul.bf16.gmra.mxu0 %v776
      %v1538 = vpop.f32.mrf.mxu0
      %v1539 = vadd.f32 0.0, %v1538
      %v1540 = vpop.f32.mrf.mxu0
      %v1541 = vadd.f32 0.0, %v1540
      %1542 = vmatmul.bf16.gmra.mxu0 %v779
      %v1543 = vpop.f32.mrf.mxu0
      %v1544 = vadd.f32 0.0, %v1543
      %v1545 = vpop.f32.mrf.mxu0
      %v1546 = vadd.f32 0.0, %v1545
      %1547 = vmatmul.bf16.gmra.mxu0 %v1459
      %v1548 = vpop.f32.mrf.mxu0
      %v1549 = vadd.f32 0.0, %v1548
      %v1550 = vpop.f32.mrf.mxu0
      %v1551 = vadd.f32 0.0, %v1550
      %1552 = vdwg.mxu0
      %v1553 = vadd.f32 %v1415, %v1474
      %v1554 = vadd.f32 %v1416, %v1476
      %v1555 = vadd.f32 %v1417, %v1479
      %v1556 = vadd.f32 %v1418, %v1481
      %v1557 = vadd.f32 %v1419, %v1484
      %v1558 = vadd.f32 %v1420, %v1486
      %v1559 = vadd.f32 %v1421, %v1489
      %v1560 = vadd.f32 %v1422, %v1491
      %v1561 = vadd.f32 %v1423, %v1494
      %v1562 = vadd.f32 %v1424, %v1496
      %v1563 = vadd.f32 %v1425, %v1499
      %v1564 = vadd.f32 %v1426, %v1501
      %v1565 = vadd.f32 %v1427, %v1504
      %v1566 = vadd.f32 %v1428, %v1506
      %v1567 = vadd.f32 %v1429, %v1509
      %v1568 = vadd.f32 %v1430, %v1511
      %v1569 = vadd.f32 %v1431, %v1514
      %v1570 = vadd.f32 %v1432, %v1516
      %v1571 = vadd.f32 %v1433, %v1519
      %v1572 = vadd.f32 %v1434, %v1521
      %v1573 = vadd.f32 %v1435, %v1524
      %v1574 = vadd.f32 %v1436, %v1526
      %v1575 = vadd.f32 %v1437, %v1529
      %v1576 = vadd.f32 %v1438, %v1531
      %v1577 = vadd.f32 %v1439, %v1534
      %v1578 = vadd.f32 %v1440, %v1536
      %v1579 = vadd.f32 %v1441, %v1539
      %v1580 = vadd.f32 %v1442, %v1541
      %v1581 = vadd.f32 %v1443, %v1544
      %v1582 = vadd.f32 %v1444, %v1546
      %v1583 = vadd.f32 %v1445, %v1549
      %v1584 = vadd.f32 %v1446, %v1551
      %v1585 = vrot.slane %v525, 2
      %v1586 = vrot.slane %v526, 2
      %v1587 = vsel %vm1014, %v1585, %v1586
      %v1588 = vrot.slane %v527, 2
      %v1589 = vsel %vm1014, %v1586, %v1588
      %v1592 = vpack.c.bf16 %v1589, %v1587
      %v1594 = vunpack.c.l.b16 %v533
      %v1595 = vpack.c.b16 %v1594, %v1594
      %v1596 = vrot.slane %v1595, 2
      %v1598 = vsel %vm398, %v1592, 0
      %v1601 = vsel %vm781, %v1596, 0
      %1603 = vmatpush.bf16.msra.mxu0 0
      %1604 = vmatpush.bf16.msra.mxu0 0
      %1605 = vmatpush.bf16.msra.mxu0 0
      %1606 = vmatpush.bf16.msra.mxu0 0
      %1607 = vmatpush.bf16.msra.mxu0 0
      %1608 = vmatpush.bf16.msra.mxu0 0
      %1609 = vmatpush.bf16.msra.mxu0 0
      %1610 = vmatpush.bf16.msra.mxu0 %v1601
      %1611 = vmatmul.bf16.gmra.mxu0 %v1147
      %v1612 = vpop.f32.mrf.mxu0
      %v1613 = vadd.f32 0.0, %v1612
      %v1614 = vpop.f32.mrf.mxu0
      %v1615 = vadd.f32 0.0, %v1614
      %1616 = vmatmul.bf16.gmra.mxu0 %v1150
      %v1617 = vpop.f32.mrf.mxu0
      %v1618 = vadd.f32 0.0, %v1617
      %v1619 = vpop.f32.mrf.mxu0
      %v1620 = vadd.f32 0.0, %v1619
      %1621 = vmatmul.bf16.gmra.mxu0 %v1153
      %v1622 = vpop.f32.mrf.mxu0
      %v1623 = vadd.f32 0.0, %v1622
      %v1624 = vpop.f32.mrf.mxu0
      %v1625 = vadd.f32 0.0, %v1624
      %1626 = vmatmul.bf16.gmra.mxu0 %v1156
      %v1627 = vpop.f32.mrf.mxu0
      %v1628 = vadd.f32 0.0, %v1627
      %v1629 = vpop.f32.mrf.mxu0
      %v1630 = vadd.f32 0.0, %v1629
      %1631 = vmatmul.bf16.gmra.mxu0 %v1159
      %v1632 = vpop.f32.mrf.mxu0
      %v1633 = vadd.f32 0.0, %v1632
      %v1634 = vpop.f32.mrf.mxu0
      %v1635 = vadd.f32 0.0, %v1634
      %1636 = vmatmul.bf16.gmra.mxu0 %v1162
      %v1637 = vpop.f32.mrf.mxu0
      %v1638 = vadd.f32 0.0, %v1637
      %v1639 = vpop.f32.mrf.mxu0
      %v1640 = vadd.f32 0.0, %v1639
      %1641 = vmatmul.bf16.gmra.mxu0 %v1165
      %v1642 = vpop.f32.mrf.mxu0
      %v1643 = vadd.f32 0.0, %v1642
      %v1644 = vpop.f32.mrf.mxu0
      %v1645 = vadd.f32 0.0, %v1644
      %1646 = vmatmul.bf16.gmra.mxu0 %v1168
      %v1647 = vpop.f32.mrf.mxu0
      %v1648 = vadd.f32 0.0, %v1647
      %v1649 = vpop.f32.mrf.mxu0
      %v1650 = vadd.f32 0.0, %v1649
      %1651 = vmatmul.bf16.gmra.mxu0 %v1171
      %v1652 = vpop.f32.mrf.mxu0
      %v1653 = vadd.f32 0.0, %v1652
      %v1654 = vpop.f32.mrf.mxu0
      %v1655 = vadd.f32 0.0, %v1654
      %1656 = vmatmul.bf16.gmra.mxu0 %v1174
      %v1657 = vpop.f32.mrf.mxu0
      %v1658 = vadd.f32 0.0, %v1657
      %v1659 = vpop.f32.mrf.mxu0
      %v1660 = vadd.f32 0.0, %v1659
      %1661 = vmatmul.bf16.gmra.mxu0 %v1177
      %v1662 = vpop.f32.mrf.mxu0
      %v1663 = vadd.f32 0.0, %v1662
      %v1664 = vpop.f32.mrf.mxu0
      %v1665 = vadd.f32 0.0, %v1664
      %1666 = vmatmul.bf16.gmra.mxu0 %v1180
      %v1667 = vpop.f32.mrf.mxu0
      %v1668 = vadd.f32 0.0, %v1667
      %v1669 = vpop.f32.mrf.mxu0
      %v1670 = vadd.f32 0.0, %v1669
      %1671 = vmatmul.bf16.gmra.mxu0 %v1183
      %v1672 = vpop.f32.mrf.mxu0
      %v1673 = vadd.f32 0.0, %v1672
      %v1674 = vpop.f32.mrf.mxu0
      %v1675 = vadd.f32 0.0, %v1674
      %1676 = vmatmul.bf16.gmra.mxu0 %v1186
      %v1677 = vpop.f32.mrf.mxu0
      %v1678 = vadd.f32 0.0, %v1677
      %v1679 = vpop.f32.mrf.mxu0
      %v1680 = vadd.f32 0.0, %v1679
      %1681 = vmatmul.bf16.gmra.mxu0 %v1189
      %v1682 = vpop.f32.mrf.mxu0
      %v1683 = vadd.f32 0.0, %v1682
      %v1684 = vpop.f32.mrf.mxu0
      %v1685 = vadd.f32 0.0, %v1684
      %1686 = vmatmul.bf16.gmra.mxu0 %v1598
      %v1687 = vpop.f32.mrf.mxu0
      %v1688 = vadd.f32 0.0, %v1687
      %v1689 = vpop.f32.mrf.mxu0
      %v1690 = vadd.f32 0.0, %v1689
      %1691 = vdwg.mxu0
      %v1692 = vadd.f32 %v1553, %v1613
      %v1693 = vadd.f32 %v1554, %v1615
      %v1694 = vadd.f32 %v1555, %v1618
      %v1695 = vadd.f32 %v1556, %v1620
      %v1696 = vadd.f32 %v1557, %v1623
      %v1697 = vadd.f32 %v1558, %v1625
      %v1698 = vadd.f32 %v1559, %v1628
      %v1699 = vadd.f32 %v1560, %v1630
      %v1700 = vadd.f32 %v1561, %v1633
      %v1701 = vadd.f32 %v1562, %v1635
      %v1702 = vadd.f32 %v1563, %v1638
      %v1703 = vadd.f32 %v1564, %v1640
      %v1704 = vadd.f32 %v1565, %v1643
      %v1705 = vadd.f32 %v1566, %v1645
      %v1706 = vadd.f32 %v1567, %v1648
      %v1707 = vadd.f32 %v1568, %v1650
      %v1708 = vadd.f32 %v1569, %v1653
      %v1709 = vadd.f32 %v1570, %v1655
      %v1710 = vadd.f32 %v1571, %v1658
      %v1711 = vadd.f32 %v1572, %v1660
      %v1712 = vadd.f32 %v1573, %v1663
      %v1713 = vadd.f32 %v1574, %v1665
      %v1714 = vadd.f32 %v1575, %v1668
      %v1715 = vadd.f32 %v1576, %v1670
      %v1716 = vadd.f32 %v1577, %v1673
      %v1717 = vadd.f32 %v1578, %v1675
      %v1718 = vadd.f32 %v1579, %v1678
      %v1719 = vadd.f32 %v1580, %v1680
      %v1720 = vadd.f32 %v1581, %v1683
      %v1721 = vadd.f32 %v1582, %v1685
      %v1722 = vadd.f32 %v1583, %v1688
      %v1723 = vadd.f32 %v1584, %v1690
      %v1724 = vpack.c.bf16 %v529, %v528
      %v1726 = vsel %vm398, %v1724, 0
      %v1729 = vsel %vm781, %v534, 0
      %1731 = vmatpush.bf16.msra.mxu0 0
      %1732 = vmatpush.bf16.msra.mxu0 0
      %1733 = vmatpush.bf16.msra.mxu0 0
      %1734 = vmatpush.bf16.msra.mxu0 0
      %1735 = vmatpush.bf16.msra.mxu0 0
      %1736 = vmatpush.bf16.msra.mxu0 0
      %1737 = vmatpush.bf16.msra.mxu0 0
      %1738 = vmatpush.bf16.msra.mxu0 %v1729
      %1739 = vmatmul.bf16.gmra.mxu0 %v881
      %v1740 = vpop.f32.mrf.mxu0
      %v1741 = vadd.f32 0.0, %v1740
      %v1742 = vpop.f32.mrf.mxu0
      %v1743 = vadd.f32 0.0, %v1742
      %1744 = vmatmul.bf16.gmra.mxu0 %v884
      %v1745 = vpop.f32.mrf.mxu0
      %v1746 = vadd.f32 0.0, %v1745
      %v1747 = vpop.f32.mrf.mxu0
      %v1748 = vadd.f32 0.0, %v1747
      %1749 = vmatmul.bf16.gmra.mxu0 %v887
      %v1750 = vpop.f32.mrf.mxu0
      %v1751 = vadd.f32 0.0, %v1750
      %v1752 = vpop.f32.mrf.mxu0
      %v1753 = vadd.f32 0.0, %v1752
      %1754 = vmatmul.bf16.gmra.mxu0 %v890
      %v1755 = vpop.f32.mrf.mxu0
      %v1756 = vadd.f32 0.0, %v1755
      %v1757 = vpop.f32.mrf.mxu0
      %v1758 = vadd.f32 0.0, %v1757
      %1759 = vmatmul.bf16.gmra.mxu0 %v893
      %v1760 = vpop.f32.mrf.mxu0
      %v1761 = vadd.f32 0.0, %v1760
      %v1762 = vpop.f32.mrf.mxu0
      %v1763 = vadd.f32 0.0, %v1762
      %1764 = vmatmul.bf16.gmra.mxu0 %v896
      %v1765 = vpop.f32.mrf.mxu0
      %v1766 = vadd.f32 0.0, %v1765
      %v1767 = vpop.f32.mrf.mxu0
      %v1768 = vadd.f32 0.0, %v1767
      %1769 = vmatmul.bf16.gmra.mxu0 %v899
      %v1770 = vpop.f32.mrf.mxu0
      %v1771 = vadd.f32 0.0, %v1770
      %v1772 = vpop.f32.mrf.mxu0
      %v1773 = vadd.f32 0.0, %v1772
      %1774 = vmatmul.bf16.gmra.mxu0 %v902
      %v1775 = vpop.f32.mrf.mxu0
      %v1776 = vadd.f32 0.0, %v1775
      %v1777 = vpop.f32.mrf.mxu0
      %v1778 = vadd.f32 0.0, %v1777
      %1779 = vmatmul.bf16.gmra.mxu0 %v905
      %v1780 = vpop.f32.mrf.mxu0
      %v1781 = vadd.f32 0.0, %v1780
      %v1782 = vpop.f32.mrf.mxu0
      %v1783 = vadd.f32 0.0, %v1782
      %1784 = vmatmul.bf16.gmra.mxu0 %v908
      %v1785 = vpop.f32.mrf.mxu0
      %v1786 = vadd.f32 0.0, %v1785
      %v1787 = vpop.f32.mrf.mxu0
      %v1788 = vadd.f32 0.0, %v1787
      %1789 = vmatmul.bf16.gmra.mxu0 %v911
      %v1790 = vpop.f32.mrf.mxu0
      %v1791 = vadd.f32 0.0, %v1790
      %v1792 = vpop.f32.mrf.mxu0
      %v1793 = vadd.f32 0.0, %v1792
      %1794 = vmatmul.bf16.gmra.mxu0 %v914
      %v1795 = vpop.f32.mrf.mxu0
      %v1796 = vadd.f32 0.0, %v1795
      %v1797 = vpop.f32.mrf.mxu0
      %v1798 = vadd.f32 0.0, %v1797
      %1799 = vmatmul.bf16.gmra.mxu0 %v917
      %v1800 = vpop.f32.mrf.mxu0
      %v1801 = vadd.f32 0.0, %v1800
      %v1802 = vpop.f32.mrf.mxu0
      %v1803 = vadd.f32 0.0, %v1802
      %1804 = vmatmul.bf16.gmra.mxu0 %v920
      %v1805 = vpop.f32.mrf.mxu0
      %v1806 = vadd.f32 0.0, %v1805
      %v1807 = vpop.f32.mrf.mxu0
      %v1808 = vadd.f32 0.0, %v1807
      %1809 = vmatmul.bf16.gmra.mxu0 %v1321
      %v1810 = vpop.f32.mrf.mxu0
      %v1811 = vadd.f32 0.0, %v1810
      %v1812 = vpop.f32.mrf.mxu0
      %v1813 = vadd.f32 0.0, %v1812
      %1814 = vmatmul.bf16.gmra.mxu0 %v1726
      %v1815 = vpop.f32.mrf.mxu0
      %v1816 = vadd.f32 0.0, %v1815
      %v1817 = vpop.f32.mrf.mxu0
      %v1818 = vadd.f32 0.0, %v1817
      %1819 = vdwg.mxu0
      %v1820 = vadd.f32 %v1692, %v1741
      %v1821 = vadd.f32 %v1693, %v1743
      %v1822 = vadd.f32 %v1694, %v1746
      %v1823 = vadd.f32 %v1695, %v1748
      %v1824 = vadd.f32 %v1696, %v1751
      %v1825 = vadd.f32 %v1697, %v1753
      %v1826 = vadd.f32 %v1698, %v1756
      %v1827 = vadd.f32 %v1699, %v1758
      %v1828 = vadd.f32 %v1700, %v1761
      %v1829 = vadd.f32 %v1701, %v1763
      %v1830 = vadd.f32 %v1702, %v1766
      %v1831 = vadd.f32 %v1703, %v1768
      %v1832 = vadd.f32 %v1704, %v1771
      %v1833 = vadd.f32 %v1705, %v1773
      %v1834 = vadd.f32 %v1706, %v1776
      %v1835 = vadd.f32 %v1707, %v1778
      %v1836 = vadd.f32 %v1708, %v1781
      %v1837 = vadd.f32 %v1709, %v1783
      %v1838 = vadd.f32 %v1710, %v1786
      %v1839 = vadd.f32 %v1711, %v1788
      %v1840 = vadd.f32 %v1712, %v1791
      %v1841 = vadd.f32 %v1713, %v1793
      %v1842 = vadd.f32 %v1714, %v1796
      %v1843 = vadd.f32 %v1715, %v1798
      %v1844 = vadd.f32 %v1716, %v1801
      %v1845 = vadd.f32 %v1717, %v1803
      %v1846 = vadd.f32 %v1718, %v1806
      %v1847 = vadd.f32 %v1719, %v1808
      %v1848 = vadd.f32 %v1720, %v1811
      %v1849 = vadd.f32 %v1721, %v1813
      %v1850 = vadd.f32 %v1722, %v1816
      %v1851 = vadd.f32 %v1723, %v1818
      %v1855 = vrot.slane %v528, 1
      %v1856 = vrot.slane %v529, 1
      %v1857 = vsel %vm600, %v1855, %v1856
      %v1858 = vrot.slane %v530, 1
      %v1859 = vsel %vm600, %v1856, %v1858
      %v1862 = vpack.c.bf16 %v1859, %v1857
      %v1864 = vunpack.c.l.b16 %v534
      %v1865 = vpack.c.b16 %v1864, %v1864
      %v1866 = vrot.slane %v1865, 2
      %v1868 = vsel %vm398, %v1862, 0
      %v1871 = vsel %vm781, %v1866, 0
      %1873 = vmatpush.bf16.msra.mxu0 0
      %1874 = vmatpush.bf16.msra.mxu0 0
      %1875 = vmatpush.bf16.msra.mxu0 0
      %1876 = vmatpush.bf16.msra.mxu0 0
      %1877 = vmatpush.bf16.msra.mxu0 0
      %1878 = vmatpush.bf16.msra.mxu0 0
      %1879 = vmatpush.bf16.msra.mxu0 0
      %1880 = vmatpush.bf16.msra.mxu0 %v1871
      %1881 = vmatmul.bf16.gmra.mxu0 %v740
      %v1882 = vpop.f32.mrf.mxu0
      %v1883 = vadd.f32 0.0, %v1882
      %v1884 = vpop.f32.mrf.mxu0
      %v1885 = vadd.f32 0.0, %v1884
      %1886 = vmatmul.bf16.gmra.mxu0 %v743
      %v1887 = vpop.f32.mrf.mxu0
      %v1888 = vadd.f32 0.0, %v1887
      %v1889 = vpop.f32.mrf.mxu0
      %v1890 = vadd.f32 0.0, %v1889
      %1891 = vmatmul.bf16.gmra.mxu0 %v746
      %v1892 = vpop.f32.mrf.mxu0
      %v1893 = vadd.f32 0.0, %v1892
      %v1894 = vpop.f32.mrf.mxu0
      %v1895 = vadd.f32 0.0, %v1894
      %1896 = vmatmul.bf16.gmra.mxu0 %v749
      %v1897 = vpop.f32.mrf.mxu0
      %v1898 = vadd.f32 0.0, %v1897
      %v1899 = vpop.f32.mrf.mxu0
      %v1900 = vadd.f32 0.0, %v1899
      %1901 = vmatmul.bf16.gmra.mxu0 %v752
      %v1902 = vpop.f32.mrf.mxu0
      %v1903 = vadd.f32 0.0, %v1902
      %v1904 = vpop.f32.mrf.mxu0
      %v1905 = vadd.f32 0.0, %v1904
      %1906 = vmatmul.bf16.gmra.mxu0 %v755
      %v1907 = vpop.f32.mrf.mxu0
      %v1908 = vadd.f32 0.0, %v1907
      %v1909 = vpop.f32.mrf.mxu0
      %v1910 = vadd.f32 0.0, %v1909
      %1911 = vmatmul.bf16.gmra.mxu0 %v758
      %v1912 = vpop.f32.mrf.mxu0
      %v1913 = vadd.f32 0.0, %v1912
      %v1914 = vpop.f32.mrf.mxu0
      %v1915 = vadd.f32 0.0, %v1914
      %1916 = vmatmul.bf16.gmra.mxu0 %v761
      %v1917 = vpop.f32.mrf.mxu0
      %v1918 = vadd.f32 0.0, %v1917
      %v1919 = vpop.f32.mrf.mxu0
      %v1920 = vadd.f32 0.0, %v1919
      %1921 = vmatmul.bf16.gmra.mxu0 %v764
      %v1922 = vpop.f32.mrf.mxu0
      %v1923 = vadd.f32 0.0, %v1922
      %v1924 = vpop.f32.mrf.mxu0
      %v1925 = vadd.f32 0.0, %v1924
      %1926 = vmatmul.bf16.gmra.mxu0 %v767
      %v1927 = vpop.f32.mrf.mxu0
      %v1928 = vadd.f32 0.0, %v1927
      %v1929 = vpop.f32.mrf.mxu0
      %v1930 = vadd.f32 0.0, %v1929
      %1931 = vmatmul.bf16.gmra.mxu0 %v770
      %v1932 = vpop.f32.mrf.mxu0
      %v1933 = vadd.f32 0.0, %v1932
      %v1934 = vpop.f32.mrf.mxu0
      %v1935 = vadd.f32 0.0, %v1934
      %1936 = vmatmul.bf16.gmra.mxu0 %v773
      %v1937 = vpop.f32.mrf.mxu0
      %v1938 = vadd.f32 0.0, %v1937
      %v1939 = vpop.f32.mrf.mxu0
      %v1940 = vadd.f32 0.0, %v1939
      %1941 = vmatmul.bf16.gmra.mxu0 %v776
      %v1942 = vpop.f32.mrf.mxu0
      %v1943 = vadd.f32 0.0, %v1942
      %v1944 = vpop.f32.mrf.mxu0
      %v1945 = vadd.f32 0.0, %v1944
      %1946 = vmatmul.bf16.gmra.mxu0 %v779
      %v1947 = vpop.f32.mrf.mxu0
      %v1948 = vadd.f32 0.0, %v1947
      %v1949 = vpop.f32.mrf.mxu0
      %v1950 = vadd.f32 0.0, %v1949
      %1951 = vmatmul.bf16.gmra.mxu0 %v1459
      %v1952 = vpop.f32.mrf.mxu0
      %v1953 = vadd.f32 0.0, %v1952
      %v1954 = vpop.f32.mrf.mxu0
      %v1955 = vadd.f32 0.0, %v1954
      %1956 = vmatmul.bf16.gmra.mxu0 %v1868
      %v1957 = vpop.f32.mrf.mxu0
      %v1958 = vadd.f32 0.0, %v1957
      %v1959 = vpop.f32.mrf.mxu0
      %v1960 = vadd.f32 0.0, %v1959
      %1961 = vdwg.mxu0
      %v1962 = vadd.f32 %v1820, %v1883
      %v1963 = vadd.f32 %v1821, %v1885
      %v1964 = vadd.f32 %v1822, %v1888
      %v1965 = vadd.f32 %v1823, %v1890
      %v1966 = vadd.f32 %v1824, %v1893
      %v1967 = vadd.f32 %v1825, %v1895
      %v1968 = vadd.f32 %v1826, %v1898
      %v1969 = vadd.f32 %v1827, %v1900
      %v1970 = vadd.f32 %v1828, %v1903
      %v1971 = vadd.f32 %v1829, %v1905
      %v1972 = vadd.f32 %v1830, %v1908
      %v1973 = vadd.f32 %v1831, %v1910
      %v1974 = vadd.f32 %v1832, %v1913
      %v1975 = vadd.f32 %v1833, %v1915
      %v1976 = vadd.f32 %v1834, %v1918
      %v1977 = vadd.f32 %v1835, %v1920
      %v1978 = vadd.f32 %v1836, %v1923
      %v1979 = vadd.f32 %v1837, %v1925
      %v1980 = vadd.f32 %v1838, %v1928
      %v1981 = vadd.f32 %v1839, %v1930
      %v1982 = vadd.f32 %v1840, %v1933
      %v1983 = vadd.f32 %v1841, %v1935
      %v1984 = vadd.f32 %v1842, %v1938
      %v1985 = vadd.f32 %v1843, %v1940
      %v1986 = vadd.f32 %v1844, %v1943
      %v1987 = vadd.f32 %v1845, %v1945
      %v1988 = vadd.f32 %v1846, %v1948
      %v1989 = vadd.f32 %v1847, %v1950
      %v1990 = vadd.f32 %v1848, %v1953
      %v1991 = vadd.f32 %v1849, %v1955
      %v1992 = vadd.f32 %v1850, %v1958
      %v1993 = vadd.f32 %v1851, %v1960
      %v1994 = vrot.slane %v528, 2
      %v1995 = vrot.slane %v529, 2
      %v1996 = vsel %vm1014, %v1994, %v1995
      %v1997 = vrot.slane %v530, 2
      %v1998 = vsel %vm1014, %v1995, %v1997
      %v2001 = vpack.c.bf16 %v1998, %v1996
      %v2003 = vsel %vm398, %v2001, 0
      %v2006 = vsel %vm781, %v535, 0
      %2008 = vmatpush.bf16.msra.mxu0 0
      %2009 = vmatpush.bf16.msra.mxu0 0
      %2010 = vmatpush.bf16.msra.mxu0 0
      %2011 = vmatpush.bf16.msra.mxu0 0
      %2012 = vmatpush.bf16.msra.mxu0 0
      %2013 = vmatpush.bf16.msra.mxu0 0
      %2014 = vmatpush.bf16.msra.mxu0 0
      %2015 = vmatpush.bf16.msra.mxu0 %v2006
      %2016 = vmatmul.bf16.gmra.mxu0 %v1150
      %v2017 = vpop.f32.mrf.mxu0
      %v2018 = vadd.f32 0.0, %v2017
      %v2019 = vpop.f32.mrf.mxu0
      %v2020 = vadd.f32 0.0, %v2019
      %2021 = vmatmul.bf16.gmra.mxu0 %v1153
      %v2022 = vpop.f32.mrf.mxu0
      %v2023 = vadd.f32 0.0, %v2022
      %v2024 = vpop.f32.mrf.mxu0
      %v2025 = vadd.f32 0.0, %v2024
      %2026 = vmatmul.bf16.gmra.mxu0 %v1156
      %v2027 = vpop.f32.mrf.mxu0
      %v2028 = vadd.f32 0.0, %v2027
      %v2029 = vpop.f32.mrf.mxu0
      %v2030 = vadd.f32 0.0, %v2029
      %2031 = vmatmul.bf16.gmra.mxu0 %v1159
      %v2032 = vpop.f32.mrf.mxu0
      %v2033 = vadd.f32 0.0, %v2032
      %v2034 = vpop.f32.mrf.mxu0
      %v2035 = vadd.f32 0.0, %v2034
      %2036 = vmatmul.bf16.gmra.mxu0 %v1162
      %v2037 = vpop.f32.mrf.mxu0
      %v2038 = vadd.f32 0.0, %v2037
      %v2039 = vpop.f32.mrf.mxu0
      %v2040 = vadd.f32 0.0, %v2039
      %2041 = vmatmul.bf16.gmra.mxu0 %v1165
      %v2042 = vpop.f32.mrf.mxu0
      %v2043 = vadd.f32 0.0, %v2042
      %v2044 = vpop.f32.mrf.mxu0
      %v2045 = vadd.f32 0.0, %v2044
      %2046 = vmatmul.bf16.gmra.mxu0 %v1168
      %v2047 = vpop.f32.mrf.mxu0
      %v2048 = vadd.f32 0.0, %v2047
      %v2049 = vpop.f32.mrf.mxu0
      %v2050 = vadd.f32 0.0, %v2049
      %2051 = vmatmul.bf16.gmra.mxu0 %v1171
      %v2052 = vpop.f32.mrf.mxu0
      %v2053 = vadd.f32 0.0, %v2052
      %v2054 = vpop.f32.mrf.mxu0
      %v2055 = vadd.f32 0.0, %v2054
      %2056 = vmatmul.bf16.gmra.mxu0 %v1174
      %v2057 = vpop.f32.mrf.mxu0
      %v2058 = vadd.f32 0.0, %v2057
      %v2059 = vpop.f32.mrf.mxu0
      %v2060 = vadd.f32 0.0, %v2059
      %2061 = vmatmul.bf16.gmra.mxu0 %v1177
      %v2062 = vpop.f32.mrf.mxu0
      %v2063 = vadd.f32 0.0, %v2062
      %v2064 = vpop.f32.mrf.mxu0
      %v2065 = vadd.f32 0.0, %v2064
      %2066 = vmatmul.bf16.gmra.mxu0 %v1180
      %v2067 = vpop.f32.mrf.mxu0
      %v2068 = vadd.f32 0.0, %v2067
      %v2069 = vpop.f32.mrf.mxu0
      %v2070 = vadd.f32 0.0, %v2069
      %2071 = vmatmul.bf16.gmra.mxu0 %v1183
      %v2072 = vpop.f32.mrf.mxu0
      %v2073 = vadd.f32 0.0, %v2072
      %v2074 = vpop.f32.mrf.mxu0
      %v2075 = vadd.f32 0.0, %v2074
      %2076 = vmatmul.bf16.gmra.mxu0 %v1186
      %v2077 = vpop.f32.mrf.mxu0
      %v2078 = vadd.f32 0.0, %v2077
      %v2079 = vpop.f32.mrf.mxu0
      %v2080 = vadd.f32 0.0, %v2079
      %2081 = vmatmul.bf16.gmra.mxu0 %v1189
      %v2082 = vpop.f32.mrf.mxu0
      %v2083 = vadd.f32 0.0, %v2082
      %v2084 = vpop.f32.mrf.mxu0
      %v2085 = vadd.f32 0.0, %v2084
      %2086 = vmatmul.bf16.gmra.mxu0 %v1598
      %v2087 = vpop.f32.mrf.mxu0
      %v2088 = vadd.f32 0.0, %v2087
      %v2089 = vpop.f32.mrf.mxu0
      %v2090 = vadd.f32 0.0, %v2089
      %2091 = vmatmul.bf16.gmra.mxu0 %v2003
      %v2092 = vpop.f32.mrf.mxu0
      %v2093 = vadd.f32 0.0, %v2092
      %v2094 = vpop.f32.mrf.mxu0
      %v2095 = vadd.f32 0.0, %v2094
      %2096 = vdwg.mxu0
      %v2097 = vadd.f32 %v1962, %v2018
      %v2098 = vadd.f32 %v1963, %v2020
      %v2099 = vadd.f32 %v1964, %v2023
      %v2100 = vadd.f32 %v1965, %v2025
      %v2101 = vadd.f32 %v1966, %v2028
      %v2102 = vadd.f32 %v1967, %v2030
      %v2103 = vadd.f32 %v1968, %v2033
      %v2104 = vadd.f32 %v1969, %v2035
      %v2105 = vadd.f32 %v1970, %v2038
      %v2106 = vadd.f32 %v1971, %v2040
      %v2107 = vadd.f32 %v1972, %v2043
      %v2108 = vadd.f32 %v1973, %v2045
      %v2109 = vadd.f32 %v1974, %v2048
      %v2110 = vadd.f32 %v1975, %v2050
      %v2111 = vadd.f32 %v1976, %v2053
      %v2112 = vadd.f32 %v1977, %v2055
      %v2113 = vadd.f32 %v1978, %v2058
      %v2114 = vadd.f32 %v1979, %v2060
      %v2115 = vadd.f32 %v1980, %v2063
      %v2116 = vadd.f32 %v1981, %v2065
      %v2117 = vadd.f32 %v1982, %v2068
      %v2118 = vadd.f32 %v1983, %v2070
      %v2119 = vadd.f32 %v1984, %v2073
      %v2120 = vadd.f32 %v1985, %v2075
      %v2121 = vadd.f32 %v1986, %v2078
      %v2122 = vadd.f32 %v1987, %v2080
      %v2123 = vadd.f32 %v1988, %v2083
      %v2124 = vadd.f32 %v1989, %v2085
      %v2125 = vadd.f32 %v1990, %v2088
      %v2126 = vadd.f32 %v1991, %v2090
      %v2127 = vadd.f32 %v1992, %v2093
      %v2128 = vadd.f32 %v1993, %v2095
      %v2129 = vld [vmem:[%s2] sm:$0x1]
      %v2131 = vperm.slane %v2129, 0
      %v2133 = vadd.f32 %v2097, %v2131
      %v2134 = vadd.f32 %v2098, %v2131
      %v2135 = vadd.f32 %v2099, %v2131
      %v2136 = vadd.f32 %v2100, %v2131
      %v2137 = vadd.f32 %v2101, %v2131
      %v2138 = vadd.f32 %v2102, %v2131
      %v2139 = vadd.f32 %v2103, %v2131
      %v2140 = vadd.f32 %v2104, %v2131
      %v2141 = vadd.f32 %v2105, %v2131
      %v2142 = vadd.f32 %v2106, %v2131
      %v2143 = vadd.f32 %v2107, %v2131
      %v2144 = vadd.f32 %v2108, %v2131
      %v2145 = vadd.f32 %v2109, %v2131
      %v2146 = vadd.f32 %v2110, %v2131
      %v2147 = vadd.f32 %v2111, %v2131
      %v2148 = vadd.f32 %v2112, %v2131
      %v2149 = vadd.f32 %v2113, %v2131
      %v2150 = vadd.f32 %v2114, %v2131
      %v2151 = vadd.f32 %v2115, %v2131
      %v2152 = vadd.f32 %v2116, %v2131
      %v2153 = vadd.f32 %v2117, %v2131
      %v2154 = vadd.f32 %v2118, %v2131
      %v2155 = vadd.f32 %v2119, %v2131
      %v2156 = vadd.f32 %v2120, %v2131
      %v2157 = vadd.f32 %v2121, %v2131
      %v2158 = vadd.f32 %v2122, %v2131
      %v2159 = vadd.f32 %v2123, %v2131
      %v2160 = vadd.f32 %v2124, %v2131
      %v2161 = vadd.f32 %v2125, %v2131
      %v2162 = vadd.f32 %v2126, %v2131
      %v2163 = vadd.f32 %v2127, %v2131
      %v2164 = vadd.f32 %v2128, %v2131
      %v2165 = vmax.f32 %v2133, 0.0
      %v2166 = vmax.f32 %v2134, 0.0
      %v2167 = vmax.f32 %v2135, 0.0
      %v2168 = vmax.f32 %v2136, 0.0
      %v2169 = vmax.f32 %v2137, 0.0
      %v2170 = vmax.f32 %v2138, 0.0
      %v2171 = vmax.f32 %v2139, 0.0
      %v2172 = vmax.f32 %v2140, 0.0
      %v2173 = vmax.f32 %v2141, 0.0
      %v2174 = vmax.f32 %v2142, 0.0
      %v2175 = vmax.f32 %v2143, 0.0
      %v2176 = vmax.f32 %v2144, 0.0
      %v2177 = vmax.f32 %v2145, 0.0
      %v2178 = vmax.f32 %v2146, 0.0
      %v2179 = vmax.f32 %v2147, 0.0
      %v2180 = vmax.f32 %v2148, 0.0
      %v2181 = vmax.f32 %v2149, 0.0
      %v2182 = vmax.f32 %v2150, 0.0
      %v2183 = vmax.f32 %v2151, 0.0
      %v2184 = vmax.f32 %v2152, 0.0
      %v2185 = vmax.f32 %v2153, 0.0
      %v2186 = vmax.f32 %v2154, 0.0
      %v2187 = vmax.f32 %v2155, 0.0
      %v2188 = vmax.f32 %v2156, 0.0
      %v2189 = vmax.f32 %v2157, 0.0
      %v2190 = vmax.f32 %v2158, 0.0
      %v2191 = vmax.f32 %v2159, 0.0
      %v2192 = vmax.f32 %v2160, 0.0
      %v2193 = vmax.f32 %v2161, 0.0
      %v2194 = vmax.f32 %v2162, 0.0
      %v2195 = vmax.f32 %v2163, 0.0
      %v2196 = vmax.f32 %v2164, 0.0
      %vm2197 = vcmask 64512
      %2198 = vst.msk [vmem:[#allocation3] sm:$0xff] %vm2197, 0.0
      %2199 = vst.msk [vmem:[#allocation3 + $0x8] sm:$0xff] %vm2197, 0.0
      %vm2200 = vcmask 58368
      %2201 = vst.msk [vmem:[#allocation3 + $0x10] sm:$0x3] %vm2200, 0.0
      %s2202 = scalar_lea.vmem [#allocation3], 408
      %2203 = vst.msk [vmem:[%s2202] sm:$0xff] %vm2197, 0.0
      %2204 = vst.msk [vmem:[%s2202 + $0x8] sm:$0xff] %vm2197, 0.0
      %2205 = vst.msk [vmem:[%s2202 + $0x10] sm:$0x3] %vm2200, 0.0
      %vm2206 = vcmask 57344
      %2207 = vst.msk [vmem:[#allocation3] sm:$0x1] %vm2206, 0.0
      %2208 = vst.msk [vmem:[#allocation3 + $0x18] sm:$0x1] %vm2206, 0.0
      %2209 = vst.msk [vmem:[#allocation3 + $0x30] sm:$0x1] %vm2206, 0.0
      %2210 = vst.msk [vmem:[#allocation3 + $0x48] sm:$0x1] %vm2206, 0.0
      %2211 = vst.msk [vmem:[#allocation3 + $0x60] sm:$0x1] %vm2206, 0.0
      %2212 = vst.msk [vmem:[#allocation3 + $0x78] sm:$0x1] %vm2206, 0.0
      %2213 = vst.msk [vmem:[#allocation3 + $0x90] sm:$0x1] %vm2206, 0.0
      %2214 = vst.msk [vmem:[#allocation3 + $0xa8] sm:$0x1] %vm2206, 0.0
      %2215 = vst.msk [vmem:[#allocation3 + $0xc0] sm:$0x1] %vm2206, 0.0
      %2216 = vst.msk [vmem:[#allocation3 + $0xd8] sm:$0x1] %vm2206, 0.0
      %2217 = vst.msk [vmem:[#allocation3 + $0xf0] sm:$0x1] %vm2206, 0.0
      %2218 = vst.msk [vmem:[#allocation3 + $0x108] sm:$0x1] %vm2206, 0.0
      %2219 = vst.msk [vmem:[#allocation3 + $0x120] sm:$0x1] %vm2206, 0.0
      %2220 = vst.msk [vmem:[#allocation3 + $0x138] sm:$0x1] %vm2206, 0.0
      %2221 = vst.msk [vmem:[#allocation3 + $0x150] sm:$0x1] %vm2206, 0.0
      %2222 = vst.msk [vmem:[#allocation3 + $0x168] sm:$0x1] %vm2206, 0.0
      %2223 = vst.msk [vmem:[#allocation3 + $0x180] sm:$0x1] %vm2206, 0.0
      %2224 = vst.msk [vmem:[#allocation3 + $0x198] sm:$0x1] %vm2206, 0.0
      %2225 = vst.msk [vmem:[#allocation3 + $0x11] sm:$0x1] %vm2206, 0.0
      %2226 = vst.msk [vmem:[#allocation3 + $0x29] sm:$0x1] %vm2206, 0.0
      %2227 = vst.msk [vmem:[#allocation3 + $0x41] sm:$0x1] %vm2206, 0.0
      %2228 = vst.msk [vmem:[#allocation3 + $0x59] sm:$0x1] %vm2206, 0.0
      %2229 = vst.msk [vmem:[#allocation3 + $0x71] sm:$0x1] %vm2206, 0.0
      %2230 = vst.msk [vmem:[#allocation3 + $0x89] sm:$0x1] %vm2206, 0.0
      %2231 = vst.msk [vmem:[#allocation3 + $0xa1] sm:$0x1] %vm2206, 0.0
      %2232 = vst.msk [vmem:[#allocation3 + $0xb9] sm:$0x1] %vm2206, 0.0
      %2233 = vst.msk [vmem:[#allocation3 + $0xd1] sm:$0x1] %vm2206, 0.0
      %2234 = vst.msk [vmem:[#allocation3 + $0xe9] sm:$0x1] %vm2206, 0.0
      %2235 = vst.msk [vmem:[#allocation3 + $0x101] sm:$0x1] %vm2206, 0.0
      %2236 = vst.msk [vmem:[#allocation3 + $0x119] sm:$0x1] %vm2206, 0.0
      %2237 = vst.msk [vmem:[#allocation3 + $0x131] sm:$0x1] %vm2206, 0.0
      %2238 = vst.msk [vmem:[#allocation3 + $0x149] sm:$0x1] %vm2206, 0.0
      %2239 = vst.msk [vmem:[#allocation3 + $0x161] sm:$0x1] %vm2206, 0.0
      %2240 = vst.msk [vmem:[#allocation3 + $0x179] sm:$0x1] %vm2206, 0.0
      %2241 = vst.msk [vmem:[#allocation3 + $0x191] sm:$0x1] %vm2206, 0.0
      %2242 = vst.msk [vmem:[#allocation3 + $0x1a9] sm:$0x1] %vm2206, 0.0
      %s2243 = scalar_lea.vmem [#allocation3], 24
      %2244 = vst.msk [vmem:[%s2243 + $0x1] sm:$0xff] %vm2197, %v2165
      %2245 = vst.msk [vmem:[%s2243 + $0x9] sm:$0xff] %vm2197, %v2166
      %2246 = vst.msk [vmem:[%s2243 + $0x19] sm:$0xff] %vm2197, %v2167
      %2247 = vst.msk [vmem:[%s2243 + $0x21] sm:$0xff] %vm2197, %v2168
      %2248 = vst.msk [vmem:[%s2243 + $0x31] sm:$0xff] %vm2197, %v2169
      %2249 = vst.msk [vmem:[%s2243 + $0x39] sm:$0xff] %vm2197, %v2170
      %2250 = vst.msk [vmem:[%s2243 + $0x49] sm:$0xff] %vm2197, %v2171
      %2251 = vst.msk [vmem:[%s2243 + $0x51] sm:$0xff] %vm2197, %v2172
      %2252 = vst.msk [vmem:[%s2243 + $0x61] sm:$0xff] %vm2197, %v2173
      %2253 = vst.msk [vmem:[%s2243 + $0x69] sm:$0xff] %vm2197, %v2174
      %2254 = vst.msk [vmem:[%s2243 + $0x79] sm:$0xff] %vm2197, %v2175
      %2255 = vst.msk [vmem:[%s2243 + $0x81] sm:$0xff] %vm2197, %v2176
      %2256 = vst.msk [vmem:[%s2243 + $0x91] sm:$0xff] %vm2197, %v2177
      %2257 = vst.msk [vmem:[%s2243 + $0x99] sm:$0xff] %vm2197, %v2178
      %2258 = vst.msk [vmem:[%s2243 + $0xa9] sm:$0xff] %vm2197, %v2179
      %2259 = vst.msk [vmem:[%s2243 + $0xb1] sm:$0xff] %vm2197, %v2180
      %2260 = vst.msk [vmem:[%s2243 + $0xc1] sm:$0xff] %vm2197, %v2181
      %2261 = vst.msk [vmem:[%s2243 + $0xc9] sm:$0xff] %vm2197, %v2182
      %2262 = vst.msk [vmem:[%s2243 + $0xd9] sm:$0xff] %vm2197, %v2183
      %2263 = vst.msk [vmem:[%s2243 + $0xe1] sm:$0xff] %vm2197, %v2184
      %2264 = vst.msk [vmem:[%s2243 + $0xf1] sm:$0xff] %vm2197, %v2185
      %2265 = vst.msk [vmem:[%s2243 + $0xf9] sm:$0xff] %vm2197, %v2186
      %2266 = vst.msk [vmem:[%s2243 + $0x109] sm:$0xff] %vm2197, %v2187
      %2267 = vst.msk [vmem:[%s2243 + $0x111] sm:$0xff] %vm2197, %v2188
      %2268 = vst.msk [vmem:[%s2243 + $0x121] sm:$0xff] %vm2197, %v2189
      %2269 = vst.msk [vmem:[%s2243 + $0x129] sm:$0xff] %vm2197, %v2190
      %2270 = vst.msk [vmem:[%s2243 + $0x139] sm:$0xff] %vm2197, %v2191
      %2271 = vst.msk [vmem:[%s2243 + $0x141] sm:$0xff] %vm2197, %v2192
      %2272 = vst.msk [vmem:[%s2243 + $0x151] sm:$0xff] %vm2197, %v2193
      %2273 = vst.msk [vmem:[%s2243 + $0x159] sm:$0xff] %vm2197, %v2194
      %2274 = vst.msk [vmem:[%s2243 + $0x169] sm:$0xff] %vm2197, %v2195
      %2275 = vst.msk [vmem:[%s2243 + $0x171] sm:$0xff] %vm2197, %v2196
      %v2276 = vld [vmem:[#allocation3] sm:$0xff]
      %v2277 = vld [vmem:[#allocation3 + $0x8] sm:$0xff]
      %v2278 = vld [vmem:[#allocation3 + $0x10] sm:$0x3]
      %v2279 = vld [vmem:[#allocation3 + $0x18] sm:$0xff]
      %v2280 = vld [vmem:[#allocation3 + $0x20] sm:$0xff]
      %v2281 = vld [vmem:[#allocation3 + $0x28] sm:$0x3]
      %v2282 = vld [vmem:[#allocation3 + $0x30] sm:$0xff]
      %v2283 = vld [vmem:[#allocation3 + $0x38] sm:$0xff]
      %v2284 = vld [vmem:[#allocation3 + $0x40] sm:$0x3]
      %v2285 = vld [vmem:[#allocation3 + $0x48] sm:$0xff]
      %v2286 = vld [vmem:[#allocation3 + $0x50] sm:$0xff]
      %v2287 = vld [vmem:[#allocation3 + $0x58] sm:$0x3]
      %v2288 = vld [vmem:[#allocation3 + $0x60] sm:$0xff]
      %v2289 = vld [vmem:[#allocation3 + $0x68] sm:$0xff]
      %v2290 = vld [vmem:[#allocation3 + $0x70] sm:$0x3]
      %v2291 = vld [vmem:[#allocation3 + $0x78] sm:$0xff]
      %v2292 = vld [vmem:[#allocation3 + $0x80] sm:$0xff]
      %v2293 = vld [vmem:[#allocation3 + $0x88] sm:$0x3]
      %v2294 = vld [vmem:[#allocation3 + $0x90] sm:$0xff]
      %v2295 = vld [vmem:[#allocation3 + $0x98] sm:$0xff]
      %v2296 = vld [vmem:[#allocation3 + $0xa0] sm:$0x3]
      %v2297 = vld [vmem:[#allocation3 + $0xa8] sm:$0xff]
      %v2298 = vld [vmem:[#allocation3 + $0xb0] sm:$0xff]
      %v2299 = vld [vmem:[#allocation3 + $0xb8] sm:$0x3]
      %v2300 = vld [vmem:[#allocation3 + $0xc0] sm:$0xff]
      %v2301 = vld [vmem:[#allocation3 + $0xc8] sm:$0xff]
      %v2302 = vld [vmem:[#allocation3 + $0xd0] sm:$0x3]
      %v2303 = vld [vmem:[#allocation3 + $0xd8] sm:$0xff]
      %v2304 = vld [vmem:[#allocation3 + $0xe0] sm:$0xff]
      %v2305 = vld [vmem:[#allocation3 + $0xe8] sm:$0x3]
      %v2306 = vld [vmem:[#allocation3 + $0xf0] sm:$0xff]
      %v2307 = vld [vmem:[#allocation3 + $0xf8] sm:$0xff]
      %v2308 = vld [vmem:[#allocation3 + $0x100] sm:$0x3]
      %v2309 = vld [vmem:[#allocation3 + $0x108] sm:$0xff]
      %v2310 = vld [vmem:[#allocation3 + $0x110] sm:$0xff]
      %v2311 = vld [vmem:[#allocation3 + $0x118] sm:$0x3]
      %v2312 = vld [vmem:[#allocation3 + $0x120] sm:$0xff]
      %v2313 = vld [vmem:[#allocation3 + $0x128] sm:$0xff]
      %v2314 = vld [vmem:[#allocation3 + $0x130] sm:$0x3]
      %v2315 = vld [vmem:[#allocation3 + $0x138] sm:$0xff]
      %v2316 = vld [vmem:[#allocation3 + $0x140] sm:$0xff]
      %v2317 = vld [vmem:[#allocation3 + $0x148] sm:$0x3]
      %v2318 = vld [vmem:[#allocation3 + $0x150] sm:$0xff]
      %v2319 = vld [vmem:[#allocation3 + $0x158] sm:$0xff]
      %v2320 = vld [vmem:[#allocation3 + $0x160] sm:$0x3]
      %v2321 = vld [vmem:[#allocation3 + $0x168] sm:$0xff]
      %v2322 = vld [vmem:[#allocation3 + $0x170] sm:$0xff]
      %v2323 = vld [vmem:[#allocation3 + $0x178] sm:$0x3]
      %v2324 = vld [vmem:[#allocation3 + $0x180] sm:$0xff]
      %v2325 = vld [vmem:[#allocation3 + $0x188] sm:$0xff]
      %v2326 = vld [vmem:[#allocation3 + $0x190] sm:$0x3]
      %v2327 = vld [vmem:[#allocation3 + $0x198] sm:$0xff]
      %v2328 = vld [vmem:[#allocation3 + $0x1a0] sm:$0xff]
      %v2329 = vld [vmem:[#allocation3 + $0x1a8] sm:$0x3]
      %v2330 = vld [vmem:[%s3] sm:$0xf]
      %v2331 = vld [vmem:[%s3 + $0x4] sm:$0xf]
      %v2332 = vld [vmem:[%s3 + $0x8] sm:$0xf]
      %v2333 = vld [vmem:[%s3 + $0xc] sm:$0xf]
      %v2334 = vld [vmem:[%s3 + $0x10] sm:$0xf]
      %v2335 = vld [vmem:[%s3 + $0x14] sm:$0xf]
      %v2336 = vld [vmem:[%s3 + $0x18] sm:$0xf]
      %v2337 = vld [vmem:[%s3 + $0x1c] sm:$0xf]
      %v2338 = vld [vmem:[%s3 + $0x20] sm:$0xf]
      %v2339 = vpack.c.bf16 %v2277, %v2276
      %v2340 = vpack.c.bf16 %v2280, %v2279
      %v2341 = vpack.c.bf16 %v2283, %v2282
      %v2342 = vpack.c.bf16 %v2286, %v2285
      %v2343 = vpack.c.bf16 %v2289, %v2288
      %v2344 = vpack.c.bf16 %v2292, %v2291
      %v2345 = vpack.c.bf16 %v2295, %v2294
      %v2346 = vpack.c.bf16 %v2298, %v2297
      %v2347 = vpack.c.bf16 %v2301, %v2300
      %v2348 = vpack.c.bf16 %v2304, %v2303
      %v2349 = vpack.c.bf16 %v2307, %v2306
      %v2350 = vpack.c.bf16 %v2310, %v2309
      %v2351 = vpack.c.bf16 %v2313, %v2312
      %v2352 = vpack.c.bf16 %v2316, %v2315
      %v2353 = vpack.c.bf16 %v2319, %v2318
      %v2354 = vpack.c.bf16 %v2322, %v2321
      %v2403 = vrot.slane %v2276, 1
      %v2404 = vrot.slane %v2277, 1
      %v2405 = vsel %vm600, %v2403, %v2404
      %v2406 = vrot.slane %v2278, 1
      %v2407 = vsel %vm600, %v2404, %v2406
      %v2408 = vrot.slane %v2279, 1
      %v2409 = vrot.slane %v2280, 1
      %v2410 = vsel %vm600, %v2408, %v2409
      %v2411 = vrot.slane %v2281, 1
      %v2412 = vsel %vm600, %v2409, %v2411
      %v2413 = vrot.slane %v2282, 1
      %v2414 = vrot.slane %v2283, 1
      %v2415 = vsel %vm600, %v2413, %v2414
      %v2416 = vrot.slane %v2284, 1
      %v2417 = vsel %vm600, %v2414, %v2416
      %v2418 = vrot.slane %v2285, 1
      %v2419 = vrot.slane %v2286, 1
      %v2420 = vsel %vm600, %v2418, %v2419
      %v2421 = vrot.slane %v2287, 1
      %v2422 = vsel %vm600, %v2419, %v2421
      %v2423 = vrot.slane %v2288, 1
      %v2424 = vrot.slane %v2289, 1
      %v2425 = vsel %vm600, %v2423, %v2424
      %v2426 = vrot.slane %v2290, 1
      %v2427 = vsel %vm600, %v2424, %v2426
      %v2428 = vrot.slane %v2291, 1
      %v2429 = vrot.slane %v2292, 1
      %v2430 = vsel %vm600, %v2428, %v2429
      %v2431 = vrot.slane %v2293, 1
      %v2432 = vsel %vm600, %v2429, %v2431
      %v2433 = vrot.slane %v2294, 1
      %v2434 = vrot.slane %v2295, 1
      %v2435 = vsel %vm600, %v2433, %v2434
      %v2436 = vrot.slane %v2296, 1
      %v2437 = vsel %vm600, %v2434, %v2436
      %v2438 = vrot.slane %v2297, 1
      %v2439 = vrot.slane %v2298, 1
      %v2440 = vsel %vm600, %v2438, %v2439
      %v2441 = vrot.slane %v2299, 1
      %v2442 = vsel %vm600, %v2439, %v2441
      %v2443 = vrot.slane %v2300, 1
      %v2444 = vrot.slane %v2301, 1
      %v2445 = vsel %vm600, %v2443, %v2444
      %v2446 = vrot.slane %v2302, 1
      %v2447 = vsel %vm600, %v2444, %v2446
      %v2448 = vrot.slane %v2303, 1
      %v2449 = vrot.slane %v2304, 1
      %v2450 = vsel %vm600, %v2448, %v2449
      %v2451 = vrot.slane %v2305, 1
      %v2452 = vsel %vm600, %v2449, %v2451
      %v2453 = vrot.slane %v2306, 1
      %v2454 = vrot.slane %v2307, 1
      %v2455 = vsel %vm600, %v2453, %v2454
      %v2456 = vrot.slane %v2308, 1
      %v2457 = vsel %vm600, %v2454, %v2456
      %v2458 = vrot.slane %v2309, 1
      %v2459 = vrot.slane %v2310, 1
      %v2460 = vsel %vm600, %v2458, %v2459
      %v2461 = vrot.slane %v2311, 1
      %v2462 = vsel %vm600, %v2459, %v2461
      %v2463 = vrot.slane %v2312, 1
      %v2464 = vrot.slane %v2313, 1
      %v2465 = vsel %vm600, %v2463, %v2464
      %v2466 = vrot.slane %v2314, 1
      %v2467 = vsel %vm600, %v2464, %v2466
      %v2468 = vrot.slane %v2315, 1
      %v2469 = vrot.slane %v2316, 1
      %v2470 = vsel %vm600, %v2468, %v2469
      %v2471 = vrot.slane %v2317, 1
      %v2472 = vsel %vm600, %v2469, %v2471
      %v2473 = vrot.slane %v2318, 1
      %v2474 = vrot.slane %v2319, 1
      %v2475 = vsel %vm600, %v2473, %v2474
      %v2476 = vrot.slane %v2320, 1
      %v2477 = vsel %vm600, %v2474, %v2476
      %v2478 = vrot.slane %v2321, 1
      %v2479 = vrot.slane %v2322, 1
      %v2480 = vsel %vm600, %v2478, %v2479
      %v2481 = vrot.slane %v2323, 1
      %v2482 = vsel %vm600, %v2479, %v2481
      %v2515 = vpack.c.bf16 %v2407, %v2405
      %v2516 = vpack.c.bf16 %v2412, %v2410
      %v2517 = vpack.c.bf16 %v2417, %v2415
      %v2518 = vpack.c.bf16 %v2422, %v2420
      %v2519 = vpack.c.bf16 %v2427, %v2425
      %v2520 = vpack.c.bf16 %v2432, %v2430
      %v2521 = vpack.c.bf16 %v2437, %v2435
      %v2522 = vpack.c.bf16 %v2442, %v2440
      %v2523 = vpack.c.bf16 %v2447, %v2445
      %v2524 = vpack.c.bf16 %v2452, %v2450
      %v2525 = vpack.c.bf16 %v2457, %v2455
      %v2526 = vpack.c.bf16 %v2462, %v2460
      %v2527 = vpack.c.bf16 %v2467, %v2465
      %v2528 = vpack.c.bf16 %v2472, %v2470
      %v2529 = vpack.c.bf16 %v2477, %v2475
      %v2530 = vpack.c.bf16 %v2482, %v2480
      %v2532 = vsel %vm2197, %v2515, 0
      %v2535 = vsel %vm2197, %v2516, 0
      %v2538 = vsel %vm2197, %v2517, 0
      %v2541 = vsel %vm2197, %v2518, 0
      %v2544 = vsel %vm2197, %v2519, 0
      %v2547 = vsel %vm2197, %v2520, 0
      %v2550 = vsel %vm2197, %v2521, 0
      %v2553 = vsel %vm2197, %v2522, 0
      %v2556 = vsel %vm2197, %v2523, 0
      %v2559 = vsel %vm2197, %v2524, 0
      %v2562 = vsel %vm2197, %v2525, 0
      %v2565 = vsel %vm2197, %v2526, 0
      %v2568 = vsel %vm2197, %v2527, 0
      %v2571 = vsel %vm2197, %v2528, 0
      %v2574 = vsel %vm2197, %v2529, 0
      %v2577 = vsel %vm2197, %v2530, 0
      %vm2579 = vcmask 1043456
      %v2581 = vsel %vm2579, %v2331, 0
      %2583 = vmatpush.bf16.msra.mxu0 0
      %2584 = vmatpush.bf16.msra.mxu0 0
      %2585 = vmatpush.bf16.msra.mxu0 0
      %2586 = vmatpush.bf16.msra.mxu0 0
      %2587 = vmatpush.bf16.msra.mxu0 0
      %2588 = vmatpush.bf16.msra.mxu0 0
      %2589 = vmatpush.bf16.msra.mxu0 0
      %2590 = vmatpush.bf16.msra.mxu0 %v2581
      %2591 = vmatmul.bf16.gmra.mxu0 %v2532
      %v2592 = vpop.f32.mrf.mxu0
      %v2593 = vadd.f32 0.0, %v2592
      %v2594 = vpop.f32.mrf.mxu0
      %v2595 = vadd.f32 0.0, %v2594
      %2596 = vmatmul.bf16.gmra.mxu0 %v2535
      %v2597 = vpop.f32.mrf.mxu0
      %v2598 = vadd.f32 0.0, %v2597
      %v2599 = vpop.f32.mrf.mxu0
      %v2600 = vadd.f32 0.0, %v2599
      %2601 = vmatmul.bf16.gmra.mxu0 %v2538
      %v2602 = vpop.f32.mrf.mxu0
      %v2603 = vadd.f32 0.0, %v2602
      %v2604 = vpop.f32.mrf.mxu0
      %v2605 = vadd.f32 0.0, %v2604
      %2606 = vmatmul.bf16.gmra.mxu0 %v2541
      %v2607 = vpop.f32.mrf.mxu0
      %v2608 = vadd.f32 0.0, %v2607
      %v2609 = vpop.f32.mrf.mxu0
      %v2610 = vadd.f32 0.0, %v2609
      %2611 = vmatmul.bf16.gmra.mxu0 %v2544
      %v2612 = vpop.f32.mrf.mxu0
      %v2613 = vadd.f32 0.0, %v2612
      %v2614 = vpop.f32.mrf.mxu0
      %v2615 = vadd.f32 0.0, %v2614
      %2616 = vmatmul.bf16.gmra.mxu0 %v2547
      %v2617 = vpop.f32.mrf.mxu0
      %v2618 = vadd.f32 0.0, %v2617
      %v2619 = vpop.f32.mrf.mxu0
      %v2620 = vadd.f32 0.0, %v2619
      %2621 = vmatmul.bf16.gmra.mxu0 %v2550
      %v2622 = vpop.f32.mrf.mxu0
      %v2623 = vadd.f32 0.0, %v2622
      %v2624 = vpop.f32.mrf.mxu0
      %v2625 = vadd.f32 0.0, %v2624
      %2626 = vmatmul.bf16.gmra.mxu0 %v2553
      %v2627 = vpop.f32.mrf.mxu0
      %v2628 = vadd.f32 0.0, %v2627
      %v2629 = vpop.f32.mrf.mxu0
      %v2630 = vadd.f32 0.0, %v2629
      %2631 = vmatmul.bf16.gmra.mxu0 %v2556
      %v2632 = vpop.f32.mrf.mxu0
      %v2633 = vadd.f32 0.0, %v2632
      %v2634 = vpop.f32.mrf.mxu0
      %v2635 = vadd.f32 0.0, %v2634
      %2636 = vmatmul.bf16.gmra.mxu0 %v2559
      %v2637 = vpop.f32.mrf.mxu0
      %v2638 = vadd.f32 0.0, %v2637
      %v2639 = vpop.f32.mrf.mxu0
      %v2640 = vadd.f32 0.0, %v2639
      %2641 = vmatmul.bf16.gmra.mxu0 %v2562
      %v2642 = vpop.f32.mrf.mxu0
      %v2643 = vadd.f32 0.0, %v2642
      %v2644 = vpop.f32.mrf.mxu0
      %v2645 = vadd.f32 0.0, %v2644
      %2646 = vmatmul.bf16.gmra.mxu0 %v2565
      %v2647 = vpop.f32.mrf.mxu0
      %v2648 = vadd.f32 0.0, %v2647
      %v2649 = vpop.f32.mrf.mxu0
      %v2650 = vadd.f32 0.0, %v2649
      %2651 = vmatmul.bf16.gmra.mxu0 %v2568
      %v2652 = vpop.f32.mrf.mxu0
      %v2653 = vadd.f32 0.0, %v2652
      %v2654 = vpop.f32.mrf.mxu0
      %v2655 = vadd.f32 0.0, %v2654
      %2656 = vmatmul.bf16.gmra.mxu0 %v2571
      %v2657 = vpop.f32.mrf.mxu0
      %v2658 = vadd.f32 0.0, %v2657
      %v2659 = vpop.f32.mrf.mxu0
      %v2660 = vadd.f32 0.0, %v2659
      %2661 = vmatmul.bf16.gmra.mxu0 %v2574
      %v2662 = vpop.f32.mrf.mxu0
      %v2663 = vadd.f32 0.0, %v2662
      %v2664 = vpop.f32.mrf.mxu0
      %v2665 = vadd.f32 0.0, %v2664
      %2666 = vmatmul.bf16.gmra.mxu0 %v2577
      %v2667 = vpop.f32.mrf.mxu0
      %v2668 = vadd.f32 0.0, %v2667
      %v2669 = vpop.f32.mrf.mxu0
      %v2670 = vadd.f32 0.0, %v2669
      %2671 = vdwg.mxu0
      %v2673 = vsel %vm2197, %v2339, 0
      %v2676 = vsel %vm2197, %v2340, 0
      %v2679 = vsel %vm2197, %v2341, 0
      %v2682 = vsel %vm2197, %v2342, 0
      %v2685 = vsel %vm2197, %v2343, 0
      %v2688 = vsel %vm2197, %v2344, 0
      %v2691 = vsel %vm2197, %v2345, 0
      %v2694 = vsel %vm2197, %v2346, 0
      %v2697 = vsel %vm2197, %v2347, 0
      %v2700 = vsel %vm2197, %v2348, 0
      %v2703 = vsel %vm2197, %v2349, 0
      %v2706 = vsel %vm2197, %v2350, 0
      %v2709 = vsel %vm2197, %v2351, 0
      %v2712 = vsel %vm2197, %v2352, 0
      %v2715 = vsel %vm2197, %v2353, 0
      %v2718 = vsel %vm2197, %v2354, 0
      %v2721 = vsel %vm2579, %v2330, 0
      %2723 = vmatpush.bf16.msra.mxu0 0
      %2724 = vmatpush.bf16.msra.mxu0 0
      %2725 = vmatpush.bf16.msra.mxu0 0
      %2726 = vmatpush.bf16.msra.mxu0 0
      %2727 = vmatpush.bf16.msra.mxu0 0
      %2728 = vmatpush.bf16.msra.mxu0 0
      %2729 = vmatpush.bf16.msra.mxu0 0
      %2730 = vmatpush.bf16.msra.mxu0 %v2721
      %2731 = vmatmul.bf16.gmra.mxu0 %v2673
      %v2732 = vpop.f32.mrf.mxu0
      %v2733 = vadd.f32 %v2593, %v2732
      %v2734 = vpop.f32.mrf.mxu0
      %v2735 = vadd.f32 %v2595, %v2734
      %2736 = vmatmul.bf16.gmra.mxu0 %v2676
      %v2737 = vpop.f32.mrf.mxu0
      %v2738 = vadd.f32 %v2598, %v2737
      %v2739 = vpop.f32.mrf.mxu0
      %v2740 = vadd.f32 %v2600, %v2739
      %2741 = vmatmul.bf16.gmra.mxu0 %v2679
      %v2742 = vpop.f32.mrf.mxu0
      %v2743 = vadd.f32 %v2603, %v2742
      %v2744 = vpop.f32.mrf.mxu0
      %v2745 = vadd.f32 %v2605, %v2744
      %2746 = vmatmul.bf16.gmra.mxu0 %v2682
      %v2747 = vpop.f32.mrf.mxu0
      %v2748 = vadd.f32 %v2608, %v2747
      %v2749 = vpop.f32.mrf.mxu0
      %v2750 = vadd.f32 %v2610, %v2749
      %2751 = vmatmul.bf16.gmra.mxu0 %v2685
      %v2752 = vpop.f32.mrf.mxu0
      %v2753 = vadd.f32 %v2613, %v2752
      %v2754 = vpop.f32.mrf.mxu0
      %v2755 = vadd.f32 %v2615, %v2754
      %2756 = vmatmul.bf16.gmra.mxu0 %v2688
      %v2757 = vpop.f32.mrf.mxu0
      %v2758 = vadd.f32 %v2618, %v2757
      %v2759 = vpop.f32.mrf.mxu0
      %v2760 = vadd.f32 %v2620, %v2759
      %2761 = vmatmul.bf16.gmra.mxu0 %v2691
      %v2762 = vpop.f32.mrf.mxu0
      %v2763 = vadd.f32 %v2623, %v2762
      %v2764 = vpop.f32.mrf.mxu0
      %v2765 = vadd.f32 %v2625, %v2764
      %2766 = vmatmul.bf16.gmra.mxu0 %v2694
      %v2767 = vpop.f32.mrf.mxu0
      %v2768 = vadd.f32 %v2628, %v2767
      %v2769 = vpop.f32.mrf.mxu0
      %v2770 = vadd.f32 %v2630, %v2769
      %2771 = vmatmul.bf16.gmra.mxu0 %v2697
      %v2772 = vpop.f32.mrf.mxu0
      %v2773 = vadd.f32 %v2633, %v2772
      %v2774 = vpop.f32.mrf.mxu0
      %v2775 = vadd.f32 %v2635, %v2774
      %2776 = vmatmul.bf16.gmra.mxu0 %v2700
      %v2777 = vpop.f32.mrf.mxu0
      %v2778 = vadd.f32 %v2638, %v2777
      %v2779 = vpop.f32.mrf.mxu0
      %v2780 = vadd.f32 %v2640, %v2779
      %2781 = vmatmul.bf16.gmra.mxu0 %v2703
      %v2782 = vpop.f32.mrf.mxu0
      %v2783 = vadd.f32 %v2643, %v2782
      %v2784 = vpop.f32.mrf.mxu0
      %v2785 = vadd.f32 %v2645, %v2784
      %2786 = vmatmul.bf16.gmra.mxu0 %v2706
      %v2787 = vpop.f32.mrf.mxu0
      %v2788 = vadd.f32 %v2648, %v2787
      %v2789 = vpop.f32.mrf.mxu0
      %v2790 = vadd.f32 %v2650, %v2789
      %2791 = vmatmul.bf16.gmra.mxu0 %v2709
      %v2792 = vpop.f32.mrf.mxu0
      %v2793 = vadd.f32 %v2653, %v2792
      %v2794 = vpop.f32.mrf.mxu0
      %v2795 = vadd.f32 %v2655, %v2794
      %2796 = vmatmul.bf16.gmra.mxu0 %v2712
      %v2797 = vpop.f32.mrf.mxu0
      %v2798 = vadd.f32 %v2658, %v2797
      %v2799 = vpop.f32.mrf.mxu0
      %v2800 = vadd.f32 %v2660, %v2799
      %2801 = vmatmul.bf16.gmra.mxu0 %v2715
      %v2802 = vpop.f32.mrf.mxu0
      %v2803 = vadd.f32 %v2663, %v2802
      %v2804 = vpop.f32.mrf.mxu0
      %v2805 = vadd.f32 %v2665, %v2804
      %2806 = vmatmul.bf16.gmra.mxu0 %v2718
      %v2807 = vpop.f32.mrf.mxu0
      %v2808 = vadd.f32 %v2668, %v2807
      %v2809 = vpop.f32.mrf.mxu0
      %v2810 = vadd.f32 %v2670, %v2809
      %2811 = vdwg.mxu0
      %v2812 = vrot.slane %v2276, 2
      %v2813 = vrot.slane %v2277, 2
      %v2814 = vsel %vm1014, %v2812, %v2813
      %v2815 = vrot.slane %v2278, 2
      %v2816 = vsel %vm1014, %v2813, %v2815
      %v2817 = vrot.slane %v2279, 2
      %v2818 = vrot.slane %v2280, 2
      %v2819 = vsel %vm1014, %v2817, %v2818
      %v2820 = vrot.slane %v2281, 2
      %v2821 = vsel %vm1014, %v2818, %v2820
      %v2822 = vrot.slane %v2282, 2
      %v2823 = vrot.slane %v2283, 2
      %v2824 = vsel %vm1014, %v2822, %v2823
      %v2825 = vrot.slane %v2284, 2
      %v2826 = vsel %vm1014, %v2823, %v2825
      %v2827 = vrot.slane %v2285, 2
      %v2828 = vrot.slane %v2286, 2
      %v2829 = vsel %vm1014, %v2827, %v2828
      %v2830 = vrot.slane %v2287, 2
      %v2831 = vsel %vm1014, %v2828, %v2830
      %v2832 = vrot.slane %v2288, 2
      %v2833 = vrot.slane %v2289, 2
      %v2834 = vsel %vm1014, %v2832, %v2833
      %v2835 = vrot.slane %v2290, 2
      %v2836 = vsel %vm1014, %v2833, %v2835
      %v2837 = vrot.slane %v2291, 2
      %v2838 = vrot.slane %v2292, 2
      %v2839 = vsel %vm1014, %v2837, %v2838
      %v2840 = vrot.slane %v2293, 2
      %v2841 = vsel %vm1014, %v2838, %v2840
      %v2842 = vrot.slane %v2294, 2
      %v2843 = vrot.slane %v2295, 2
      %v2844 = vsel %vm1014, %v2842, %v2843
      %v2845 = vrot.slane %v2296, 2
      %v2846 = vsel %vm1014, %v2843, %v2845
      %v2847 = vrot.slane %v2297, 2
      %v2848 = vrot.slane %v2298, 2
      %v2849 = vsel %vm1014, %v2847, %v2848
      %v2850 = vrot.slane %v2299, 2
      %v2851 = vsel %vm1014, %v2848, %v2850
      %v2852 = vrot.slane %v2300, 2
      %v2853 = vrot.slane %v2301, 2
      %v2854 = vsel %vm1014, %v2852, %v2853
      %v2855 = vrot.slane %v2302, 2
      %v2856 = vsel %vm1014, %v2853, %v2855
      %v2857 = vrot.slane %v2303, 2
      %v2858 = vrot.slane %v2304, 2
      %v2859 = vsel %vm1014, %v2857, %v2858
      %v2860 = vrot.slane %v2305, 2
      %v2861 = vsel %vm1014, %v2858, %v2860
      %v2862 = vrot.slane %v2306, 2
      %v2863 = vrot.slane %v2307, 2
      %v2864 = vsel %vm1014, %v2862, %v2863
      %v2865 = vrot.slane %v2308, 2
      %v2866 = vsel %vm1014, %v2863, %v2865
      %v2867 = vrot.slane %v2309, 2
      %v2868 = vrot.slane %v2310, 2
      %v2869 = vsel %vm1014, %v2867, %v2868
      %v2870 = vrot.slane %v2311, 2
      %v2871 = vsel %vm1014, %v2868, %v2870
      %v2872 = vrot.slane %v2312, 2
      %v2873 = vrot.slane %v2313, 2
      %v2874 = vsel %vm1014, %v2872, %v2873
      %v2875 = vrot.slane %v2314, 2
      %v2876 = vsel %vm1014, %v2873, %v2875
      %v2877 = vrot.slane %v2315, 2
      %v2878 = vrot.slane %v2316, 2
      %v2879 = vsel %vm1014, %v2877, %v2878
      %v2880 = vrot.slane %v2317, 2
      %v2881 = vsel %vm1014, %v2878, %v2880
      %v2882 = vrot.slane %v2318, 2
      %v2883 = vrot.slane %v2319, 2
      %v2884 = vsel %vm1014, %v2882, %v2883
      %v2885 = vrot.slane %v2320, 2
      %v2886 = vsel %vm1014, %v2883, %v2885
      %v2887 = vrot.slane %v2321, 2
      %v2888 = vrot.slane %v2322, 2
      %v2889 = vsel %vm1014, %v2887, %v2888
      %v2890 = vrot.slane %v2323, 2
      %v2891 = vsel %vm1014, %v2888, %v2890
      %v2924 = vpack.c.bf16 %v2816, %v2814
      %v2925 = vpack.c.bf16 %v2821, %v2819
      %v2926 = vpack.c.bf16 %v2826, %v2824
      %v2927 = vpack.c.bf16 %v2831, %v2829
      %v2928 = vpack.c.bf16 %v2836, %v2834
      %v2929 = vpack.c.bf16 %v2841, %v2839
      %v2930 = vpack.c.bf16 %v2846, %v2844
      %v2931 = vpack.c.bf16 %v2851, %v2849
      %v2932 = vpack.c.bf16 %v2856, %v2854
      %v2933 = vpack.c.bf16 %v2861, %v2859
      %v2934 = vpack.c.bf16 %v2866, %v2864
      %v2935 = vpack.c.bf16 %v2871, %v2869
      %v2936 = vpack.c.bf16 %v2876, %v2874
      %v2937 = vpack.c.bf16 %v2881, %v2879
      %v2938 = vpack.c.bf16 %v2886, %v2884
      %v2939 = vpack.c.bf16 %v2891, %v2889
      %v2941 = vsel %vm2197, %v2924, 0
      %v2944 = vsel %vm2197, %v2925, 0
      %v2947 = vsel %vm2197, %v2926, 0
      %v2950 = vsel %vm2197, %v2927, 0
      %v2953 = vsel %vm2197, %v2928, 0
      %v2956 = vsel %vm2197, %v2929, 0
      %v2959 = vsel %vm2197, %v2930, 0
      %v2962 = vsel %vm2197, %v2931, 0
      %v2965 = vsel %vm2197, %v2932, 0
      %v2968 = vsel %vm2197, %v2933, 0
      %v2971 = vsel %vm2197, %v2934, 0
      %v2974 = vsel %vm2197, %v2935, 0
      %v2977 = vsel %vm2197, %v2936, 0
      %v2980 = vsel %vm2197, %v2937, 0
      %v2983 = vsel %vm2197, %v2938, 0
      %v2986 = vsel %vm2197, %v2939, 0
      %v2989 = vsel %vm2579, %v2332, 0
      %2991 = vmatpush.bf16.msra.mxu0 0
      %2992 = vmatpush.bf16.msra.mxu0 0
      %2993 = vmatpush.bf16.msra.mxu0 0
      %2994 = vmatpush.bf16.msra.mxu0 0
      %2995 = vmatpush.bf16.msra.mxu0 0
      %2996 = vmatpush.bf16.msra.mxu0 0
      %2997 = vmatpush.bf16.msra.mxu0 0
      %2998 = vmatpush.bf16.msra.mxu0 %v2989
      %2999 = vmatmul.bf16.gmra.mxu0 %v2941
      %v3000 = vpop.f32.mrf.mxu0
      %v3001 = vadd.f32 0.0, %v3000
      %v3002 = vpop.f32.mrf.mxu0
      %v3003 = vadd.f32 0.0, %v3002
      %3004 = vmatmul.bf16.gmra.mxu0 %v2944
      %v3005 = vpop.f32.mrf.mxu0
      %v3006 = vadd.f32 0.0, %v3005
      %v3007 = vpop.f32.mrf.mxu0
      %v3008 = vadd.f32 0.0, %v3007
      %3009 = vmatmul.bf16.gmra.mxu0 %v2947
      %v3010 = vpop.f32.mrf.mxu0
      %v3011 = vadd.f32 0.0, %v3010
      %v3012 = vpop.f32.mrf.mxu0
      %v3013 = vadd.f32 0.0, %v3012
      %3014 = vmatmul.bf16.gmra.mxu0 %v2950
      %v3015 = vpop.f32.mrf.mxu0
      %v3016 = vadd.f32 0.0, %v3015
      %v3017 = vpop.f32.mrf.mxu0
      %v3018 = vadd.f32 0.0, %v3017
      %3019 = vmatmul.bf16.gmra.mxu0 %v2953
      %v3020 = vpop.f32.mrf.mxu0
      %v3021 = vadd.f32 0.0, %v3020
      %v3022 = vpop.f32.mrf.mxu0
      %v3023 = vadd.f32 0.0, %v3022
      %3024 = vmatmul.bf16.gmra.mxu0 %v2956
      %v3025 = vpop.f32.mrf.mxu0
      %v3026 = vadd.f32 0.0, %v3025
      %v3027 = vpop.f32.mrf.mxu0
      %v3028 = vadd.f32 0.0, %v3027
      %3029 = vmatmul.bf16.gmra.mxu0 %v2959
      %v3030 = vpop.f32.mrf.mxu0
      %v3031 = vadd.f32 0.0, %v3030
      %v3032 = vpop.f32.mrf.mxu0
      %v3033 = vadd.f32 0.0, %v3032
      %3034 = vmatmul.bf16.gmra.mxu0 %v2962
      %v3035 = vpop.f32.mrf.mxu0
      %v3036 = vadd.f32 0.0, %v3035
      %v3037 = vpop.f32.mrf.mxu0
      %v3038 = vadd.f32 0.0, %v3037
      %3039 = vmatmul.bf16.gmra.mxu0 %v2965
      %v3040 = vpop.f32.mrf.mxu0
      %v3041 = vadd.f32 0.0, %v3040
      %v3042 = vpop.f32.mrf.mxu0
      %v3043 = vadd.f32 0.0, %v3042
      %3044 = vmatmul.bf16.gmra.mxu0 %v2968
      %v3045 = vpop.f32.mrf.mxu0
      %v3046 = vadd.f32 0.0, %v3045
      %v3047 = vpop.f32.mrf.mxu0
      %v3048 = vadd.f32 0.0, %v3047
      %3049 = vmatmul.bf16.gmra.mxu0 %v2971
      %v3050 = vpop.f32.mrf.mxu0
      %v3051 = vadd.f32 0.0, %v3050
      %v3052 = vpop.f32.mrf.mxu0
      %v3053 = vadd.f32 0.0, %v3052
      %3054 = vmatmul.bf16.gmra.mxu0 %v2974
      %v3055 = vpop.f32.mrf.mxu0
      %v3056 = vadd.f32 0.0, %v3055
      %v3057 = vpop.f32.mrf.mxu0
      %v3058 = vadd.f32 0.0, %v3057
      %3059 = vmatmul.bf16.gmra.mxu0 %v2977
      %v3060 = vpop.f32.mrf.mxu0
      %v3061 = vadd.f32 0.0, %v3060
      %v3062 = vpop.f32.mrf.mxu0
      %v3063 = vadd.f32 0.0, %v3062
      %3064 = vmatmul.bf16.gmra.mxu0 %v2980
      %v3065 = vpop.f32.mrf.mxu0
      %v3066 = vadd.f32 0.0, %v3065
      %v3067 = vpop.f32.mrf.mxu0
      %v3068 = vadd.f32 0.0, %v3067
      %3069 = vmatmul.bf16.gmra.mxu0 %v2983
      %v3070 = vpop.f32.mrf.mxu0
      %v3071 = vadd.f32 0.0, %v3070
      %v3072 = vpop.f32.mrf.mxu0
      %v3073 = vadd.f32 0.0, %v3072
      %3074 = vmatmul.bf16.gmra.mxu0 %v2986
      %v3075 = vpop.f32.mrf.mxu0
      %v3076 = vadd.f32 0.0, %v3075
      %v3077 = vpop.f32.mrf.mxu0
      %v3078 = vadd.f32 0.0, %v3077
      %3079 = vdwg.mxu0
      %v3080 = vadd.f32 %v2733, %v3001
      %v3081 = vadd.f32 %v2735, %v3003
      %v3082 = vadd.f32 %v2738, %v3006
      %v3083 = vadd.f32 %v2740, %v3008
      %v3084 = vadd.f32 %v2743, %v3011
      %v3085 = vadd.f32 %v2745, %v3013
      %v3086 = vadd.f32 %v2748, %v3016
      %v3087 = vadd.f32 %v2750, %v3018
      %v3088 = vadd.f32 %v2753, %v3021
      %v3089 = vadd.f32 %v2755, %v3023
      %v3090 = vadd.f32 %v2758, %v3026
      %v3091 = vadd.f32 %v2760, %v3028
      %v3092 = vadd.f32 %v2763, %v3031
      %v3093 = vadd.f32 %v2765, %v3033
      %v3094 = vadd.f32 %v2768, %v3036
      %v3095 = vadd.f32 %v2770, %v3038
      %v3096 = vadd.f32 %v2773, %v3041
      %v3097 = vadd.f32 %v2775, %v3043
      %v3098 = vadd.f32 %v2778, %v3046
      %v3099 = vadd.f32 %v2780, %v3048
      %v3100 = vadd.f32 %v2783, %v3051
      %v3101 = vadd.f32 %v2785, %v3053
      %v3102 = vadd.f32 %v2788, %v3056
      %v3103 = vadd.f32 %v2790, %v3058
      %v3104 = vadd.f32 %v2793, %v3061
      %v3105 = vadd.f32 %v2795, %v3063
      %v3106 = vadd.f32 %v2798, %v3066
      %v3107 = vadd.f32 %v2800, %v3068
      %v3108 = vadd.f32 %v2803, %v3071
      %v3109 = vadd.f32 %v2805, %v3073
      %v3110 = vadd.f32 %v2808, %v3076
      %v3111 = vadd.f32 %v2810, %v3078
      %v3112 = vpack.c.bf16 %v2325, %v2324
      %v3114 = vsel %vm2197, %v3112, 0
      %v3117 = vsel %vm2579, %v2333, 0
      %3119 = vmatpush.bf16.msra.mxu0 0
      %3120 = vmatpush.bf16.msra.mxu0 0
      %3121 = vmatpush.bf16.msra.mxu0 0
      %3122 = vmatpush.bf16.msra.mxu0 0
      %3123 = vmatpush.bf16.msra.mxu0 0
      %3124 = vmatpush.bf16.msra.mxu0 0
      %3125 = vmatpush.bf16.msra.mxu0 0
      %3126 = vmatpush.bf16.msra.mxu0 %v3117
      %3127 = vmatmul.bf16.gmra.mxu0 %v2676
      %v3128 = vpop.f32.mrf.mxu0
      %v3129 = vadd.f32 0.0, %v3128
      %v3130 = vpop.f32.mrf.mxu0
      %v3131 = vadd.f32 0.0, %v3130
      %3132 = vmatmul.bf16.gmra.mxu0 %v2679
      %v3133 = vpop.f32.mrf.mxu0
      %v3134 = vadd.f32 0.0, %v3133
      %v3135 = vpop.f32.mrf.mxu0
      %v3136 = vadd.f32 0.0, %v3135
      %3137 = vmatmul.bf16.gmra.mxu0 %v2682
      %v3138 = vpop.f32.mrf.mxu0
      %v3139 = vadd.f32 0.0, %v3138
      %v3140 = vpop.f32.mrf.mxu0
      %v3141 = vadd.f32 0.0, %v3140
      %3142 = vmatmul.bf16.gmra.mxu0 %v2685
      %v3143 = vpop.f32.mrf.mxu0
      %v3144 = vadd.f32 0.0, %v3143
      %v3145 = vpop.f32.mrf.mxu0
      %v3146 = vadd.f32 0.0, %v3145
      %3147 = vmatmul.bf16.gmra.mxu0 %v2688
      %v3148 = vpop.f32.mrf.mxu0
      %v3149 = vadd.f32 0.0, %v3148
      %v3150 = vpop.f32.mrf.mxu0
      %v3151 = vadd.f32 0.0, %v3150
      %3152 = vmatmul.bf16.gmra.mxu0 %v2691
      %v3153 = vpop.f32.mrf.mxu0
      %v3154 = vadd.f32 0.0, %v3153
      %v3155 = vpop.f32.mrf.mxu0
      %v3156 = vadd.f32 0.0, %v3155
      %3157 = vmatmul.bf16.gmra.mxu0 %v2694
      %v3158 = vpop.f32.mrf.mxu0
      %v3159 = vadd.f32 0.0, %v3158
      %v3160 = vpop.f32.mrf.mxu0
      %v3161 = vadd.f32 0.0, %v3160
      %3162 = vmatmul.bf16.gmra.mxu0 %v2697
      %v3163 = vpop.f32.mrf.mxu0
      %v3164 = vadd.f32 0.0, %v3163
      %v3165 = vpop.f32.mrf.mxu0
      %v3166 = vadd.f32 0.0, %v3165
      %3167 = vmatmul.bf16.gmra.mxu0 %v2700
      %v3168 = vpop.f32.mrf.mxu0
      %v3169 = vadd.f32 0.0, %v3168
      %v3170 = vpop.f32.mrf.mxu0
      %v3171 = vadd.f32 0.0, %v3170
      %3172 = vmatmul.bf16.gmra.mxu0 %v2703
      %v3173 = vpop.f32.mrf.mxu0
      %v3174 = vadd.f32 0.0, %v3173
      %v3175 = vpop.f32.mrf.mxu0
      %v3176 = vadd.f32 0.0, %v3175
      %3177 = vmatmul.bf16.gmra.mxu0 %v2706
      %v3178 = vpop.f32.mrf.mxu0
      %v3179 = vadd.f32 0.0, %v3178
      %v3180 = vpop.f32.mrf.mxu0
      %v3181 = vadd.f32 0.0, %v3180
      %3182 = vmatmul.bf16.gmra.mxu0 %v2709
      %v3183 = vpop.f32.mrf.mxu0
      %v3184 = vadd.f32 0.0, %v3183
      %v3185 = vpop.f32.mrf.mxu0
      %v3186 = vadd.f32 0.0, %v3185
      %3187 = vmatmul.bf16.gmra.mxu0 %v2712
      %v3188 = vpop.f32.mrf.mxu0
      %v3189 = vadd.f32 0.0, %v3188
      %v3190 = vpop.f32.mrf.mxu0
      %v3191 = vadd.f32 0.0, %v3190
      %3192 = vmatmul.bf16.gmra.mxu0 %v2715
      %v3193 = vpop.f32.mrf.mxu0
      %v3194 = vadd.f32 0.0, %v3193
      %v3195 = vpop.f32.mrf.mxu0
      %v3196 = vadd.f32 0.0, %v3195
      %3197 = vmatmul.bf16.gmra.mxu0 %v2718
      %v3198 = vpop.f32.mrf.mxu0
      %v3199 = vadd.f32 0.0, %v3198
      %v3200 = vpop.f32.mrf.mxu0
      %v3201 = vadd.f32 0.0, %v3200
      %3202 = vmatmul.bf16.gmra.mxu0 %v3114
      %v3203 = vpop.f32.mrf.mxu0
      %v3204 = vadd.f32 0.0, %v3203
      %v3205 = vpop.f32.mrf.mxu0
      %v3206 = vadd.f32 0.0, %v3205
      %3207 = vdwg.mxu0
      %v3208 = vadd.f32 %v3080, %v3129
      %v3209 = vadd.f32 %v3081, %v3131
      %v3210 = vadd.f32 %v3082, %v3134
      %v3211 = vadd.f32 %v3083, %v3136
      %v3212 = vadd.f32 %v3084, %v3139
      %v3213 = vadd.f32 %v3085, %v3141
      %v3214 = vadd.f32 %v3086, %v3144
      %v3215 = vadd.f32 %v3087, %v3146
      %v3216 = vadd.f32 %v3088, %v3149
      %v3217 = vadd.f32 %v3089, %v3151
      %v3218 = vadd.f32 %v3090, %v3154
      %v3219 = vadd.f32 %v3091, %v3156
      %v3220 = vadd.f32 %v3092, %v3159
      %v3221 = vadd.f32 %v3093, %v3161
      %v3222 = vadd.f32 %v3094, %v3164
      %v3223 = vadd.f32 %v3095, %v3166
      %v3224 = vadd.f32 %v3096, %v3169
      %v3225 = vadd.f32 %v3097, %v3171
      %v3226 = vadd.f32 %v3098, %v3174
      %v3227 = vadd.f32 %v3099, %v3176
      %v3228 = vadd.f32 %v3100, %v3179
      %v3229 = vadd.f32 %v3101, %v3181
      %v3230 = vadd.f32 %v3102, %v3184
      %v3231 = vadd.f32 %v3103, %v3186
      %v3232 = vadd.f32 %v3104, %v3189
      %v3233 = vadd.f32 %v3105, %v3191
      %v3234 = vadd.f32 %v3106, %v3194
      %v3235 = vadd.f32 %v3107, %v3196
      %v3236 = vadd.f32 %v3108, %v3199
      %v3237 = vadd.f32 %v3109, %v3201
      %v3238 = vadd.f32 %v3110, %v3204
      %v3239 = vadd.f32 %v3111, %v3206
      %v3243 = vrot.slane %v2324, 1
      %v3244 = vrot.slane %v2325, 1
      %v3245 = vsel %vm600, %v3243, %v3244
      %v3246 = vrot.slane %v2326, 1
      %v3247 = vsel %vm600, %v3244, %v3246
      %v3250 = vpack.c.bf16 %v3247, %v3245
      %v3252 = vsel %vm2197, %v3250, 0
      %v3255 = vsel %vm2579, %v2334, 0
      %3257 = vmatpush.bf16.msra.mxu0 0
      %3258 = vmatpush.bf16.msra.mxu0 0
      %3259 = vmatpush.bf16.msra.mxu0 0
      %3260 = vmatpush.bf16.msra.mxu0 0
      %3261 = vmatpush.bf16.msra.mxu0 0
      %3262 = vmatpush.bf16.msra.mxu0 0
      %3263 = vmatpush.bf16.msra.mxu0 0
      %3264 = vmatpush.bf16.msra.mxu0 %v3255
      %3265 = vmatmul.bf16.gmra.mxu0 %v2535
      %v3266 = vpop.f32.mrf.mxu0
      %v3267 = vadd.f32 0.0, %v3266
      %v3268 = vpop.f32.mrf.mxu0
      %v3269 = vadd.f32 0.0, %v3268
      %3270 = vmatmul.bf16.gmra.mxu0 %v2538
      %v3271 = vpop.f32.mrf.mxu0
      %v3272 = vadd.f32 0.0, %v3271
      %v3273 = vpop.f32.mrf.mxu0
      %v3274 = vadd.f32 0.0, %v3273
      %3275 = vmatmul.bf16.gmra.mxu0 %v2541
      %v3276 = vpop.f32.mrf.mxu0
      %v3277 = vadd.f32 0.0, %v3276
      %v3278 = vpop.f32.mrf.mxu0
      %v3279 = vadd.f32 0.0, %v3278
      %3280 = vmatmul.bf16.gmra.mxu0 %v2544
      %v3281 = vpop.f32.mrf.mxu0
      %v3282 = vadd.f32 0.0, %v3281
      %v3283 = vpop.f32.mrf.mxu0
      %v3284 = vadd.f32 0.0, %v3283
      %3285 = vmatmul.bf16.gmra.mxu0 %v2547
      %v3286 = vpop.f32.mrf.mxu0
      %v3287 = vadd.f32 0.0, %v3286
      %v3288 = vpop.f32.mrf.mxu0
      %v3289 = vadd.f32 0.0, %v3288
      %3290 = vmatmul.bf16.gmra.mxu0 %v2550
      %v3291 = vpop.f32.mrf.mxu0
      %v3292 = vadd.f32 0.0, %v3291
      %v3293 = vpop.f32.mrf.mxu0
      %v3294 = vadd.f32 0.0, %v3293
      %3295 = vmatmul.bf16.gmra.mxu0 %v2553
      %v3296 = vpop.f32.mrf.mxu0
      %v3297 = vadd.f32 0.0, %v3296
      %v3298 = vpop.f32.mrf.mxu0
      %v3299 = vadd.f32 0.0, %v3298
      %3300 = vmatmul.bf16.gmra.mxu0 %v2556
      %v3301 = vpop.f32.mrf.mxu0
      %v3302 = vadd.f32 0.0, %v3301
      %v3303 = vpop.f32.mrf.mxu0
      %v3304 = vadd.f32 0.0, %v3303
      %3305 = vmatmul.bf16.gmra.mxu0 %v2559
      %v3306 = vpop.f32.mrf.mxu0
      %v3307 = vadd.f32 0.0, %v3306
      %v3308 = vpop.f32.mrf.mxu0
      %v3309 = vadd.f32 0.0, %v3308
      %3310 = vmatmul.bf16.gmra.mxu0 %v2562
      %v3311 = vpop.f32.mrf.mxu0
      %v3312 = vadd.f32 0.0, %v3311
      %v3313 = vpop.f32.mrf.mxu0
      %v3314 = vadd.f32 0.0, %v3313
      %3315 = vmatmul.bf16.gmra.mxu0 %v2565
      %v3316 = vpop.f32.mrf.mxu0
      %v3317 = vadd.f32 0.0, %v3316
      %v3318 = vpop.f32.mrf.mxu0
      %v3319 = vadd.f32 0.0, %v3318
      %3320 = vmatmul.bf16.gmra.mxu0 %v2568
      %v3321 = vpop.f32.mrf.mxu0
      %v3322 = vadd.f32 0.0, %v3321
      %v3323 = vpop.f32.mrf.mxu0
      %v3324 = vadd.f32 0.0, %v3323
      %3325 = vmatmul.bf16.gmra.mxu0 %v2571
      %v3326 = vpop.f32.mrf.mxu0
      %v3327 = vadd.f32 0.0, %v3326
      %v3328 = vpop.f32.mrf.mxu0
      %v3329 = vadd.f32 0.0, %v3328
      %3330 = vmatmul.bf16.gmra.mxu0 %v2574
      %v3331 = vpop.f32.mrf.mxu0
      %v3332 = vadd.f32 0.0, %v3331
      %v3333 = vpop.f32.mrf.mxu0
      %v3334 = vadd.f32 0.0, %v3333
      %3335 = vmatmul.bf16.gmra.mxu0 %v2577
      %v3336 = vpop.f32.mrf.mxu0
      %v3337 = vadd.f32 0.0, %v3336
      %v3338 = vpop.f32.mrf.mxu0
      %v3339 = vadd.f32 0.0, %v3338
      %3340 = vmatmul.bf16.gmra.mxu0 %v3252
      %v3341 = vpop.f32.mrf.mxu0
      %v3342 = vadd.f32 0.0, %v3341
      %v3343 = vpop.f32.mrf.mxu0
      %v3344 = vadd.f32 0.0, %v3343
      %3345 = vdwg.mxu0
      %v3346 = vadd.f32 %v3208, %v3267
      %v3347 = vadd.f32 %v3209, %v3269
      %v3348 = vadd.f32 %v3210, %v3272
      %v3349 = vadd.f32 %v3211, %v3274
      %v3350 = vadd.f32 %v3212, %v3277
      %v3351 = vadd.f32 %v3213, %v3279
      %v3352 = vadd.f32 %v3214, %v3282
      %v3353 = vadd.f32 %v3215, %v3284
      %v3354 = vadd.f32 %v3216, %v3287
      %v3355 = vadd.f32 %v3217, %v3289
      %v3356 = vadd.f32 %v3218, %v3292
      %v3357 = vadd.f32 %v3219, %v3294
      %v3358 = vadd.f32 %v3220, %v3297
      %v3359 = vadd.f32 %v3221, %v3299
      %v3360 = vadd.f32 %v3222, %v3302
      %v3361 = vadd.f32 %v3223, %v3304
      %v3362 = vadd.f32 %v3224, %v3307
      %v3363 = vadd.f32 %v3225, %v3309
      %v3364 = vadd.f32 %v3226, %v3312
      %v3365 = vadd.f32 %v3227, %v3314
      %v3366 = vadd.f32 %v3228, %v3317
      %v3367 = vadd.f32 %v3229, %v3319
      %v3368 = vadd.f32 %v3230, %v3322
      %v3369 = vadd.f32 %v3231, %v3324
      %v3370 = vadd.f32 %v3232, %v3327
      %v3371 = vadd.f32 %v3233, %v3329
      %v3372 = vadd.f32 %v3234, %v3332
      %v3373 = vadd.f32 %v3235, %v3334
      %v3374 = vadd.f32 %v3236, %v3337
      %v3375 = vadd.f32 %v3237, %v3339
      %v3376 = vadd.f32 %v3238, %v3342
      %v3377 = vadd.f32 %v3239, %v3344
      %v3378 = vrot.slane %v2324, 2
      %v3379 = vrot.slane %v2325, 2
      %v3380 = vsel %vm1014, %v3378, %v3379
      %v3381 = vrot.slane %v2326, 2
      %v3382 = vsel %vm1014, %v3379, %v3381
      %v3385 = vpack.c.bf16 %v3382, %v3380
      %v3387 = vsel %vm2197, %v3385, 0
      %v3390 = vsel %vm2579, %v2335, 0
      %3392 = vmatpush.bf16.msra.mxu0 0
      %3393 = vmatpush.bf16.msra.mxu0 0
      %3394 = vmatpush.bf16.msra.mxu0 0
      %3395 = vmatpush.bf16.msra.mxu0 0
      %3396 = vmatpush.bf16.msra.mxu0 0
      %3397 = vmatpush.bf16.msra.mxu0 0
      %3398 = vmatpush.bf16.msra.mxu0 0
      %3399 = vmatpush.bf16.msra.mxu0 %v3390
      %3400 = vmatmul.bf16.gmra.mxu0 %v2944
      %v3401 = vpop.f32.mrf.mxu0
      %v3402 = vadd.f32 0.0, %v3401
      %v3403 = vpop.f32.mrf.mxu0
      %v3404 = vadd.f32 0.0, %v3403
      %3405 = vmatmul.bf16.gmra.mxu0 %v2947
      %v3406 = vpop.f32.mrf.mxu0
      %v3407 = vadd.f32 0.0, %v3406
      %v3408 = vpop.f32.mrf.mxu0
      %v3409 = vadd.f32 0.0, %v3408
      %3410 = vmatmul.bf16.gmra.mxu0 %v2950
      %v3411 = vpop.f32.mrf.mxu0
      %v3412 = vadd.f32 0.0, %v3411
      %v3413 = vpop.f32.mrf.mxu0
      %v3414 = vadd.f32 0.0, %v3413
      %3415 = vmatmul.bf16.gmra.mxu0 %v2953
      %v3416 = vpop.f32.mrf.mxu0
      %v3417 = vadd.f32 0.0, %v3416
      %v3418 = vpop.f32.mrf.mxu0
      %v3419 = vadd.f32 0.0, %v3418
      %3420 = vmatmul.bf16.gmra.mxu0 %v2956
      %v3421 = vpop.f32.mrf.mxu0
      %v3422 = vadd.f32 0.0, %v3421
      %v3423 = vpop.f32.mrf.mxu0
      %v3424 = vadd.f32 0.0, %v3423
      %3425 = vmatmul.bf16.gmra.mxu0 %v2959
      %v3426 = vpop.f32.mrf.mxu0
      %v3427 = vadd.f32 0.0, %v3426
      %v3428 = vpop.f32.mrf.mxu0
      %v3429 = vadd.f32 0.0, %v3428
      %3430 = vmatmul.bf16.gmra.mxu0 %v2962
      %v3431 = vpop.f32.mrf.mxu0
      %v3432 = vadd.f32 0.0, %v3431
      %v3433 = vpop.f32.mrf.mxu0
      %v3434 = vadd.f32 0.0, %v3433
      %3435 = vmatmul.bf16.gmra.mxu0 %v2965
      %v3436 = vpop.f32.mrf.mxu0
      %v3437 = vadd.f32 0.0, %v3436
      %v3438 = vpop.f32.mrf.mxu0
      %v3439 = vadd.f32 0.0, %v3438
      %3440 = vmatmul.bf16.gmra.mxu0 %v2968
      %v3441 = vpop.f32.mrf.mxu0
      %v3442 = vadd.f32 0.0, %v3441
      %v3443 = vpop.f32.mrf.mxu0
      %v3444 = vadd.f32 0.0, %v3443
      %3445 = vmatmul.bf16.gmra.mxu0 %v2971
      %v3446 = vpop.f32.mrf.mxu0
      %v3447 = vadd.f32 0.0, %v3446
      %v3448 = vpop.f32.mrf.mxu0
      %v3449 = vadd.f32 0.0, %v3448
      %3450 = vmatmul.bf16.gmra.mxu0 %v2974
      %v3451 = vpop.f32.mrf.mxu0
      %v3452 = vadd.f32 0.0, %v3451
      %v3453 = vpop.f32.mrf.mxu0
      %v3454 = vadd.f32 0.0, %v3453
      %3455 = vmatmul.bf16.gmra.mxu0 %v2977
      %v3456 = vpop.f32.mrf.mxu0
      %v3457 = vadd.f32 0.0, %v3456
      %v3458 = vpop.f32.mrf.mxu0
      %v3459 = vadd.f32 0.0, %v3458
      %3460 = vmatmul.bf16.gmra.mxu0 %v2980
      %v3461 = vpop.f32.mrf.mxu0
      %v3462 = vadd.f32 0.0, %v3461
      %v3463 = vpop.f32.mrf.mxu0
      %v3464 = vadd.f32 0.0, %v3463
      %3465 = vmatmul.bf16.gmra.mxu0 %v2983
      %v3466 = vpop.f32.mrf.mxu0
      %v3467 = vadd.f32 0.0, %v3466
      %v3468 = vpop.f32.mrf.mxu0
      %v3469 = vadd.f32 0.0, %v3468
      %3470 = vmatmul.bf16.gmra.mxu0 %v2986
      %v3471 = vpop.f32.mrf.mxu0
      %v3472 = vadd.f32 0.0, %v3471
      %v3473 = vpop.f32.mrf.mxu0
      %v3474 = vadd.f32 0.0, %v3473
      %3475 = vmatmul.bf16.gmra.mxu0 %v3387
      %v3476 = vpop.f32.mrf.mxu0
      %v3477 = vadd.f32 0.0, %v3476
      %v3478 = vpop.f32.mrf.mxu0
      %v3479 = vadd.f32 0.0, %v3478
      %3480 = vdwg.mxu0
      %v3481 = vadd.f32 %v3346, %v3402
      %v3482 = vadd.f32 %v3347, %v3404
      %v3483 = vadd.f32 %v3348, %v3407
      %v3484 = vadd.f32 %v3349, %v3409
      %v3485 = vadd.f32 %v3350, %v3412
      %v3486 = vadd.f32 %v3351, %v3414
      %v3487 = vadd.f32 %v3352, %v3417
      %v3488 = vadd.f32 %v3353, %v3419
      %v3489 = vadd.f32 %v3354, %v3422
      %v3490 = vadd.f32 %v3355, %v3424
      %v3491 = vadd.f32 %v3356, %v3427
      %v3492 = vadd.f32 %v3357, %v3429
      %v3493 = vadd.f32 %v3358, %v3432
      %v3494 = vadd.f32 %v3359, %v3434
      %v3495 = vadd.f32 %v3360, %v3437
      %v3496 = vadd.f32 %v3361, %v3439
      %v3497 = vadd.f32 %v3362, %v3442
      %v3498 = vadd.f32 %v3363, %v3444
      %v3499 = vadd.f32 %v3364, %v3447
      %v3500 = vadd.f32 %v3365, %v3449
      %v3501 = vadd.f32 %v3366, %v3452
      %v3502 = vadd.f32 %v3367, %v3454
      %v3503 = vadd.f32 %v3368, %v3457
      %v3504 = vadd.f32 %v3369, %v3459
      %v3505 = vadd.f32 %v3370, %v3462
      %v3506 = vadd.f32 %v3371, %v3464
      %v3507 = vadd.f32 %v3372, %v3467
      %v3508 = vadd.f32 %v3373, %v3469
      %v3509 = vadd.f32 %v3374, %v3472
      %v3510 = vadd.f32 %v3375, %v3474
      %v3511 = vadd.f32 %v3376, %v3477
      %v3512 = vadd.f32 %v3377, %v3479
      %v3513 = vpack.c.bf16 %v2328, %v2327
      %v3515 = vsel %vm2197, %v3513, 0
      %v3518 = vsel %vm2579, %v2336, 0
      %3520 = vmatpush.bf16.msra.mxu0 0
      %3521 = vmatpush.bf16.msra.mxu0 0
      %3522 = vmatpush.bf16.msra.mxu0 0
      %3523 = vmatpush.bf16.msra.mxu0 0
      %3524 = vmatpush.bf16.msra.mxu0 0
      %3525 = vmatpush.bf16.msra.mxu0 0
      %3526 = vmatpush.bf16.msra.mxu0 0
      %3527 = vmatpush.bf16.msra.mxu0 %v3518
      %3528 = vmatmul.bf16.gmra.mxu0 %v2679
      %v3529 = vpop.f32.mrf.mxu0
      %v3530 = vadd.f32 0.0, %v3529
      %v3531 = vpop.f32.mrf.mxu0
      %v3532 = vadd.f32 0.0, %v3531
      %3533 = vmatmul.bf16.gmra.mxu0 %v2682
      %v3534 = vpop.f32.mrf.mxu0
      %v3535 = vadd.f32 0.0, %v3534
      %v3536 = vpop.f32.mrf.mxu0
      %v3537 = vadd.f32 0.0, %v3536
      %3538 = vmatmul.bf16.gmra.mxu0 %v2685
      %v3539 = vpop.f32.mrf.mxu0
      %v3540 = vadd.f32 0.0, %v3539
      %v3541 = vpop.f32.mrf.mxu0
      %v3542 = vadd.f32 0.0, %v3541
      %3543 = vmatmul.bf16.gmra.mxu0 %v2688
      %v3544 = vpop.f32.mrf.mxu0
      %v3545 = vadd.f32 0.0, %v3544
      %v3546 = vpop.f32.mrf.mxu0
      %v3547 = vadd.f32 0.0, %v3546
      %3548 = vmatmul.bf16.gmra.mxu0 %v2691
      %v3549 = vpop.f32.mrf.mxu0
      %v3550 = vadd.f32 0.0, %v3549
      %v3551 = vpop.f32.mrf.mxu0
      %v3552 = vadd.f32 0.0, %v3551
      %3553 = vmatmul.bf16.gmra.mxu0 %v2694
      %v3554 = vpop.f32.mrf.mxu0
      %v3555 = vadd.f32 0.0, %v3554
      %v3556 = vpop.f32.mrf.mxu0
      %v3557 = vadd.f32 0.0, %v3556
      %3558 = vmatmul.bf16.gmra.mxu0 %v2697
      %v3559 = vpop.f32.mrf.mxu0
      %v3560 = vadd.f32 0.0, %v3559
      %v3561 = vpop.f32.mrf.mxu0
      %v3562 = vadd.f32 0.0, %v3561
      %3563 = vmatmul.bf16.gmra.mxu0 %v2700
      %v3564 = vpop.f32.mrf.mxu0
      %v3565 = vadd.f32 0.0, %v3564
      %v3566 = vpop.f32.mrf.mxu0
      %v3567 = vadd.f32 0.0, %v3566
      %3568 = vmatmul.bf16.gmra.mxu0 %v2703
      %v3569 = vpop.f32.mrf.mxu0
      %v3570 = vadd.f32 0.0, %v3569
      %v3571 = vpop.f32.mrf.mxu0
      %v3572 = vadd.f32 0.0, %v3571
      %3573 = vmatmul.bf16.gmra.mxu0 %v2706
      %v3574 = vpop.f32.mrf.mxu0
      %v3575 = vadd.f32 0.0, %v3574
      %v3576 = vpop.f32.mrf.mxu0
      %v3577 = vadd.f32 0.0, %v3576
      %3578 = vmatmul.bf16.gmra.mxu0 %v2709
      %v3579 = vpop.f32.mrf.mxu0
      %v3580 = vadd.f32 0.0, %v3579
      %v3581 = vpop.f32.mrf.mxu0
      %v3582 = vadd.f32 0.0, %v3581
      %3583 = vmatmul.bf16.gmra.mxu0 %v2712
      %v3584 = vpop.f32.mrf.mxu0
      %v3585 = vadd.f32 0.0, %v3584
      %v3586 = vpop.f32.mrf.mxu0
      %v3587 = vadd.f32 0.0, %v3586
      %3588 = vmatmul.bf16.gmra.mxu0 %v2715
      %v3589 = vpop.f32.mrf.mxu0
      %v3590 = vadd.f32 0.0, %v3589
      %v3591 = vpop.f32.mrf.mxu0
      %v3592 = vadd.f32 0.0, %v3591
      %3593 = vmatmul.bf16.gmra.mxu0 %v2718
      %v3594 = vpop.f32.mrf.mxu0
      %v3595 = vadd.f32 0.0, %v3594
      %v3596 = vpop.f32.mrf.mxu0
      %v3597 = vadd.f32 0.0, %v3596
      %3598 = vmatmul.bf16.gmra.mxu0 %v3114
      %v3599 = vpop.f32.mrf.mxu0
      %v3600 = vadd.f32 0.0, %v3599
      %v3601 = vpop.f32.mrf.mxu0
      %v3602 = vadd.f32 0.0, %v3601
      %3603 = vmatmul.bf16.gmra.mxu0 %v3515
      %v3604 = vpop.f32.mrf.mxu0
      %v3605 = vadd.f32 0.0, %v3604
      %v3606 = vpop.f32.mrf.mxu0
      %v3607 = vadd.f32 0.0, %v3606
      %3608 = vdwg.mxu0
      %v3609 = vadd.f32 %v3481, %v3530
      %v3610 = vadd.f32 %v3482, %v3532
      %v3611 = vadd.f32 %v3483, %v3535
      %v3612 = vadd.f32 %v3484, %v3537
      %v3613 = vadd.f32 %v3485, %v3540
      %v3614 = vadd.f32 %v3486, %v3542
      %v3615 = vadd.f32 %v3487, %v3545
      %v3616 = vadd.f32 %v3488, %v3547
      %v3617 = vadd.f32 %v3489, %v3550
      %v3618 = vadd.f32 %v3490, %v3552
      %v3619 = vadd.f32 %v3491, %v3555
      %v3620 = vadd.f32 %v3492, %v3557
      %v3621 = vadd.f32 %v3493, %v3560
      %v3622 = vadd.f32 %v3494, %v3562
      %v3623 = vadd.f32 %v3495, %v3565
      %v3624 = vadd.f32 %v3496, %v3567
      %v3625 = vadd.f32 %v3497, %v3570
      %v3626 = vadd.f32 %v3498, %v3572
      %v3627 = vadd.f32 %v3499, %v3575
      %v3628 = vadd.f32 %v3500, %v3577
      %v3629 = vadd.f32 %v3501, %v3580
      %v3630 = vadd.f32 %v3502, %v3582
      %v3631 = vadd.f32 %v3503, %v3585
      %v3632 = vadd.f32 %v3504, %v3587
      %v3633 = vadd.f32 %v3505, %v3590
      %v3634 = vadd.f32 %v3506, %v3592
      %v3635 = vadd.f32 %v3507, %v3595
      %v3636 = vadd.f32 %v3508, %v3597
      %v3637 = vadd.f32 %v3509, %v3600
      %v3638 = vadd.f32 %v3510, %v3602
      %v3639 = vadd.f32 %v3511, %v3605
      %v3640 = vadd.f32 %v3512, %v3607
      %v3644 = vrot.slane %v2327, 1
      %v3645 = vrot.slane %v2328, 1
      %v3646 = vsel %vm600, %v3644, %v3645
      %v3647 = vrot.slane %v2329, 1
      %v3648 = vsel %vm600, %v3645, %v3647
      %v3651 = vpack.c.bf16 %v3648, %v3646
      %v3653 = vsel %vm2197, %v3651, 0
      %v3656 = vsel %vm2579, %v2337, 0
      %3658 = vmatpush.bf16.msra.mxu0 0
      %3659 = vmatpush.bf16.msra.mxu0 0
      %3660 = vmatpush.bf16.msra.mxu0 0
      %3661 = vmatpush.bf16.msra.mxu0 0
      %3662 = vmatpush.bf16.msra.mxu0 0
      %3663 = vmatpush.bf16.msra.mxu0 0
      %3664 = vmatpush.bf16.msra.mxu0 0
      %3665 = vmatpush.bf16.msra.mxu0 %v3656
      %3666 = vmatmul.bf16.gmra.mxu0 %v2538
      %v3667 = vpop.f32.mrf.mxu0
      %v3668 = vadd.f32 0.0, %v3667
      %v3669 = vpop.f32.mrf.mxu0
      %v3670 = vadd.f32 0.0, %v3669
      %3671 = vmatmul.bf16.gmra.mxu0 %v2541
      %v3672 = vpop.f32.mrf.mxu0
      %v3673 = vadd.f32 0.0, %v3672
      %v3674 = vpop.f32.mrf.mxu0
      %v3675 = vadd.f32 0.0, %v3674
      %3676 = vmatmul.bf16.gmra.mxu0 %v2544
      %v3677 = vpop.f32.mrf.mxu0
      %v3678 = vadd.f32 0.0, %v3677
      %v3679 = vpop.f32.mrf.mxu0
      %v3680 = vadd.f32 0.0, %v3679
      %3681 = vmatmul.bf16.gmra.mxu0 %v2547
      %v3682 = vpop.f32.mrf.mxu0
      %v3683 = vadd.f32 0.0, %v3682
      %v3684 = vpop.f32.mrf.mxu0
      %v3685 = vadd.f32 0.0, %v3684
      %3686 = vmatmul.bf16.gmra.mxu0 %v2550
      %v3687 = vpop.f32.mrf.mxu0
      %v3688 = vadd.f32 0.0, %v3687
      %v3689 = vpop.f32.mrf.mxu0
      %v3690 = vadd.f32 0.0, %v3689
      %3691 = vmatmul.bf16.gmra.mxu0 %v2553
      %v3692 = vpop.f32.mrf.mxu0
      %v3693 = vadd.f32 0.0, %v3692
      %v3694 = vpop.f32.mrf.mxu0
      %v3695 = vadd.f32 0.0, %v3694
      %3696 = vmatmul.bf16.gmra.mxu0 %v2556
      %v3697 = vpop.f32.mrf.mxu0
      %v3698 = vadd.f32 0.0, %v3697
      %v3699 = vpop.f32.mrf.mxu0
      %v3700 = vadd.f32 0.0, %v3699
      %3701 = vmatmul.bf16.gmra.mxu0 %v2559
      %v3702 = vpop.f32.mrf.mxu0
      %v3703 = vadd.f32 0.0, %v3702
      %v3704 = vpop.f32.mrf.mxu0
      %v3705 = vadd.f32 0.0, %v3704
      %3706 = vmatmul.bf16.gmra.mxu0 %v2562
      %v3707 = vpop.f32.mrf.mxu0
      %v3708 = vadd.f32 0.0, %v3707
      %v3709 = vpop.f32.mrf.mxu0
      %v3710 = vadd.f32 0.0, %v3709
      %3711 = vmatmul.bf16.gmra.mxu0 %v2565
      %v3712 = vpop.f32.mrf.mxu0
      %v3713 = vadd.f32 0.0, %v3712
      %v3714 = vpop.f32.mrf.mxu0
      %v3715 = vadd.f32 0.0, %v3714
      %3716 = vmatmul.bf16.gmra.mxu0 %v2568
      %v3717 = vpop.f32.mrf.mxu0
      %v3718 = vadd.f32 0.0, %v3717
      %v3719 = vpop.f32.mrf.mxu0
      %v3720 = vadd.f32 0.0, %v3719
      %3721 = vmatmul.bf16.gmra.mxu0 %v2571
      %v3722 = vpop.f32.mrf.mxu0
      %v3723 = vadd.f32 0.0, %v3722
      %v3724 = vpop.f32.mrf.mxu0
      %v3725 = vadd.f32 0.0, %v3724
      %3726 = vmatmul.bf16.gmra.mxu0 %v2574
      %v3727 = vpop.f32.mrf.mxu0
      %v3728 = vadd.f32 0.0, %v3727
      %v3729 = vpop.f32.mrf.mxu0
      %v3730 = vadd.f32 0.0, %v3729
      %3731 = vmatmul.bf16.gmra.mxu0 %v2577
      %v3732 = vpop.f32.mrf.mxu0
      %v3733 = vadd.f32 0.0, %v3732
      %v3734 = vpop.f32.mrf.mxu0
      %v3735 = vadd.f32 0.0, %v3734
      %3736 = vmatmul.bf16.gmra.mxu0 %v3252
      %v3737 = vpop.f32.mrf.mxu0
      %v3738 = vadd.f32 0.0, %v3737
      %v3739 = vpop.f32.mrf.mxu0
      %v3740 = vadd.f32 0.0, %v3739
      %3741 = vmatmul.bf16.gmra.mxu0 %v3653
      %v3742 = vpop.f32.mrf.mxu0
      %v3743 = vadd.f32 0.0, %v3742
      %v3744 = vpop.f32.mrf.mxu0
      %v3745 = vadd.f32 0.0, %v3744
      %3746 = vdwg.mxu0
      %v3747 = vadd.f32 %v3609, %v3668
      %v3748 = vadd.f32 %v3610, %v3670
      %v3749 = vadd.f32 %v3611, %v3673
      %v3750 = vadd.f32 %v3612, %v3675
      %v3751 = vadd.f32 %v3613, %v3678
      %v3752 = vadd.f32 %v3614, %v3680
      %v3753 = vadd.f32 %v3615, %v3683
      %v3754 = vadd.f32 %v3616, %v3685
      %v3755 = vadd.f32 %v3617, %v3688
      %v3756 = vadd.f32 %v3618, %v3690
      %v3757 = vadd.f32 %v3619, %v3693
      %v3758 = vadd.f32 %v3620, %v3695
      %v3759 = vadd.f32 %v3621, %v3698
      %v3760 = vadd.f32 %v3622, %v3700
      %v3761 = vadd.f32 %v3623, %v3703
      %v3762 = vadd.f32 %v3624, %v3705
      %v3763 = vadd.f32 %v3625, %v3708
      %v3764 = vadd.f32 %v3626, %v3710
      %v3765 = vadd.f32 %v3627, %v3713
      %v3766 = vadd.f32 %v3628, %v3715
      %v3767 = vadd.f32 %v3629, %v3718
      %v3768 = vadd.f32 %v3630, %v3720
      %v3769 = vadd.f32 %v3631, %v3723
      %v3770 = vadd.f32 %v3632, %v3725
      %v3771 = vadd.f32 %v3633, %v3728
      %v3772 = vadd.f32 %v3634, %v3730
      %v3773 = vadd.f32 %v3635, %v3733
      %v3774 = vadd.f32 %v3636, %v3735
      %v3775 = vadd.f32 %v3637, %v3738
      %v3776 = vadd.f32 %v3638, %v3740
      %v3777 = vadd.f32 %v3639, %v3743
      %v3778 = vadd.f32 %v3640, %v3745
      %v3779 = vrot.slane %v2327, 2
      %v3780 = vrot.slane %v2328, 2
      %v3781 = vsel %vm1014, %v3779, %v3780
      %v3782 = vrot.slane %v2329, 2
      %v3783 = vsel %vm1014, %v3780, %v3782
      %v3786 = vpack.c.bf16 %v3783, %v3781
      %v3788 = vsel %vm2197, %v3786, 0
      %v3791 = vsel %vm2579, %v2338, 0
      %3793 = vmatpush.bf16.msra.mxu0 0
      %3794 = vmatpush.bf16.msra.mxu0 0
      %3795 = vmatpush.bf16.msra.mxu0 0
      %3796 = vmatpush.bf16.msra.mxu0 0
      %3797 = vmatpush.bf16.msra.mxu0 0
      %3798 = vmatpush.bf16.msra.mxu0 0
      %3799 = vmatpush.bf16.msra.mxu0 0
      %3800 = vmatpush.bf16.msra.mxu0 %v3791
      %3801 = vmatmul.bf16.gmra.mxu0 %v2947
      %v3802 = vpop.f32.mrf.mxu0
      %v3803 = vadd.f32 0.0, %v3802
      %v3804 = vpop.f32.mrf.mxu0
      %v3805 = vadd.f32 0.0, %v3804
      %3806 = vmatmul.bf16.gmra.mxu0 %v2950
      %v3807 = vpop.f32.mrf.mxu0
      %v3808 = vadd.f32 0.0, %v3807
      %v3809 = vpop.f32.mrf.mxu0
      %v3810 = vadd.f32 0.0, %v3809
      %3811 = vmatmul.bf16.gmra.mxu0 %v2953
      %v3812 = vpop.f32.mrf.mxu0
      %v3813 = vadd.f32 0.0, %v3812
      %v3814 = vpop.f32.mrf.mxu0
      %v3815 = vadd.f32 0.0, %v3814
      %3816 = vmatmul.bf16.gmra.mxu0 %v2956
      %v3817 = vpop.f32.mrf.mxu0
      %v3818 = vadd.f32 0.0, %v3817
      %v3819 = vpop.f32.mrf.mxu0
      %v3820 = vadd.f32 0.0, %v3819
      %3821 = vmatmul.bf16.gmra.mxu0 %v2959
      %v3822 = vpop.f32.mrf.mxu0
      %v3823 = vadd.f32 0.0, %v3822
      %v3824 = vpop.f32.mrf.mxu0
      %v3825 = vadd.f32 0.0, %v3824
      %3826 = vmatmul.bf16.gmra.mxu0 %v2962
      %v3827 = vpop.f32.mrf.mxu0
      %v3828 = vadd.f32 0.0, %v3827
      %v3829 = vpop.f32.mrf.mxu0
      %v3830 = vadd.f32 0.0, %v3829
      %3831 = vmatmul.bf16.gmra.mxu0 %v2965
      %v3832 = vpop.f32.mrf.mxu0
      %v3833 = vadd.f32 0.0, %v3832
      %v3834 = vpop.f32.mrf.mxu0
      %v3835 = vadd.f32 0.0, %v3834
      %3836 = vmatmul.bf16.gmra.mxu0 %v2968
      %v3837 = vpop.f32.mrf.mxu0
      %v3838 = vadd.f32 0.0, %v3837
      %v3839 = vpop.f32.mrf.mxu0
      %v3840 = vadd.f32 0.0, %v3839
      %3841 = vmatmul.bf16.gmra.mxu0 %v2971
      %v3842 = vpop.f32.mrf.mxu0
      %v3843 = vadd.f32 0.0, %v3842
      %v3844 = vpop.f32.mrf.mxu0
      %v3845 = vadd.f32 0.0, %v3844
      %3846 = vmatmul.bf16.gmra.mxu0 %v2974
      %v3847 = vpop.f32.mrf.mxu0
      %v3848 = vadd.f32 0.0, %v3847
      %v3849 = vpop.f32.mrf.mxu0
      %v3850 = vadd.f32 0.0, %v3849
      %3851 = vmatmul.bf16.gmra.mxu0 %v2977
      %v3852 = vpop.f32.mrf.mxu0
      %v3853 = vadd.f32 0.0, %v3852
      %v3854 = vpop.f32.mrf.mxu0
      %v3855 = vadd.f32 0.0, %v3854
      %3856 = vmatmul.bf16.gmra.mxu0 %v2980
      %v3857 = vpop.f32.mrf.mxu0
      %v3858 = vadd.f32 0.0, %v3857
      %v3859 = vpop.f32.mrf.mxu0
      %v3860 = vadd.f32 0.0, %v3859
      %3861 = vmatmul.bf16.gmra.mxu0 %v2983
      %v3862 = vpop.f32.mrf.mxu0
      %v3863 = vadd.f32 0.0, %v3862
      %v3864 = vpop.f32.mrf.mxu0
      %v3865 = vadd.f32 0.0, %v3864
      %3866 = vmatmul.bf16.gmra.mxu0 %v2986
      %v3867 = vpop.f32.mrf.mxu0
      %v3868 = vadd.f32 0.0, %v3867
      %v3869 = vpop.f32.mrf.mxu0
      %v3870 = vadd.f32 0.0, %v3869
      %3871 = vmatmul.bf16.gmra.mxu0 %v3387
      %v3872 = vpop.f32.mrf.mxu0
      %v3873 = vadd.f32 0.0, %v3872
      %v3874 = vpop.f32.mrf.mxu0
      %v3875 = vadd.f32 0.0, %v3874
      %3876 = vmatmul.bf16.gmra.mxu0 %v3788
      %v3877 = vpop.f32.mrf.mxu0
      %v3878 = vadd.f32 0.0, %v3877
      %v3879 = vpop.f32.mrf.mxu0
      %v3880 = vadd.f32 0.0, %v3879
      %3881 = vdwg.mxu0
      %v3882 = vadd.f32 %v3747, %v3803
      %v3883 = vadd.f32 %v3748, %v3805
      %v3884 = vadd.f32 %v3749, %v3808
      %v3885 = vadd.f32 %v3750, %v3810
      %v3886 = vadd.f32 %v3751, %v3813
      %v3887 = vadd.f32 %v3752, %v3815
      %v3888 = vadd.f32 %v3753, %v3818
      %v3889 = vadd.f32 %v3754, %v3820
      %v3890 = vadd.f32 %v3755, %v3823
      %v3891 = vadd.f32 %v3756, %v3825
      %v3892 = vadd.f32 %v3757, %v3828
      %v3893 = vadd.f32 %v3758, %v3830
      %v3894 = vadd.f32 %v3759, %v3833
      %v3895 = vadd.f32 %v3760, %v3835
      %v3896 = vadd.f32 %v3761, %v3838
      %v3897 = vadd.f32 %v3762, %v3840
      %v3898 = vadd.f32 %v3763, %v3843
      %v3899 = vadd.f32 %v3764, %v3845
      %v3900 = vadd.f32 %v3765, %v3848
      %v3901 = vadd.f32 %v3766, %v3850
      %v3902 = vadd.f32 %v3767, %v3853
      %v3903 = vadd.f32 %v3768, %v3855
      %v3904 = vadd.f32 %v3769, %v3858
      %v3905 = vadd.f32 %v3770, %v3860
      %v3906 = vadd.f32 %v3771, %v3863
      %v3907 = vadd.f32 %v3772, %v3865
      %v3908 = vadd.f32 %v3773, %v3868
      %v3909 = vadd.f32 %v3774, %v3870
      %v3910 = vadd.f32 %v3775, %v3873
      %v3911 = vadd.f32 %v3776, %v3875
      %v3912 = vadd.f32 %v3777, %v3878
      %v3913 = vadd.f32 %v3778, %v3880
      %v3914 = vld [vmem:[%s4] sm:$0x1]
      %v3916 = vperm.slane %v3914, 0
      %v3918 = vadd.f32 %v3882, %v3916
      %v3919 = vadd.f32 %v3883, %v3916
      %v3920 = vadd.f32 %v3884, %v3916
      %v3921 = vadd.f32 %v3885, %v3916
      %v3922 = vadd.f32 %v3886, %v3916
      %v3923 = vadd.f32 %v3887, %v3916
      %v3924 = vadd.f32 %v3888, %v3916
      %v3925 = vadd.f32 %v3889, %v3916
      %v3926 = vadd.f32 %v3890, %v3916
      %v3927 = vadd.f32 %v3891, %v3916
      %v3928 = vadd.f32 %v3892, %v3916
      %v3929 = vadd.f32 %v3893, %v3916
      %v3930 = vadd.f32 %v3894, %v3916
      %v3931 = vadd.f32 %v3895, %v3916
      %v3932 = vadd.f32 %v3896, %v3916
      %v3933 = vadd.f32 %v3897, %v3916
      %v3934 = vadd.f32 %v3898, %v3916
      %v3935 = vadd.f32 %v3899, %v3916
      %v3936 = vadd.f32 %v3900, %v3916
      %v3937 = vadd.f32 %v3901, %v3916
      %v3938 = vadd.f32 %v3902, %v3916
      %v3939 = vadd.f32 %v3903, %v3916
      %v3940 = vadd.f32 %v3904, %v3916
      %v3941 = vadd.f32 %v3905, %v3916
      %v3942 = vadd.f32 %v3906, %v3916
      %v3943 = vadd.f32 %v3907, %v3916
      %v3944 = vadd.f32 %v3908, %v3916
      %v3945 = vadd.f32 %v3909, %v3916
      %v3946 = vadd.f32 %v3910, %v3916
      %v3947 = vadd.f32 %v3911, %v3916
      %v3948 = vadd.f32 %v3912, %v3916
      %v3949 = vadd.f32 %v3913, %v3916
      %v3950 = vsel %vm2197, %v3918, 0.0
      %v3951 = vsel %vm2197, %v3919, 0.0
      %v3952 = vadd.f32 %v3950, %v3951
      %v3953 = vsel %vm2197, %v3920, 0.0
      %v3954 = vadd.f32 %v3952, %v3953
      %v3955 = vsel %vm2197, %v3921, 0.0
      %v3956 = vadd.f32 %v3954, %v3955
      %v3957 = vsel %vm2197, %v3922, 0.0
      %v3958 = vadd.f32 %v3956, %v3957
      %v3959 = vsel %vm2197, %v3923, 0.0
      %v3960 = vadd.f32 %v3958, %v3959
      %v3961 = vsel %vm2197, %v3924, 0.0
      %v3962 = vadd.f32 %v3960, %v3961
      %v3963 = vsel %vm2197, %v3925, 0.0
      %v3964 = vadd.f32 %v3962, %v3963
      %v3965 = vsel %vm2197, %v3926, 0.0
      %v3966 = vadd.f32 %v3964, %v3965
      %v3967 = vsel %vm2197, %v3927, 0.0
      %v3968 = vadd.f32 %v3966, %v3967
      %v3969 = vsel %vm2197, %v3928, 0.0
      %v3970 = vadd.f32 %v3968, %v3969
      %v3971 = vsel %vm2197, %v3929, 0.0
      %v3972 = vadd.f32 %v3970, %v3971
      %v3973 = vsel %vm2197, %v3930, 0.0
      %v3974 = vadd.f32 %v3972, %v3973
      %v3975 = vsel %vm2197, %v3931, 0.0
      %v3976 = vadd.f32 %v3974, %v3975
      %v3977 = vsel %vm2197, %v3932, 0.0
      %v3978 = vadd.f32 %v3976, %v3977
      %v3979 = vsel %vm2197, %v3933, 0.0
      %v3980 = vadd.f32 %v3978, %v3979
      %v3981 = vsel %vm2197, %v3934, 0.0
      %v3982 = vadd.f32 %v3980, %v3981
      %v3983 = vsel %vm2197, %v3935, 0.0
      %v3984 = vadd.f32 %v3982, %v3983
      %v3985 = vsel %vm2197, %v3936, 0.0
      %v3986 = vadd.f32 %v3984, %v3985
      %v3987 = vsel %vm2197, %v3937, 0.0
      %v3988 = vadd.f32 %v3986, %v3987
      %v3989 = vsel %vm2197, %v3938, 0.0
      %v3990 = vadd.f32 %v3988, %v3989
      %v3991 = vsel %vm2197, %v3939, 0.0
      %v3992 = vadd.f32 %v3990, %v3991
      %v3993 = vsel %vm2197, %v3940, 0.0
      %v3994 = vadd.f32 %v3992, %v3993
      %v3995 = vsel %vm2197, %v3941, 0.0
      %v3996 = vadd.f32 %v3994, %v3995
      %v3997 = vsel %vm2197, %v3942, 0.0
      %v3998 = vadd.f32 %v3996, %v3997
      %v3999 = vsel %vm2197, %v3943, 0.0
      %v4000 = vadd.f32 %v3998, %v3999
      %v4001 = vsel %vm2197, %v3944, 0.0
      %v4002 = vadd.f32 %v4000, %v4001
      %v4003 = vsel %vm2197, %v3945, 0.0
      %v4004 = vadd.f32 %v4002, %v4003
      %v4005 = vsel %vm2197, %v3946, 0.0
      %v4006 = vadd.f32 %v4004, %v4005
      %v4007 = vsel %vm2197, %v3947, 0.0
      %v4008 = vadd.f32 %v4006, %v4007
      %v4009 = vsel %vm2197, %v3948, 0.0
      %v4010 = vadd.f32 %v4008, %v4009
      %v4011 = vsel %vm2197, %v3949, 0.0
      %v4012 = vadd.f32 %v4010, %v4011
      %v4013 = vrot.slane %v4012, 4
      %v4014 = vadd.f32 %v4012, %v4013
      %v4015 = vrot.slane %v4014, 2
      %v4016 = vadd.f32 %v4014, %v4015
      %v4017 = vrot.slane %v4016, 1
      %v4018 = vadd.f32 %v4016, %v4017
      %v4019 = vmul.f32 %v4018, 0.00390625
      %v4020 = vld [vmem:[%s5] sm:$0xff]
      %v4021 = vld [vmem:[%s6] sm:$0x1]
      %v4023 = vsel %vm2197, %v4019, 0
      %4025 = vmatpush.msra.mxu0 0.0
      %4026 = vmatpush.msra.mxu0 0.0
      %4027 = vmatpush.msra.mxu0 0.0
      %4028 = vmatpush.msra.mxu0 0.0
      %4029 = vmatpush.msra.mxu0 0.0
      %4030 = vmatpush.msra.mxu0 0.0
      %4031 = vmatpush.msra.mxu0 0.0
      %4032 = vmatpush.msra.mxu0 0.0
      %4033 = vmatpush.msra.mxu0 0.0
      %4034 = vmatpush.msra.mxu0 0.0
      %4035 = vmatpush.msra.mxu0 0.0
      %4036 = vmatpush.msra.mxu0 0.0
      %4037 = vmatpush.msra.mxu0 0.0
      %4038 = vmatpush.msra.mxu0 0.0
      %4039 = vmatpush.msra.mxu0 0.0
      %4040 = vmatpush.msra.mxu0 %v4020
      %4041 = vmatmul.f32.gmra.mxu0 %v4023
      %v4042 = vpop.f32.mrf.mxu0
      %v4043 = vadd.f32 %v4021, %v4042
      %4044 = vdwg.mxu0
      %v4045 = vmax.f32 %v4043, 0.0
      %v4046 = vld [vmem:[%s7] sm:$0x3]
      %v4047 = vld [vmem:[%s8] sm:$0x1]
      %vm4048 = vcmask 15360
      %v4050 = vsel %vm4048, %v4045, 0
      %v4053 = vsel %vm781, %v4046, 0
      %4055 = vmatpush.msra.mxu0 0.0
      %4056 = vmatpush.msra.mxu0 0.0
      %4057 = vmatpush.msra.mxu0 0.0
      %4058 = vmatpush.msra.mxu0 0.0
      %4059 = vmatpush.msra.mxu0 0.0
      %4060 = vmatpush.msra.mxu0 0.0
      %4061 = vmatpush.msra.mxu0 0.0
      %4062 = vmatpush.msra.mxu0 0.0
      %4063 = vmatpush.msra.mxu0 0.0
      %4064 = vmatpush.msra.mxu0 0.0
      %4065 = vmatpush.msra.mxu0 0.0
      %4066 = vmatpush.msra.mxu0 0.0
      %4067 = vmatpush.msra.mxu0 0.0
      %4068 = vmatpush.msra.mxu0 0.0
      %4069 = vmatpush.msra.mxu0 0.0
      %4070 = vmatpush.msra.mxu0 %v4053
      %4071 = vmatmul.f32.gmra.mxu0 %v4050
      %v4072 = vpop.f32.mrf.mxu0
      %v4073 = vadd.f32 %v4047, %v4072
      %4074 = vdwg.mxu0
      %v4075 = vxor.u32 %v4073, 2147483648
      %v4076 = vmul.f32 %v4075, 1.442695
      %v4077 = vpow.pop %v4076
      %v4078 = vadd.f32 %v4077, 1.0
      %v4079 = vrcp.pop %v4078
      %v4080 = vmul.f32 %v4078, %v4079
      %v4081 = vsub.f32 1.0, %v4080
      %v4082 = vmul.f32 %v4079, %v4081
      %v4083 = vadd.f32 %v4079, %v4082
      %vm4084 = vweird.f32 %v4078
      %vm4085 = vweird.f32 %v4079
      %vm4086 = vmor %vm4084, %vm4085
      %v4087 = vsel %vm4086, %v4079, %v4083
      %v4088 = vand.u32 2147483647, %v4078
      %vm4089 = vcmp.eq.f32.partialorder %v4088, 8.507059e+37
      %v4090 = vand.u32 %v4078, 2147483648
      %v4091 = vor.u32 1.1754944e-38, %v4090
      %v4092 = vsel %vm4089, %v4091, %v4087
      %v4093 = vmul.f32 1.0, %v4092
      %v4094 = vperm.slane %v4093, 0
      %v4095 = vmul.f32 %v3918, %v4094
      %v4096 = vmul.f32 %v3919, %v4094
      %v4097 = vmul.f32 %v3920, %v4094
      %v4098 = vmul.f32 %v3921, %v4094
      %v4099 = vmul.f32 %v3922, %v4094
      %v4100 = vmul.f32 %v3923, %v4094
      %v4101 = vmul.f32 %v3924, %v4094
      %v4102 = vmul.f32 %v3925, %v4094
      %v4103 = vmul.f32 %v3926, %v4094
      %v4104 = vmul.f32 %v3927, %v4094
      %v4105 = vmul.f32 %v3928, %v4094
      %v4106 = vmul.f32 %v3929, %v4094
      %v4107 = vmul.f32 %v3930, %v4094
      %v4108 = vmul.f32 %v3931, %v4094
      %v4109 = vmul.f32 %v3932, %v4094
      %v4110 = vmul.f32 %v3933, %v4094
      %v4111 = vmul.f32 %v3934, %v4094
      %v4112 = vmul.f32 %v3935, %v4094
      %v4113 = vmul.f32 %v3936, %v4094
      %v4114 = vmul.f32 %v3937, %v4094
      %v4115 = vmul.f32 %v3938, %v4094
      %v4116 = vmul.f32 %v3939, %v4094
      %v4117 = vmul.f32 %v3940, %v4094
      %v4118 = vmul.f32 %v3941, %v4094
      %v4119 = vmul.f32 %v3942, %v4094
      %v4120 = vmul.f32 %v3943, %v4094
      %v4121 = vmul.f32 %v3944, %v4094
      %v4122 = vmul.f32 %v3945, %v4094
      %v4123 = vmul.f32 %v3946, %v4094
      %v4124 = vmul.f32 %v3947, %v4094
      %v4125 = vmul.f32 %v3948, %v4094
      %v4126 = vmul.f32 %v3949, %v4094
      %4127 = vst.msk [vmem:[%s332] sm:$0xff] %vm2197, %v4095
      %4128 = vst.msk [vmem:[%s332 + $0x8] sm:$0xff] %vm2197, %v4096
      %4129 = vst.msk [vmem:[%s332 + $0x10] sm:$0xff] %vm2197, %v4097
      %4130 = vst.msk [vmem:[%s332 + $0x18] sm:$0xff] %vm2197, %v4098
      %4131 = vst.msk [vmem:[%s332 + $0x20] sm:$0xff] %vm2197, %v4099
      %4132 = vst.msk [vmem:[%s332 + $0x28] sm:$0xff] %vm2197, %v4100
      %4133 = vst.msk [vmem:[%s332 + $0x30] sm:$0xff] %vm2197, %v4101
      %4134 = vst.msk [vmem:[%s332 + $0x38] sm:$0xff] %vm2197, %v4102
      %4135 = vst.msk [vmem:[%s332 + $0x40] sm:$0xff] %vm2197, %v4103
      %4136 = vst.msk [vmem:[%s332 + $0x48] sm:$0xff] %vm2197, %v4104
      %4137 = vst.msk [vmem:[%s332 + $0x50] sm:$0xff] %vm2197, %v4105
      %4138 = vst.msk [vmem:[%s332 + $0x58] sm:$0xff] %vm2197, %v4106
      %4139 = vst.msk [vmem:[%s332 + $0x60] sm:$0xff] %vm2197, %v4107
      %4140 = vst.msk [vmem:[%s332 + $0x68] sm:$0xff] %vm2197, %v4108
      %4141 = vst.msk [vmem:[%s332 + $0x70] sm:$0xff] %vm2197, %v4109
      %4142 = vst.msk [vmem:[%s332 + $0x78] sm:$0xff] %vm2197, %v4110
      %4143 = vst.msk [vmem:[%s332 + $0x80] sm:$0xff] %vm2197, %v4111
      %4144 = vst.msk [vmem:[%s332 + $0x88] sm:$0xff] %vm2197, %v4112
      %4145 = vst.msk [vmem:[%s332 + $0x90] sm:$0xff] %vm2197, %v4113
      %4146 = vst.msk [vmem:[%s332 + $0x98] sm:$0xff] %vm2197, %v4114
      %4147 = vst.msk [vmem:[%s332 + $0xa0] sm:$0xff] %vm2197, %v4115
      %4148 = vst.msk [vmem:[%s332 + $0xa8] sm:$0xff] %vm2197, %v4116
      %4149 = vst.msk [vmem:[%s332 + $0xb0] sm:$0xff] %vm2197, %v4117
      %4150 = vst.msk [vmem:[%s332 + $0xb8] sm:$0xff] %vm2197, %v4118
      %4151 = vst.msk [vmem:[%s332 + $0xc0] sm:$0xff] %vm2197, %v4119
      %4152 = vst.msk [vmem:[%s332 + $0xc8] sm:$0xff] %vm2197, %v4120
      %4153 = vst.msk [vmem:[%s332 + $0xd0] sm:$0xff] %vm2197, %v4121
      %4154 = vst.msk [vmem:[%s332 + $0xd8] sm:$0xff] %vm2197, %v4122
      %4155 = vst.msk [vmem:[%s332 + $0xe0] sm:$0xff] %vm2197, %v4123
      %4156 = vst.msk [vmem:[%s332 + $0xe8] sm:$0xff] %vm2197, %v4124
      %4157 = vst.msk [vmem:[%s332 + $0xf0] sm:$0xff] %vm2197, %v4125
      %4158 = vst.msk [vmem:[%s332 + $0xf8] sm:$0xff] %vm2197, %v4126
      %p4159 = scmp.lt.s32.totalorder %s20, 1
      %s4160 = scalar_select %p4159, %s20, 1
      %s4161 = smul.addr %s4160, 32
      %s4162 = smul.addr %s4161, 8
      %s4163 = scalar_lea.vmem %s9, %s4162
      // Predicated region
      $region57: #{tpu_custom_call.1} parent=55 // pred_check
        %p4164 = pneg %p232
      $region58: #{tpu_custom_call.1} parent=55 // pred_check_branch
        %4166 = sbr.rel (%p4164) target = $region60
      $region59: #{tpu_custom_call.1} parent=55 // pred_region
        _
      $region60: #{tpu_custom_call.1} parent=55 // pred_fallthru
        _
    $region56: #{tpu_custom_call.1} parent=5 // pred_fallthru
      _
    %p4167 = scmp.le.s32.totalorder 2, %s15
    // Predicated region
    $region61: #{tpu_custom_call.1} parent=5 // pred_check
      %p4168 = pneg %p4167
    $region62: #{tpu_custom_call.1} parent=5 // pred_check_branch
      %4170 = sbr.rel (%p4168) target = $region64
    $region63: #{tpu_custom_call.1} parent=5 // pred_region
      %s4171 = ssub.s32 %s15, 2
      // Predicated region
      $region65: #{tpu_custom_call.1} parent=63 // pred_check
        %p4172 = pneg %p238
      $region66: #{tpu_custom_call.1} parent=63 // pred_check_branch
        %4174 = sbr.rel (%p4172) target = $region68
      $region67: #{tpu_custom_call.1} parent=63 // pred_region
        %p4175 = scmp.lt.s32.totalorder %s21, 1
        %s4176 = scalar_select %p4175, %s21, 1
        %s4177 = smul.addr %s4176, 32
        %s4178 = smul.addr %s4177, 8
        %s4179 = scalar_lea.vmem %s9, %s4178
      $region68: #{tpu_custom_call.1} parent=63 // pred_fallthru
        _
    $region64: #{tpu_custom_call.1} parent=5 // pred_fallthru
      _
  $region6: #{tpu_custom_call.1} parent=0 // loop_footer
    %s19 = sadd.s32 1, %s15
  $region7: #{tpu_custom_call.1} parent=0 // loop_footer_branch
    %14 = sbr.rel target = $region3
  $region8: #{tpu_custom_call.1} parent=0 // loop_exit
    _

</llo_original>
